<compile_context>
chip_gen: v5e
topology: v5e:2x2
jax: 0.10.0
libtpu: 0.0.40
codegen_flags: <defaults>
</compile_context>

<pallas_src>
import numpy as np
import jax
import jax.numpy as jnp
from jax.experimental import pallas as pl
from jax.experimental.pallas import tpu as pltpu

CONV_OUT_DIM = 128
FILTER_SIZE = 4
A_DIM = 6
SCA_OUT_DIM = 128
S_LEN = 8
N_CHAN = 6
IN_DIM = N_CHAN * S_LEN                        # 48
L_TP = S_LEN - FILTER_SIZE + 1                 # 5
L_CS = A_DIM - FILTER_SIZE + 1                 # 3
HIDDEN_DIM = (2 * CONV_OUT_DIM * L_TP
              + CONV_OUT_DIM * L_CS
              + 3 * SCA_OUT_DIM)               # 2048


# ----------------------------- Pallas kernel -----------------------------

def critic_kernel(x_ref, w_feat_ref, b_feat_ref, w_h_ref, b_h_ref,
                  w_o_ref, b_o_ref, out_ref):
    # x_ref:      [Bt, 48]   f32 (per-tile, streamed)
    # w_feat_ref: [48, 2048] bf16 (resident)
    # w_h_ref:    [2048,128] bf16 (resident)
    # biases f32; w_o_ref [1,128] f32; b_o_ref [1,1] f32
    xb = x_ref[...].astype(jnp.bfloat16)

    feats = jnp.dot(xb, w_feat_ref[...], preferred_element_type=jnp.float32)
    feats = jnp.maximum(feats + b_feat_ref[...], 0.0)          # [Bt, 2048] f32

    h = jnp.dot(feats.astype(jnp.bfloat16), w_h_ref[...],
                preferred_element_type=jnp.float32)
    h = jnp.maximum(h + b_h_ref[...], 0.0)                     # [Bt, 128] f32

    # output layer (N=1): VPU multiply + cross-lane reduce instead of MXU
    out_ref[...] = (jnp.sum(h * w_o_ref[...], axis=-1, keepdims=True)
                    + b_o_ref[...])                            # [Bt, 1]


def critic_forward(x, kp, *, block_b=256):
    """x: [B, 6, S_LEN] float32; kp: kernel-layout params (see to_kernel_params)."""
    B = x.shape[0]
    x2d = x.reshape(B, IN_DIM).astype(jnp.float32)             # lane-dense [B, 48]

    b_pad = ((B + block_b - 1) // block_b) * block_b
    if b_pad != B:
        x2d = jnp.pad(x2d, ((0, b_pad - B), (0, 0)))
    grid = (b_pad // block_b,)

    def resident(shape):
        # same block every grid step -> weight DMA'd once, stays in VMEM
        return pl.BlockSpec(shape, lambda i: (0, 0))

    out = pl.pallas_call(
        critic_kernel,
        out_shape=jax.ShapeDtypeStruct((b_pad, 1), jnp.float32),
        grid_spec=pltpu.PrefetchScalarGridSpec(
            num_scalar_prefetch=0,
            grid=grid,
            in_specs=[
                pl.BlockSpec((block_b, IN_DIM), lambda i: (i, 0)),   # x tile
                resident(kp["w_feat"].shape),
                resident(kp["b_feat"].shape),
                resident(kp["w_h"].shape),
                resident(kp["b_h"].shape),
                resident(kp["w_o"].shape),
                resident(kp["b_o"].shape),
            ],
            out_specs=pl.BlockSpec((block_b, 1), lambda i: (i, 0)),
        ),
        compiler_params=pltpu.CompilerParams(
            dimension_semantics=("parallel",)),
    )(x2d, kp["w_feat"], kp["b_feat"], kp["w_h"], kp["b_h"],
      kp["w_o"], kp["b_o"])
    return out[:B]


# ----------------- parameter construction (torch layouts) -----------------

def _xavier_normal(key, shape, fan_in, fan_out):
    std = (2.0 / (fan_in + fan_out)) ** 0.5
    return std * jax.random.normal(key, shape, dtype=jnp.float32)


def init_torch_layout_params(key):
    """Weights in the same layout PyTorch stores them."""
    ks = jax.random.split(key, 8)
    p = {}
    # Linear(1 -> 128): weight [128, 1]
    p["W_cb"] = _xavier_normal(ks[0], (SCA_OUT_DIM, 1), 1, SCA_OUT_DIM)
    p["W_bs"] = _xavier_normal(ks[1], (SCA_OUT_DIM, 1), 1, SCA_OUT_DIM)
    p["W_cl"] = _xavier_normal(ks[2], (SCA_OUT_DIM, 1), 1, SCA_OUT_DIM)
    # Conv1d(1 -> 128, k=4): weight [128, 1, 4]
    p["W_tp"] = _xavier_normal(ks[3], (CONV_OUT_DIM, 1, FILTER_SIZE),
                               FILTER_SIZE, CONV_OUT_DIM * FILTER_SIZE)
    p["W_dt"] = _xavier_normal(ks[4], (CONV_OUT_DIM, 1, FILTER_SIZE),
                               FILTER_SIZE, CONV_OUT_DIM * FILTER_SIZE)
    p["W_cs"] = _xavier_normal(ks[5], (CONV_OUT_DIM, 1, FILTER_SIZE),
                               FILTER_SIZE, CONV_OUT_DIM * FILTER_SIZE)
    # hidden Linear(2048 -> 128), output Linear(128 -> 1)
    p["W_h"] = _xavier_normal(ks[6], (SCA_OUT_DIM, HIDDEN_DIM), HIDDEN_DIM, SCA_OUT_DIM)
    p["W_o"] = _xavier_normal(ks[7], (1, SCA_OUT_DIM), SCA_OUT_DIM, 1)
    for name in ["b_cb", "b_bs", "b_cl", "b_tp", "b_dt", "b_cs"]:
        p[name] = jnp.zeros((CONV_OUT_DIM,), jnp.float32)
    p["b_h"] = jnp.zeros((SCA_OUT_DIM,), jnp.float32)
    p["b_o"] = jnp.zeros((1,), jnp.float32)
    return p


def to_kernel_params(p):
    """Build the fused featurizer matrix W_feat [48, 2048] + biases, and the
    MXU-ready (bf16, transposed) hidden weight.  Feature columns are laid out
    in PyTorch's concat/channel-major-flatten order so W_h needs no permute."""
    w_feat = np.zeros((IN_DIM, HIDDEN_DIM), np.float32)
    b_feat = np.zeros((HIDDEN_DIM,), np.float32)

    def scalar_block(off, chan, W, b):
        # feature_j = relu(x[:, chan, -1] * W[j, 0] + b[j])
        w_feat[chan * S_LEN + (S_LEN - 1), off:off + SCA_OUT_DIM] = np.asarray(W)[:, 0]
        b_feat[off:off + SCA_OUT_DIM] = np.asarray(b)
        return off + SCA_OUT_DIM

    def conv_block(off, chan, W, b, l_out):
        # torch channel-major flatten: column index = off + c * l_out + l
        Wc = np.asarray(W)[:, 0, :]                 # [128, 4]
        bc = np.asarray(b)
        for l in range(l_out):
            cols = off + np.arange(CONV_OUT_DIM) * l_out + l
            rows = chan * S_LEN + l + np.arange(FILTER_SIZE)
            w_feat[np.ix_(rows, cols)] = Wc.T       # [4, 128]
            b_feat[cols] = bc
        return off + CONV_OUT_DIM * l_out

    off = 0
    off = scalar_block(off, 0, p["W_cb"], p["b_cb"])        # chunkbitrate
    off = scalar_block(off, 1, p["W_bs"], p["b_bs"])        # buffersize
    off = conv_block(off, 2, p["W_tp"], p["b_tp"], L_TP)    # throughput
    off = conv_block(off, 3, p["W_dt"], p["b_dt"], L_TP)    # downtime
    off = conv_block(off, 4, p["W_cs"], p["b_cs"], L_CS)    # chunksize (first A_DIM)
    off = scalar_block(off, 5, p["W_cl"], p["b_cl"])        # chunkleft
    assert off == HIDDEN_DIM

    kp = {
        "w_feat": jnp.asarray(w_feat, jnp.bfloat16),             # [48, 2048]
        "b_feat": jnp.asarray(b_feat, jnp.float32).reshape(1, -1),
        "w_h": jnp.asarray(p["W_h"]).T.astype(jnp.bfloat16),     # [2048, 128]
        "b_h": jnp.asarray(p["b_h"], jnp.float32).reshape(1, -1),
        "w_o": jnp.asarray(p["W_o"], jnp.float32).reshape(1, -1),  # [1, 128]
        "b_o": jnp.asarray(p["b_o"], jnp.float32).reshape(1, 1),
    }
    return kp


# ---------------- pure-JAX reference (exact torch semantics, f32) ----------------

def reference_forward(x, p):
    relu = jax.nn.relu
    B = x.shape[0]
    cb = relu(x[:, 0, -1:] @ p["W_cb"].T + p["b_cb"])
    bs = relu(x[:, 1, -1:] @ p["W_bs"].T + p["b_bs"])
    cl = relu(x[:, 5, -1:] @ p["W_cl"].T + p["b_cl"])

    def conv(sig, W, b):                              # sig [B,L], W [128,1,4]
        l_out = sig.shape[1] - FILTER_SIZE + 1
        o = jnp.stack([sig[:, l:l + FILTER_SIZE] @ W[:, 0, :].T + b
                       for l in range(l_out)], axis=2)   # [B,128,l_out]
        return relu(o)

    tp = conv(x[:, 2, :], p["W_tp"], p["b_tp"]).reshape(B, -1)   # channel-major flatten
    dt = conv(x[:, 3, :], p["W_dt"], p["b_dt"]).reshape(B, -1)
    cs = conv(x[:, 4, :A_DIM], p["W_cs"], p["b_cs"]).reshape(B, -1)
    feats = jnp.concatenate([cb, bs, tp, dt, cs, cl], axis=1)    # [B, 2048]
    h = relu(feats @ p["W_h"].T + p["b_h"])
    return h @ p["W_o"].T + p["b_o"]


if __name__ == "__main__":
    B = 2
    key = jax.random.PRNGKey(0)
    k_x, k_p = jax.random.split(key)

    x = jax.random.normal(k_x, (B, N_CHAN, S_LEN), dtype=jnp.float32)
    torch_params = init_torch_layout_params(k_p)
    kernel_params = to_kernel_params(torch_params)

    out = critic_forward(x, kernel_params)            # default batch tile 256 (v6e/v7x)
    out = jax.block_until_ready(out)

    ref = reference_forward(x, torch_params)
    # bf16 MXU operands with f32 accumulation -> loosened tolerance vs f32 reference
    np.testing.assert_allclose(np.asarray(out), np.asarray(ref), rtol=2e-2, atol=2e-2)
    assert out.shape == (B, 1)

    print("KERNEL_OK")
</pallas_src>

<mosaic_0001>
module attributes {stable_mosaic.version = 11 : i64} {
  func.func @critic_kernel(%arg0: i32, %arg1: memref<256x48xf32, #tpu.memory_space<vmem>>, %arg2: memref<48x2048xbf16, #tpu.memory_space<vmem>>, %arg3: memref<1x2048xf32, #tpu.memory_space<vmem>>, %arg4: memref<2048x128xbf16, #tpu.memory_space<vmem>>, %arg5: memref<1x128xf32, #tpu.memory_space<vmem>>, %arg6: memref<1x128xf32, #tpu.memory_space<vmem>>, %arg7: memref<1x1xf32, #tpu.memory_space<vmem>>, %arg8: memref<256x1xf32, #tpu.memory_space<vmem>>) attributes {dimension_semantics = [#tpu.dimension_semantics<parallel>], iteration_bounds = array<i64: 1>, scalar_prefetch = 0 : i64, scratch_operands = 0 : i64, tpu.core_type = #tpu.core_type<tc>, window_params = [{transform_indices = @transform_0, window_bounds = array<i64: 256, 48>}, {pipeline_mode = #tpu.pipeline_mode<synchronous>, transform_indices = @transform_1, window_bounds = array<i64: 48, 2048>}, {pipeline_mode = #tpu.pipeline_mode<synchronous>, transform_indices = @transform_2, window_bounds = array<i64: 1, 2048>}, {pipeline_mode = #tpu.pipeline_mode<synchronous>, transform_indices = @transform_3, window_bounds = array<i64: 2048, 128>}, {pipeline_mode = #tpu.pipeline_mode<synchronous>, transform_indices = @transform_4, window_bounds = array<i64: 1, 128>}, {pipeline_mode = #tpu.pipeline_mode<synchronous>, transform_indices = @transform_5, window_bounds = array<i64: 1, 128>}, {pipeline_mode = #tpu.pipeline_mode<synchronous>, transform_indices = @transform_6, window_bounds = array<i64: 1, 1>}, {transform_indices = @transform_7, window_bounds = array<i64: 256, 1>}]} {
    %c0 = arith.constant 0 : index
    %c0_0 = arith.constant 0 : index
    %0 = vector.load %arg1[%c0, %c0_0] : memref<256x48xf32, #tpu.memory_space<vmem>>, vector<256x48xf32>
    %1 = arith.truncf %0 : vector<256x48xf32> to vector<256x48xbf16>
    %c0_1 = arith.constant 0 : index
    %c0_2 = arith.constant 0 : index
    %2 = vector.load %arg2[%c0_1, %c0_2] : memref<48x2048xbf16, #tpu.memory_space<vmem>>, vector<48x2048xbf16>
    %cst = arith.constant dense<0.000000e+00> : vector<256x2048xf32>
    %3 = tpu.matmul %1, %2, %cst {dimension_numbers = #tpu.dot_dimension_numbers<[1], [0], [0], [1], [0, 0, 1, 1], [], []>} : vector<256x48xbf16>, vector<48x2048xbf16>, vector<256x2048xf32> -> vector<256x2048xf32>
    %c0_3 = arith.constant 0 : index
    %c0_4 = arith.constant 0 : index
    %4 = vector.load %arg3[%c0_3, %c0_4] : memref<1x2048xf32, #tpu.memory_space<vmem>>, vector<1x2048xf32>
    %5 = vector.broadcast %4 : vector<1x2048xf32> to vector<256x2048xf32>
    %6 = arith.addf %3, %5 : vector<256x2048xf32>
    %cst_5 = arith.constant 0.000000e+00 : f32
    %7 = vector.broadcast %cst_5 : f32 to vector<256x2048xf32>
    %8 = arith.maximumf %6, %7 : vector<256x2048xf32>
    %9 = arith.truncf %8 : vector<256x2048xf32> to vector<256x2048xbf16>
    %c0_6 = arith.constant 0 : index
    %c0_7 = arith.constant 0 : index
    %10 = vector.load %arg4[%c0_6, %c0_7] : memref<2048x128xbf16, #tpu.memory_space<vmem>>, vector<2048x128xbf16>
    %cst_8 = arith.constant dense<0.000000e+00> : vector<256x128xf32>
    %11 = tpu.matmul %9, %10, %cst_8 {dimension_numbers = #tpu.dot_dimension_numbers<[1], [0], [0], [1], [0, 0, 1, 1], [], []>} : vector<256x2048xbf16>, vector<2048x128xbf16>, vector<256x128xf32> -> vector<256x128xf32>
    %c0_9 = arith.constant 0 : index
    %c0_10 = arith.constant 0 : index
    %12 = vector.load %arg5[%c0_9, %c0_10] : memref<1x128xf32, #tpu.memory_space<vmem>>, vector<1x128xf32>
    %13 = vector.broadcast %12 : vector<1x128xf32> to vector<256x128xf32>
    %14 = arith.addf %11, %13 : vector<256x128xf32>
    %cst_11 = arith.constant 0.000000e+00 : f32
    %15 = vector.broadcast %cst_11 : f32 to vector<256x128xf32>
    %16 = arith.maximumf %14, %15 : vector<256x128xf32>
    %c0_12 = arith.constant 0 : index
    %c0_13 = arith.constant 0 : index
    %17 = vector.load %arg6[%c0_12, %c0_13] : memref<1x128xf32, #tpu.memory_space<vmem>>, vector<1x128xf32>
    %18 = vector.broadcast %17 : vector<1x128xf32> to vector<256x128xf32>
    %19 = arith.mulf %16, %18 : vector<256x128xf32>
    %cst_14 = arith.constant dense<0.000000e+00> : vector<256xf32>
    %20 = vector.multi_reduction <add>, %19, %cst_14 [1] : vector<256x128xf32> to vector<256xf32>
    %21 = vector.shape_cast %20 : vector<256xf32> to vector<256x1xf32>
    %c0_15 = arith.constant 0 : index
    %c0_16 = arith.constant 0 : index
    %22 = vector.load %arg7[%c0_15, %c0_16] : memref<1x1xf32, #tpu.memory_space<vmem>>, vector<1x1xf32>
    %23 = vector.broadcast %22 : vector<1x1xf32> to vector<256x1xf32>
    %24 = arith.addf %21, %23 : vector<256x1xf32>
    %c0_17 = arith.constant 0 : index
    %c0_18 = arith.constant 0 : index
    %25 = vector.load %arg8[%c0_17, %c0_18] : memref<256x1xf32, #tpu.memory_space<vmem>>, vector<256x1xf32>
    tpu.vector_store %arg8[%c0_17, %c0_18], %24 {strides = array<i32>} : memref<256x1xf32, #tpu.memory_space<vmem>>, vector<256x1xf32>,
    return
  }
  func.func @transform_0(%arg0: i32) -> (i32, i32) {
    %c0_i32 = arith.constant 0 : i32
    %c0_i32_0 = arith.constant 0 : i32
    return %arg0, %c0_i32 : i32, i32
  }
  func.func @transform_1(%arg0: i32) -> (i32, i32) {
    %c0_i32 = arith.constant 0 : i32
    %c0_i32_0 = arith.constant 0 : i32
    %c0_i32_1 = arith.constant 0 : i32
    return %c0_i32, %c0_i32_0 : i32, i32
  }
  func.func @transform_2(%arg0: i32) -> (i32, i32) {
    %c0_i32 = arith.constant 0 : i32
    %c0_i32_0 = arith.constant 0 : i32
    %c0_i32_1 = arith.constant 0 : i32
    return %c0_i32, %c0_i32_0 : i32, i32
  }
  func.func @transform_3(%arg0: i32) -> (i32, i32) {
    %c0_i32 = arith.constant 0 : i32
    %c0_i32_0 = arith.constant 0 : i32
    %c0_i32_1 = arith.constant 0 : i32
    return %c0_i32, %c0_i32_0 : i32, i32
  }
  func.func @transform_4(%arg0: i32) -> (i32, i32) {
    %c0_i32 = arith.constant 0 : i32
    %c0_i32_0 = arith.constant 0 : i32
    %c0_i32_1 = arith.constant 0 : i32
    return %c0_i32, %c0_i32_0 : i32, i32
  }
  func.func @transform_5(%arg0: i32) -> (i32, i32) {
    %c0_i32 = arith.constant 0 : i32
    %c0_i32_0 = arith.constant 0 : i32
    %c0_i32_1 = arith.constant 0 : i32
    return %c0_i32, %c0_i32_0 : i32, i32
  }
  func.func @transform_6(%arg0: i32) -> (i32, i32) {
    %c0_i32 = arith.constant 0 : i32
    %c0_i32_0 = arith.constant 0 : i32
    %c0_i32_1 = arith.constant 0 : i32
    return %c0_i32, %c0_i32_0 : i32, i32
  }
  func.func @transform_7(%arg0: i32) -> (i32, i32) {
    %c0_i32 = arith.constant 0 : i32
    %c0_i32_0 = arith.constant 0 : i32
    return %arg0, %c0_i32 : i32, i32
  }
}

</mosaic_0001>

<llo_original>
// kernel: tpu_custom_call.1
$region0: #{tpu_custom_call.1}
  #allocation0 [shape = 'u32[]', space=smem, size = 0x4, offset = 0x4, fixed_abs, tag = 'smem constant byte address 0x4 - core index']
  #allocation1 [shape = 'u32[72,128]{1,0:T(1,128)}', space=vmem, size = 0x9000, scoped, tag = 'internal scratch']
  #allocation2 [shape = 'f32[1,1]{1,0:T(1,128)S(1)}', space=vmem, size = 0x200, scoped, tag = 'scoped memory for tpu_custom_call.1']
  %s0 = inlined_call_operand.vmem [shape: f32[256,48], index: 0, kind: input, shape index: {}]
  %s1 = inlined_call_operand.hbm [shape: bf16[48,2048], index: 1, kind: input, shape index: {}]
  %s2 = inlined_call_operand.vmem [shape: f32[1,2048], index: 2, kind: input, shape index: {}]
  %s3 = inlined_call_operand.hbm [shape: bf16[2048,128], index: 3, kind: input, shape index: {}]
  %s4 = inlined_call_operand.vmem [shape: f32[1,128], index: 4, kind: input, shape index: {}]
  %s5 = inlined_call_operand.vmem [shape: f32[1,128], index: 5, kind: input, shape index: {}]
  %s6 = inlined_call_operand.<no memory space> [shape: f32[1,1], index: 6, kind: input, shape index: {}]
  %s7 = inlined_call_operand.vmem [shape: f32[256,1], index: 7, kind: output, shape index: {}]
  %s8 = sld [smem:[#allocation0]]
  $region46: #{tpu_custom_call.1} parent=0
    _
  %s10 = ssub.s32 1, %s8
  %s11 = scalar_select 0, %s10, %s8
  %v12 = vstv %s6
  %13 = vst [vmem:[#allocation2] sm:$0x1] %v12
  $region1: #{tpu_custom_call.1} parent=0
    #allocation3 [shape = 'u8[196608]{0}', space=vmem, size = 0x30000, scoped, tag = 'input window, operand 1, single buffered']
    #allocation4 [shape = 's32[1]{0}', space=sflag, size = 0x4, scoped, tag = 'scoped memory for tpu_custom_call.1']
    #allocation5 [shape = 'u8[524288]{0}', space=vmem, size = 0x80000, scoped, tag = 'input window, operand 3, single buffered']
    #allocation6 [shape = 's32[1]{0}', space=sflag, size = 0x4, scoped, tag = 'scoped memory for tpu_custom_call.1']
    %14 = vsyncpa [#allocation4], 0
    %15 = vsyncpa [#allocation6], 0
    // Predicated region
    $region2: #{tpu_custom_call.1} parent=1 // pred_check
      _
    $region3: #{tpu_custom_call.1} parent=1 // pred_check_branch
      %17 = sbr.rel (0) target = $region5
    $region4: #{tpu_custom_call.1} parent=1 // pred_region
      _
    $region5: #{tpu_custom_call.1} parent=1 // pred_fallthru
      _
    // Predicated region
    $region6: #{tpu_custom_call.1} parent=1 // pred_check
      _
    $region7: #{tpu_custom_call.1} parent=1 // pred_check_branch
      %19 = sbr.rel (0) target = $region9
    $region8: #{tpu_custom_call.1} parent=1 // pred_region
      %21 = vsyncadd [#allocation4], 0
      %s22 = sshll.u32 %s1, 4
      %s23 = int_to_ptr.hbm [resolvable:$true] %s22
      %s24 = sshll.u32 [#allocation3], 4
      %s25 = int_to_ptr.vmem [resolvable:$true] %s24
      %30 = dma.hbm_to_vmem [thread:$0]  %s23, 6144, %s25, [#allocation4], 1024, 1024, 64
    $region9: #{tpu_custom_call.1} parent=1 // pred_fallthru
      _
    // Predicated region
    $region10: #{tpu_custom_call.1} parent=1 // pred_check
      _
    $region11: #{tpu_custom_call.1} parent=1 // pred_check_branch
      %32 = sbr.rel (0) target = $region13
    $region12: #{tpu_custom_call.1} parent=1 // pred_region
      _
    $region13: #{tpu_custom_call.1} parent=1 // pred_fallthru
      _
    // Predicated region
    $region14: #{tpu_custom_call.1} parent=1 // pred_check
      _
    $region15: #{tpu_custom_call.1} parent=1 // pred_check_branch
      %34 = sbr.rel (0) target = $region17
    $region16: #{tpu_custom_call.1} parent=1 // pred_region
      %36 = vsyncadd [#allocation6], 0
      %s37 = sshll.u32 %s3, 4
      %s38 = int_to_ptr.hbm [resolvable:$true] %s37
      %s39 = sshll.u32 [#allocation5], 4
      %s40 = int_to_ptr.vmem [resolvable:$true] %s39
      %45 = dma.hbm_to_vmem [thread:$0]  %s38, 16384, %s40, [#allocation6], 64, 64, 4
    $region17: #{tpu_custom_call.1} parent=1 // pred_fallthru
      _
    // Predicated region
    $region18: #{tpu_custom_call.1} parent=1 // pred_check
      _
    $region19: #{tpu_custom_call.1} parent=1 // pred_check_branch
      %47 = sbr.rel (0) target = $region21
    $region20: #{tpu_custom_call.1} parent=1 // pred_region
      _
    $region21: #{tpu_custom_call.1} parent=1 // pred_fallthru
      _
    // Predicated region
    $region22: #{tpu_custom_call.1} parent=1 // pred_check
      _
    $region23: #{tpu_custom_call.1} parent=1 // pred_check_branch
      %49 = sbr.rel (0) target = $region25
    $region24: #{tpu_custom_call.1} parent=1 // pred_region
      _
    $region25: #{tpu_custom_call.1} parent=1 // pred_fallthru
      _
    // Predicated region
    $region26: #{tpu_custom_call.1} parent=1 // pred_check
      _
    $region27: #{tpu_custom_call.1} parent=1 // pred_check_branch
      %51 = sbr.rel (0) target = $region29
    $region28: #{tpu_custom_call.1} parent=1 // pred_region
      _
    $region29: #{tpu_custom_call.1} parent=1 // pred_fallthru
      _
    // Predicated region
    $region30: #{tpu_custom_call.1} parent=1 // pred_check
      _
    $region31: #{tpu_custom_call.1} parent=1 // pred_check_branch
      %53 = sbr.rel (0) target = $region33
    $region32: #{tpu_custom_call.1} parent=1 // pred_region
      %55 = dma.done [#allocation4], 6144
    $region33: #{tpu_custom_call.1} parent=1 // pred_fallthru
      _
    // Predicated region
    $region34: #{tpu_custom_call.1} parent=1 // pred_check
      _
    $region35: #{tpu_custom_call.1} parent=1 // pred_check_branch
      %57 = sbr.rel (0) target = $region37
    $region36: #{tpu_custom_call.1} parent=1 // pred_region
      %59 = dma.done [#allocation6], 16384
    $region37: #{tpu_custom_call.1} parent=1 // pred_fallthru
      _
    %v61 = vld [vmem:[%s0] sm:$0xff]
    %v62 = vld [vmem:[%s0 + $0x8] sm:$0xff]
    %v63 = vld [vmem:[%s0 + $0x10] sm:$0xff]
    %v64 = vld [vmem:[%s0 + $0x18] sm:$0xff]
    %v65 = vld [vmem:[%s0 + $0x20] sm:$0xff]
    %v66 = vld [vmem:[%s0 + $0x28] sm:$0xff]
    %v67 = vld [vmem:[%s0 + $0x30] sm:$0xff]
    %v68 = vld [vmem:[%s0 + $0x38] sm:$0xff]
    %v69 = vld [vmem:[%s0 + $0x40] sm:$0xff]
    %v70 = vld [vmem:[%s0 + $0x48] sm:$0xff]
    %v71 = vld [vmem:[%s0 + $0x50] sm:$0xff]
    %v72 = vld [vmem:[%s0 + $0x58] sm:$0xff]
    %v73 = vld [vmem:[%s0 + $0x60] sm:$0xff]
    %v74 = vld [vmem:[%s0 + $0x68] sm:$0xff]
    %v75 = vld [vmem:[%s0 + $0x70] sm:$0xff]
    %v76 = vld [vmem:[%s0 + $0x78] sm:$0xff]
    %v77 = vld [vmem:[%s0 + $0x80] sm:$0xff]
    %v78 = vld [vmem:[%s0 + $0x88] sm:$0xff]
    %v79 = vld [vmem:[%s0 + $0x90] sm:$0xff]
    %v80 = vld [vmem:[%s0 + $0x98] sm:$0xff]
    %v81 = vld [vmem:[%s0 + $0xa0] sm:$0xff]
    %v82 = vld [vmem:[%s0 + $0xa8] sm:$0xff]
    %v83 = vld [vmem:[%s0 + $0xb0] sm:$0xff]
    %v84 = vld [vmem:[%s0 + $0xb8] sm:$0xff]
    %v85 = vld [vmem:[%s0 + $0xc0] sm:$0xff]
    %v86 = vld [vmem:[%s0 + $0xc8] sm:$0xff]
    %v87 = vld [vmem:[%s0 + $0xd0] sm:$0xff]
    %v88 = vld [vmem:[%s0 + $0xd8] sm:$0xff]
    %v89 = vld [vmem:[%s0 + $0xe0] sm:$0xff]
    %v90 = vld [vmem:[%s0 + $0xe8] sm:$0xff]
    %v91 = vld [vmem:[%s0 + $0xf0] sm:$0xff]
    %v92 = vld [vmem:[%s0 + $0xf8] sm:$0xff]
    %v93 = vpack.c.bf16 %v62, %v61
    %v94 = vpack.c.bf16 %v64, %v63
    %v95 = vpack.c.bf16 %v66, %v65
    %v96 = vpack.c.bf16 %v68, %v67
    %v97 = vpack.c.bf16 %v70, %v69
    %v98 = vpack.c.bf16 %v72, %v71
    %v99 = vpack.c.bf16 %v74, %v73
    %v100 = vpack.c.bf16 %v76, %v75
    %v101 = vpack.c.bf16 %v78, %v77
    %v102 = vpack.c.bf16 %v80, %v79
    %v103 = vpack.c.bf16 %v82, %v81
    %v104 = vpack.c.bf16 %v84, %v83
    %v105 = vpack.c.bf16 %v86, %v85
    %v106 = vpack.c.bf16 %v88, %v87
    %v107 = vpack.c.bf16 %v90, %v89
    %v108 = vpack.c.bf16 %v92, %v91
    %v109 = vld [vmem:[#allocation3] sm:$0xff]
    %v110 = vld [vmem:[#allocation3 + $0x8] sm:$0xff]
    %v111 = vld [vmem:[#allocation3 + $0x10] sm:$0xff]
    %v112 = vld [vmem:[#allocation3 + $0x18] sm:$0xff]
    %v113 = vld [vmem:[#allocation3 + $0x20] sm:$0xff]
    %v114 = vld [vmem:[#allocation3 + $0x28] sm:$0xff]
    %v115 = vld [vmem:[#allocation3 + $0x30] sm:$0xff]
    %v116 = vld [vmem:[#allocation3 + $0x38] sm:$0xff]
    %v117 = vld [vmem:[#allocation3 + $0x40] sm:$0xff]
    %v118 = vld [vmem:[#allocation3 + $0x48] sm:$0xff]
    %v119 = vld [vmem:[#allocation3 + $0x50] sm:$0xff]
    %v120 = vld [vmem:[#allocation3 + $0x58] sm:$0xff]
    %v121 = vld [vmem:[#allocation3 + $0x60] sm:$0xff]
    %v122 = vld [vmem:[#allocation3 + $0x68] sm:$0xff]
    %v123 = vld [vmem:[#allocation3 + $0x70] sm:$0xff]
    %v124 = vld [vmem:[#allocation3 + $0x78] sm:$0xff]
    %v125 = vld [vmem:[#allocation3 + $0x80] sm:$0xff]
    %v126 = vld [vmem:[#allocation3 + $0x88] sm:$0xff]
    %v127 = vld [vmem:[#allocation3 + $0x90] sm:$0xff]
    %v128 = vld [vmem:[#allocation3 + $0x98] sm:$0xff]
    %v129 = vld [vmem:[#allocation3 + $0xa0] sm:$0xff]
    %v130 = vld [vmem:[#allocation3 + $0xa8] sm:$0xff]
    %v131 = vld [vmem:[#allocation3 + $0xb0] sm:$0xff]
    %v132 = vld [vmem:[#allocation3 + $0xb8] sm:$0xff]
    %v133 = vld [vmem:[#allocation3 + $0xc0] sm:$0xff]
    %v134 = vld [vmem:[#allocation3 + $0xc8] sm:$0xff]
    %v135 = vld [vmem:[#allocation3 + $0xd0] sm:$0xff]
    %v136 = vld [vmem:[#allocation3 + $0xd8] sm:$0xff]
    %v137 = vld [vmem:[#allocation3 + $0xe0] sm:$0xff]
    %v138 = vld [vmem:[#allocation3 + $0xe8] sm:$0xff]
    %v139 = vld [vmem:[#allocation3 + $0xf0] sm:$0xff]
    %v140 = vld [vmem:[#allocation3 + $0xf8] sm:$0xff]
    %v141 = vld [vmem:[#allocation3 + $0x100] sm:$0xff]
    %v142 = vld [vmem:[#allocation3 + $0x108] sm:$0xff]
    %v143 = vld [vmem:[#allocation3 + $0x110] sm:$0xff]
    %v144 = vld [vmem:[#allocation3 + $0x118] sm:$0xff]
    %v145 = vld [vmem:[#allocation3 + $0x120] sm:$0xff]
    %v146 = vld [vmem:[#allocation3 + $0x128] sm:$0xff]
    %v147 = vld [vmem:[#allocation3 + $0x130] sm:$0xff]
    %v148 = vld [vmem:[#allocation3 + $0x138] sm:$0xff]
    %v149 = vld [vmem:[#allocation3 + $0x140] sm:$0xff]
    %v150 = vld [vmem:[#allocation3 + $0x148] sm:$0xff]
    %v151 = vld [vmem:[#allocation3 + $0x150] sm:$0xff]
    %v152 = vld [vmem:[#allocation3 + $0x158] sm:$0xff]
    %v153 = vld [vmem:[#allocation3 + $0x160] sm:$0xff]
    %v154 = vld [vmem:[#allocation3 + $0x168] sm:$0xff]
    %v155 = vld [vmem:[#allocation3 + $0x170] sm:$0xff]
    %v156 = vld [vmem:[#allocation3 + $0x178] sm:$0xff]
    %v157 = vld [vmem:[%s2] sm:$0xff]
    %v158 = vld [vmem:[%s2 + $0x8] sm:$0xff]
    %v161 = vperm.slane %v157, 0
    %v162 = vperm.slane %v157, 1
    %v163 = vperm.slane %v157, 2
    %v164 = vperm.slane %v157, 3
    %v165 = vperm.slane %v157, 4
    %v166 = vperm.slane %v157, 5
    %v167 = vperm.slane %v157, 6
    %v168 = vperm.slane %v157, 7
    %v169 = vperm.slane %v158, 0
    %v170 = vperm.slane %v158, 1
    %v171 = vperm.slane %v158, 2
    %v172 = vperm.slane %v158, 3
    %v173 = vperm.slane %v158, 4
    %v174 = vperm.slane %v158, 5
    %v175 = vperm.slane %v158, 6
    %v176 = vperm.slane %v158, 7
    %v241 = vunpack.c.l.b16 %v109
    %v242 = vunpack.c.h.b16 %v109
    %v243 = vunpack.c.l.b16 %v110
    %v244 = vunpack.c.h.b16 %v110
    %v245 = vunpack.c.l.b16 %v111
    %v246 = vunpack.c.h.b16 %v111
    %v247 = vunpack.c.l.b16 %v112
    %v248 = vunpack.c.h.b16 %v112
    %v249 = vunpack.c.l.b16 %v113
    %v250 = vunpack.c.h.b16 %v113
    %v251 = vunpack.c.l.b16 %v114
    %v252 = vunpack.c.h.b16 %v114
    %v253 = vunpack.c.l.b16 %v115
    %v254 = vunpack.c.h.b16 %v115
    %v255 = vunpack.c.l.b16 %v116
    %v256 = vunpack.c.h.b16 %v116
    %v257 = vunpack.c.l.b16 %v117
    %v258 = vunpack.c.h.b16 %v117
    %v259 = vunpack.c.l.b16 %v118
    %v260 = vunpack.c.h.b16 %v118
    %v261 = vunpack.c.l.b16 %v119
    %v262 = vunpack.c.h.b16 %v119
    %v263 = vunpack.c.l.b16 %v120
    %v264 = vunpack.c.h.b16 %v120
    %v265 = vunpack.c.l.b16 %v121
    %v266 = vunpack.c.h.b16 %v121
    %v267 = vunpack.c.l.b16 %v122
    %v268 = vunpack.c.h.b16 %v122
    %v269 = vunpack.c.l.b16 %v123
    %v270 = vunpack.c.h.b16 %v123
    %v271 = vunpack.c.l.b16 %v124
    %v272 = vunpack.c.h.b16 %v124
    %v273 = vunpack.c.l.b16 %v125
    %v274 = vunpack.c.h.b16 %v125
    %v275 = vunpack.c.l.b16 %v126
    %v276 = vunpack.c.h.b16 %v126
    %v277 = vunpack.c.l.b16 %v127
    %v278 = vunpack.c.h.b16 %v127
    %v279 = vunpack.c.l.b16 %v128
    %v280 = vunpack.c.h.b16 %v128
    %v281 = vunpack.c.l.b16 %v129
    %v282 = vunpack.c.h.b16 %v129
    %v283 = vunpack.c.l.b16 %v130
    %v284 = vunpack.c.h.b16 %v130
    %v285 = vunpack.c.l.b16 %v131
    %v286 = vunpack.c.h.b16 %v131
    %v287 = vunpack.c.l.b16 %v132
    %v288 = vunpack.c.h.b16 %v132
    %v289 = vunpack.c.l.b16 %v133
    %v290 = vunpack.c.h.b16 %v133
    %v291 = vunpack.c.l.b16 %v134
    %v292 = vunpack.c.h.b16 %v134
    %v293 = vunpack.c.l.b16 %v135
    %v294 = vunpack.c.h.b16 %v135
    %v295 = vunpack.c.l.b16 %v136
    %v296 = vunpack.c.h.b16 %v136
    %v297 = vunpack.c.l.b16 %v137
    %v298 = vunpack.c.h.b16 %v137
    %v299 = vunpack.c.l.b16 %v138
    %v300 = vunpack.c.h.b16 %v138
    %v301 = vunpack.c.l.b16 %v139
    %v302 = vunpack.c.h.b16 %v139
    %v303 = vunpack.c.l.b16 %v140
    %v304 = vunpack.c.h.b16 %v140
    %v305 = vunpack.c.l.b16 %v141
    %v306 = vunpack.c.h.b16 %v141
    %v307 = vunpack.c.l.b16 %v142
    %v308 = vunpack.c.h.b16 %v142
    %v309 = vunpack.c.l.b16 %v143
    %v310 = vunpack.c.h.b16 %v143
    %v311 = vunpack.c.l.b16 %v144
    %v312 = vunpack.c.h.b16 %v144
    %v313 = vunpack.c.l.b16 %v145
    %v314 = vunpack.c.h.b16 %v145
    %v315 = vunpack.c.l.b16 %v146
    %v316 = vunpack.c.h.b16 %v146
    %v317 = vunpack.c.l.b16 %v147
    %v318 = vunpack.c.h.b16 %v147
    %v319 = vunpack.c.l.b16 %v148
    %v320 = vunpack.c.h.b16 %v148
    %v321 = vunpack.c.l.b16 %v149
    %v322 = vunpack.c.h.b16 %v149
    %v323 = vunpack.c.l.b16 %v150
    %v324 = vunpack.c.h.b16 %v150
    %v325 = vunpack.c.l.b16 %v151
    %v326 = vunpack.c.h.b16 %v151
    %v327 = vunpack.c.l.b16 %v152
    %v328 = vunpack.c.h.b16 %v152
    %v329 = vunpack.c.l.b16 %v153
    %v330 = vunpack.c.h.b16 %v153
    %v331 = vunpack.c.l.b16 %v154
    %v332 = vunpack.c.h.b16 %v154
    %v333 = vunpack.c.l.b16 %v155
    %v334 = vunpack.c.h.b16 %v155
    %v335 = vunpack.c.l.b16 %v156
    %v336 = vunpack.c.h.b16 %v156
    %v337 = vpack.c.b16 %v257, %v241
    %v338 = vpack.c.b16 %v258, %v242
    %v339 = vpack.c.b16 %v259, %v243
    %v340 = vpack.c.b16 %v260, %v244
    %v341 = vpack.c.b16 %v261, %v245
    %v342 = vpack.c.b16 %v262, %v246
    %v343 = vpack.c.b16 %v263, %v247
    %v344 = vpack.c.b16 %v264, %v248
    %v345 = vpack.c.b16 %v265, %v249
    %v346 = vpack.c.b16 %v266, %v250
    %v347 = vpack.c.b16 %v267, %v251
    %v348 = vpack.c.b16 %v268, %v252
    %v349 = vpack.c.b16 %v269, %v253
    %v350 = vpack.c.b16 %v270, %v254
    %v351 = vpack.c.b16 %v271, %v255
    %v352 = vpack.c.b16 %v272, %v256
    %v353 = vpack.c.b16 %v289, %v273
    %v354 = vpack.c.b16 %v290, %v274
    %v355 = vpack.c.b16 %v291, %v275
    %v356 = vpack.c.b16 %v292, %v276
    %v357 = vpack.c.b16 %v293, %v277
    %v358 = vpack.c.b16 %v294, %v278
    %v359 = vpack.c.b16 %v295, %v279
    %v360 = vpack.c.b16 %v296, %v280
    %v361 = vpack.c.b16 %v297, %v281
    %v362 = vpack.c.b16 %v298, %v282
    %v363 = vpack.c.b16 %v299, %v283
    %v364 = vpack.c.b16 %v300, %v284
    %v365 = vpack.c.b16 %v301, %v285
    %v366 = vpack.c.b16 %v302, %v286
    %v367 = vpack.c.b16 %v303, %v287
    %v368 = vpack.c.b16 %v304, %v288
    %v369 = vpack.c.b16 %v321, %v305
    %v370 = vpack.c.b16 %v322, %v306
    %v371 = vpack.c.b16 %v323, %v307
    %v372 = vpack.c.b16 %v324, %v308
    %v373 = vpack.c.b16 %v325, %v309
    %v374 = vpack.c.b16 %v326, %v310
    %v375 = vpack.c.b16 %v327, %v311
    %v376 = vpack.c.b16 %v328, %v312
    %v377 = vpack.c.b16 %v329, %v313
    %v378 = vpack.c.b16 %v330, %v314
    %v379 = vpack.c.b16 %v331, %v315
    %v380 = vpack.c.b16 %v332, %v316
    %v381 = vpack.c.b16 %v333, %v317
    %v382 = vpack.c.b16 %v334, %v318
    %v383 = vpack.c.b16 %v335, %v319
    %v384 = vpack.c.b16 %v336, %v320
    %vm433 = vcmask 392192
    %v435 = vsel %vm433, %v93, 0
    %v438 = vsel %vm433, %v94, 0
    %v441 = vsel %vm433, %v95, 0
    %v444 = vsel %vm433, %v96, 0
    %v447 = vsel %vm433, %v97, 0
    %v450 = vsel %vm433, %v98, 0
    %v453 = vsel %vm433, %v99, 0
    %v456 = vsel %vm433, %v100, 0
    %v459 = vsel %vm433, %v101, 0
    %v462 = vsel %vm433, %v102, 0
    %v465 = vsel %vm433, %v103, 0
    %v468 = vsel %vm433, %v104, 0
    %v471 = vsel %vm433, %v105, 0
    %v474 = vsel %vm433, %v106, 0
    %v477 = vsel %vm433, %v107, 0
    %v480 = vsel %vm433, %v108, 0
    %482 = vmatpush.bf16.msra.mxu0 0
    %483 = vmatpush.bf16.msra.mxu0 0
    %484 = vmatpush.bf16.msra.mxu0 0
    %485 = vmatpush.bf16.msra.mxu0 0
    %486 = vmatpush.bf16.msra.mxu0 0
    %487 = vmatpush.bf16.msra.mxu0 %v369
    %488 = vmatpush.bf16.msra.mxu0 %v353
    %489 = vmatpush.bf16.msra.mxu0 %v337
    %490 = vmatmul.bf16.gmra.mxu0 %v435
    %v491 = vpop.f32.mrf.mxu0
    %v492 = vadd.f32 %v161, %v491
    %v493 = vpop.f32.mrf.mxu0
    %v494 = vadd.f32 %v161, %v493
    %495 = vmatmul.bf16.gmra.mxu0 %v438
    %v496 = vpop.f32.mrf.mxu0
    %v497 = vadd.f32 %v161, %v496
    %v498 = vpop.f32.mrf.mxu0
    %v499 = vadd.f32 %v161, %v498
    %500 = vmatmul.bf16.gmra.mxu0 %v441
    %v501 = vpop.f32.mrf.mxu0
    %v502 = vadd.f32 %v161, %v501
    %v503 = vpop.f32.mrf.mxu0
    %v504 = vadd.f32 %v161, %v503
    %505 = vmatmul.bf16.gmra.mxu0 %v444
    %v506 = vpop.f32.mrf.mxu0
    %v507 = vadd.f32 %v161, %v506
    %v508 = vpop.f32.mrf.mxu0
    %v509 = vadd.f32 %v161, %v508
    %510 = vmatmul.bf16.gmra.mxu0 %v447
    %v511 = vpop.f32.mrf.mxu0
    %v512 = vadd.f32 %v161, %v511
    %v513 = vpop.f32.mrf.mxu0
    %v514 = vadd.f32 %v161, %v513
    %515 = vmatmul.bf16.gmra.mxu0 %v450
    %v516 = vpop.f32.mrf.mxu0
    %v517 = vadd.f32 %v161, %v516
    %v518 = vpop.f32.mrf.mxu0
    %v519 = vadd.f32 %v161, %v518
    %520 = vmatmul.bf16.gmra.mxu0 %v453
    %v521 = vpop.f32.mrf.mxu0
    %v522 = vadd.f32 %v161, %v521
    %v523 = vpop.f32.mrf.mxu0
    %v524 = vadd.f32 %v161, %v523
    %525 = vmatmul.bf16.gmra.mxu0 %v456
    %v526 = vpop.f32.mrf.mxu0
    %v527 = vadd.f32 %v161, %v526
    %v528 = vpop.f32.mrf.mxu0
    %v529 = vadd.f32 %v161, %v528
    %530 = vmatmul.bf16.gmra.mxu0 %v459
    %v531 = vpop.f32.mrf.mxu0
    %v532 = vadd.f32 %v161, %v531
    %v533 = vpop.f32.mrf.mxu0
    %v534 = vadd.f32 %v161, %v533
    %535 = vmatmul.bf16.gmra.mxu0 %v462
    %v536 = vpop.f32.mrf.mxu0
    %v537 = vadd.f32 %v161, %v536
    %v538 = vpop.f32.mrf.mxu0
    %v539 = vadd.f32 %v161, %v538
    %540 = vmatmul.bf16.gmra.mxu0 %v465
    %v541 = vpop.f32.mrf.mxu0
    %v542 = vadd.f32 %v161, %v541
    %v543 = vpop.f32.mrf.mxu0
    %v544 = vadd.f32 %v161, %v543
    %545 = vmatmul.bf16.gmra.mxu0 %v468
    %v546 = vpop.f32.mrf.mxu0
    %v547 = vadd.f32 %v161, %v546
    %v548 = vpop.f32.mrf.mxu0
    %v549 = vadd.f32 %v161, %v548
    %550 = vmatmul.bf16.gmra.mxu0 %v471
    %v551 = vpop.f32.mrf.mxu0
    %v552 = vadd.f32 %v161, %v551
    %v553 = vpop.f32.mrf.mxu0
    %v554 = vadd.f32 %v161, %v553
    %555 = vmatmul.bf16.gmra.mxu0 %v474
    %v556 = vpop.f32.mrf.mxu0
    %v557 = vadd.f32 %v161, %v556
    %v558 = vpop.f32.mrf.mxu0
    %v559 = vadd.f32 %v161, %v558
    %560 = vmatmul.bf16.gmra.mxu0 %v477
    %v561 = vpop.f32.mrf.mxu0
    %v562 = vadd.f32 %v161, %v561
    %v563 = vpop.f32.mrf.mxu0
    %v564 = vadd.f32 %v161, %v563
    %565 = vmatmul.bf16.gmra.mxu0 %v480
    %v566 = vpop.f32.mrf.mxu0
    %v567 = vadd.f32 %v161, %v566
    %v568 = vpop.f32.mrf.mxu0
    %v569 = vadd.f32 %v161, %v568
    %570 = vdwg.mxu0
    %571 = vmatpush.bf16.msra.mxu0 0
    %572 = vmatpush.bf16.msra.mxu0 0
    %573 = vmatpush.bf16.msra.mxu0 0
    %574 = vmatpush.bf16.msra.mxu0 0
    %575 = vmatpush.bf16.msra.mxu0 0
    %576 = vmatpush.bf16.msra.mxu0 %v370
    %577 = vmatpush.bf16.msra.mxu0 %v354
    %578 = vmatpush.bf16.msra.mxu0 %v338
    %579 = vmatmul.bf16.gmra.mxu0 %v435
    %v580 = vpop.f32.mrf.mxu0
    %v581 = vadd.f32 %v162, %v580
    %v582 = vpop.f32.mrf.mxu0
    %v583 = vadd.f32 %v162, %v582
    %584 = vmatmul.bf16.gmra.mxu0 %v438
    %v585 = vpop.f32.mrf.mxu0
    %v586 = vadd.f32 %v162, %v585
    %v587 = vpop.f32.mrf.mxu0
    %v588 = vadd.f32 %v162, %v587
    %589 = vmatmul.bf16.gmra.mxu0 %v441
    %v590 = vpop.f32.mrf.mxu0
    %v591 = vadd.f32 %v162, %v590
    %v592 = vpop.f32.mrf.mxu0
    %v593 = vadd.f32 %v162, %v592
    %594 = vmatmul.bf16.gmra.mxu0 %v444
    %v595 = vpop.f32.mrf.mxu0
    %v596 = vadd.f32 %v162, %v595
    %v597 = vpop.f32.mrf.mxu0
    %v598 = vadd.f32 %v162, %v597
    %599 = vmatmul.bf16.gmra.mxu0 %v447
    %v600 = vpop.f32.mrf.mxu0
    %v601 = vadd.f32 %v162, %v600
    %v602 = vpop.f32.mrf.mxu0
    %v603 = vadd.f32 %v162, %v602
    %604 = vmatmul.bf16.gmra.mxu0 %v450
    %v605 = vpop.f32.mrf.mxu0
    %v606 = vadd.f32 %v162, %v605
    %v607 = vpop.f32.mrf.mxu0
    %v608 = vadd.f32 %v162, %v607
    %609 = vmatmul.bf16.gmra.mxu0 %v453
    %v610 = vpop.f32.mrf.mxu0
    %v611 = vadd.f32 %v162, %v610
    %v612 = vpop.f32.mrf.mxu0
    %v613 = vadd.f32 %v162, %v612
    %614 = vmatmul.bf16.gmra.mxu0 %v456
    %v615 = vpop.f32.mrf.mxu0
    %v616 = vadd.f32 %v162, %v615
    %v617 = vpop.f32.mrf.mxu0
    %v618 = vadd.f32 %v162, %v617
    %619 = vmatmul.bf16.gmra.mxu0 %v459
    %v620 = vpop.f32.mrf.mxu0
    %v621 = vadd.f32 %v162, %v620
    %v622 = vpop.f32.mrf.mxu0
    %v623 = vadd.f32 %v162, %v622
    %624 = vmatmul.bf16.gmra.mxu0 %v462
    %v625 = vpop.f32.mrf.mxu0
    %v626 = vadd.f32 %v162, %v625
    %v627 = vpop.f32.mrf.mxu0
    %v628 = vadd.f32 %v162, %v627
    %629 = vmatmul.bf16.gmra.mxu0 %v465
    %v630 = vpop.f32.mrf.mxu0
    %v631 = vadd.f32 %v162, %v630
    %v632 = vpop.f32.mrf.mxu0
    %v633 = vadd.f32 %v162, %v632
    %634 = vmatmul.bf16.gmra.mxu0 %v468
    %v635 = vpop.f32.mrf.mxu0
    %v636 = vadd.f32 %v162, %v635
    %v637 = vpop.f32.mrf.mxu0
    %v638 = vadd.f32 %v162, %v637
    %639 = vmatmul.bf16.gmra.mxu0 %v471
    %v640 = vpop.f32.mrf.mxu0
    %v641 = vadd.f32 %v162, %v640
    %v642 = vpop.f32.mrf.mxu0
    %v643 = vadd.f32 %v162, %v642
    %644 = vmatmul.bf16.gmra.mxu0 %v474
    %v645 = vpop.f32.mrf.mxu0
    %v646 = vadd.f32 %v162, %v645
    %v647 = vpop.f32.mrf.mxu0
    %v648 = vadd.f32 %v162, %v647
    %649 = vmatmul.bf16.gmra.mxu0 %v477
    %v650 = vpop.f32.mrf.mxu0
    %v651 = vadd.f32 %v162, %v650
    %v652 = vpop.f32.mrf.mxu0
    %v653 = vadd.f32 %v162, %v652
    %654 = vmatmul.bf16.gmra.mxu0 %v480
    %v655 = vpop.f32.mrf.mxu0
    %v656 = vadd.f32 %v162, %v655
    %v657 = vpop.f32.mrf.mxu0
    %v658 = vadd.f32 %v162, %v657
    %659 = vdwg.mxu0
    %660 = vmatpush.bf16.msra.mxu0 0
    %661 = vmatpush.bf16.msra.mxu0 0
    %662 = vmatpush.bf16.msra.mxu0 0
    %663 = vmatpush.bf16.msra.mxu0 0
    %664 = vmatpush.bf16.msra.mxu0 0
    %665 = vmatpush.bf16.msra.mxu0 %v371
    %666 = vmatpush.bf16.msra.mxu0 %v355
    %667 = vmatpush.bf16.msra.mxu0 %v339
    %668 = vmatmul.bf16.gmra.mxu0 %v435
    %v669 = vpop.f32.mrf.mxu0
    %v670 = vadd.f32 %v163, %v669
    %v671 = vpop.f32.mrf.mxu0
    %v672 = vadd.f32 %v163, %v671
    %673 = vmatmul.bf16.gmra.mxu0 %v438
    %v674 = vpop.f32.mrf.mxu0
    %v675 = vadd.f32 %v163, %v674
    %v676 = vpop.f32.mrf.mxu0
    %v677 = vadd.f32 %v163, %v676
    %678 = vmatmul.bf16.gmra.mxu0 %v441
    %v679 = vpop.f32.mrf.mxu0
    %v680 = vadd.f32 %v163, %v679
    %v681 = vpop.f32.mrf.mxu0
    %v682 = vadd.f32 %v163, %v681
    %683 = vmatmul.bf16.gmra.mxu0 %v444
    %v684 = vpop.f32.mrf.mxu0
    %v685 = vadd.f32 %v163, %v684
    %v686 = vpop.f32.mrf.mxu0
    %v687 = vadd.f32 %v163, %v686
    %688 = vmatmul.bf16.gmra.mxu0 %v447
    %v689 = vpop.f32.mrf.mxu0
    %v690 = vadd.f32 %v163, %v689
    %v691 = vpop.f32.mrf.mxu0
    %v692 = vadd.f32 %v163, %v691
    %693 = vmatmul.bf16.gmra.mxu0 %v450
    %v694 = vpop.f32.mrf.mxu0
    %v695 = vadd.f32 %v163, %v694
    %v696 = vpop.f32.mrf.mxu0
    %v697 = vadd.f32 %v163, %v696
    %698 = vmatmul.bf16.gmra.mxu0 %v453
    %v699 = vpop.f32.mrf.mxu0
    %v700 = vadd.f32 %v163, %v699
    %v701 = vpop.f32.mrf.mxu0
    %v702 = vadd.f32 %v163, %v701
    %703 = vmatmul.bf16.gmra.mxu0 %v456
    %v704 = vpop.f32.mrf.mxu0
    %v705 = vadd.f32 %v163, %v704
    %v706 = vpop.f32.mrf.mxu0
    %v707 = vadd.f32 %v163, %v706
    %708 = vmatmul.bf16.gmra.mxu0 %v459
    %v709 = vpop.f32.mrf.mxu0
    %v710 = vadd.f32 %v163, %v709
    %v711 = vpop.f32.mrf.mxu0
    %v712 = vadd.f32 %v163, %v711
    %713 = vmatmul.bf16.gmra.mxu0 %v462
    %v714 = vpop.f32.mrf.mxu0
    %v715 = vadd.f32 %v163, %v714
    %v716 = vpop.f32.mrf.mxu0
    %v717 = vadd.f32 %v163, %v716
    %718 = vmatmul.bf16.gmra.mxu0 %v465
    %v719 = vpop.f32.mrf.mxu0
    %v720 = vadd.f32 %v163, %v719
    %v721 = vpop.f32.mrf.mxu0
    %v722 = vadd.f32 %v163, %v721
    %723 = vmatmul.bf16.gmra.mxu0 %v468
    %v724 = vpop.f32.mrf.mxu0
    %v725 = vadd.f32 %v163, %v724
    %v726 = vpop.f32.mrf.mxu0
    %v727 = vadd.f32 %v163, %v726
    %728 = vmatmul.bf16.gmra.mxu0 %v471
    %v729 = vpop.f32.mrf.mxu0
    %v730 = vadd.f32 %v163, %v729
    %v731 = vpop.f32.mrf.mxu0
    %v732 = vadd.f32 %v163, %v731
    %733 = vmatmul.bf16.gmra.mxu0 %v474
    %v734 = vpop.f32.mrf.mxu0
    %v735 = vadd.f32 %v163, %v734
    %v736 = vpop.f32.mrf.mxu0
    %v737 = vadd.f32 %v163, %v736
    %738 = vmatmul.bf16.gmra.mxu0 %v477
    %v739 = vpop.f32.mrf.mxu0
    %v740 = vadd.f32 %v163, %v739
    %v741 = vpop.f32.mrf.mxu0
    %v742 = vadd.f32 %v163, %v741
    %743 = vmatmul.bf16.gmra.mxu0 %v480
    %v744 = vpop.f32.mrf.mxu0
    %v745 = vadd.f32 %v163, %v744
    %v746 = vpop.f32.mrf.mxu0
    %v747 = vadd.f32 %v163, %v746
    %748 = vdwg.mxu0
    %749 = vmatpush.bf16.msra.mxu0 0
    %750 = vmatpush.bf16.msra.mxu0 0
    %751 = vmatpush.bf16.msra.mxu0 0
    %752 = vmatpush.bf16.msra.mxu0 0
    %753 = vmatpush.bf16.msra.mxu0 0
    %754 = vmatpush.bf16.msra.mxu0 %v372
    %755 = vmatpush.bf16.msra.mxu0 %v356
    %756 = vmatpush.bf16.msra.mxu0 %v340
    %757 = vmatmul.bf16.gmra.mxu0 %v435
    %v758 = vpop.f32.mrf.mxu0
    %v759 = vadd.f32 %v164, %v758
    %v760 = vpop.f32.mrf.mxu0
    %v761 = vadd.f32 %v164, %v760
    %762 = vmatmul.bf16.gmra.mxu0 %v438
    %v763 = vpop.f32.mrf.mxu0
    %v764 = vadd.f32 %v164, %v763
    %v765 = vpop.f32.mrf.mxu0
    %v766 = vadd.f32 %v164, %v765
    %767 = vmatmul.bf16.gmra.mxu0 %v441
    %v768 = vpop.f32.mrf.mxu0
    %v769 = vadd.f32 %v164, %v768
    %v770 = vpop.f32.mrf.mxu0
    %v771 = vadd.f32 %v164, %v770
    %772 = vmatmul.bf16.gmra.mxu0 %v444
    %v773 = vpop.f32.mrf.mxu0
    %v774 = vadd.f32 %v164, %v773
    %v775 = vpop.f32.mrf.mxu0
    %v776 = vadd.f32 %v164, %v775
    %777 = vmatmul.bf16.gmra.mxu0 %v447
    %v778 = vpop.f32.mrf.mxu0
    %v779 = vadd.f32 %v164, %v778
    %v780 = vpop.f32.mrf.mxu0
    %v781 = vadd.f32 %v164, %v780
    %782 = vmatmul.bf16.gmra.mxu0 %v450
    %v783 = vpop.f32.mrf.mxu0
    %v784 = vadd.f32 %v164, %v783
    %v785 = vpop.f32.mrf.mxu0
    %v786 = vadd.f32 %v164, %v785
    %787 = vmatmul.bf16.gmra.mxu0 %v453
    %v788 = vpop.f32.mrf.mxu0
    %v789 = vadd.f32 %v164, %v788
    %v790 = vpop.f32.mrf.mxu0
    %v791 = vadd.f32 %v164, %v790
    %792 = vmatmul.bf16.gmra.mxu0 %v456
    %v793 = vpop.f32.mrf.mxu0
    %v794 = vadd.f32 %v164, %v793
    %v795 = vpop.f32.mrf.mxu0
    %v796 = vadd.f32 %v164, %v795
    %797 = vmatmul.bf16.gmra.mxu0 %v459
    %v798 = vpop.f32.mrf.mxu0
    %v799 = vadd.f32 %v164, %v798
    %v800 = vpop.f32.mrf.mxu0
    %v801 = vadd.f32 %v164, %v800
    %802 = vmatmul.bf16.gmra.mxu0 %v462
    %v803 = vpop.f32.mrf.mxu0
    %v804 = vadd.f32 %v164, %v803
    %v805 = vpop.f32.mrf.mxu0
    %v806 = vadd.f32 %v164, %v805
    %807 = vmatmul.bf16.gmra.mxu0 %v465
    %v808 = vpop.f32.mrf.mxu0
    %v809 = vadd.f32 %v164, %v808
    %v810 = vpop.f32.mrf.mxu0
    %v811 = vadd.f32 %v164, %v810
    %812 = vmatmul.bf16.gmra.mxu0 %v468
    %v813 = vpop.f32.mrf.mxu0
    %v814 = vadd.f32 %v164, %v813
    %v815 = vpop.f32.mrf.mxu0
    %v816 = vadd.f32 %v164, %v815
    %817 = vmatmul.bf16.gmra.mxu0 %v471
    %v818 = vpop.f32.mrf.mxu0
    %v819 = vadd.f32 %v164, %v818
    %v820 = vpop.f32.mrf.mxu0
    %v821 = vadd.f32 %v164, %v820
    %822 = vmatmul.bf16.gmra.mxu0 %v474
    %v823 = vpop.f32.mrf.mxu0
    %v824 = vadd.f32 %v164, %v823
    %v825 = vpop.f32.mrf.mxu0
    %v826 = vadd.f32 %v164, %v825
    %827 = vmatmul.bf16.gmra.mxu0 %v477
    %v828 = vpop.f32.mrf.mxu0
    %v829 = vadd.f32 %v164, %v828
    %v830 = vpop.f32.mrf.mxu0
    %v831 = vadd.f32 %v164, %v830
    %832 = vmatmul.bf16.gmra.mxu0 %v480
    %v833 = vpop.f32.mrf.mxu0
    %v834 = vadd.f32 %v164, %v833
    %v835 = vpop.f32.mrf.mxu0
    %v836 = vadd.f32 %v164, %v835
    %837 = vdwg.mxu0
    %838 = vmatpush.bf16.msra.mxu0 0
    %839 = vmatpush.bf16.msra.mxu0 0
    %840 = vmatpush.bf16.msra.mxu0 0
    %841 = vmatpush.bf16.msra.mxu0 0
    %842 = vmatpush.bf16.msra.mxu0 0
    %843 = vmatpush.bf16.msra.mxu0 %v373
    %844 = vmatpush.bf16.msra.mxu0 %v357
    %845 = vmatpush.bf16.msra.mxu0 %v341
    %846 = vmatmul.bf16.gmra.mxu0 %v435
    %v847 = vpop.f32.mrf.mxu0
    %v848 = vadd.f32 %v165, %v847
    %v849 = vpop.f32.mrf.mxu0
    %v850 = vadd.f32 %v165, %v849
    %851 = vmatmul.bf16.gmra.mxu0 %v438
    %v852 = vpop.f32.mrf.mxu0
    %v853 = vadd.f32 %v165, %v852
    %v854 = vpop.f32.mrf.mxu0
    %v855 = vadd.f32 %v165, %v854
    %856 = vmatmul.bf16.gmra.mxu0 %v441
    %v857 = vpop.f32.mrf.mxu0
    %v858 = vadd.f32 %v165, %v857
    %v859 = vpop.f32.mrf.mxu0
    %v860 = vadd.f32 %v165, %v859
    %861 = vmatmul.bf16.gmra.mxu0 %v444
    %v862 = vpop.f32.mrf.mxu0
    %v863 = vadd.f32 %v165, %v862
    %v864 = vpop.f32.mrf.mxu0
    %v865 = vadd.f32 %v165, %v864
    %866 = vmatmul.bf16.gmra.mxu0 %v447
    %v867 = vpop.f32.mrf.mxu0
    %v868 = vadd.f32 %v165, %v867
    %v869 = vpop.f32.mrf.mxu0
    %v870 = vadd.f32 %v165, %v869
    %871 = vmatmul.bf16.gmra.mxu0 %v450
    %v872 = vpop.f32.mrf.mxu0
    %v873 = vadd.f32 %v165, %v872
    %v874 = vpop.f32.mrf.mxu0
    %v875 = vadd.f32 %v165, %v874
    %876 = vmatmul.bf16.gmra.mxu0 %v453
    %v877 = vpop.f32.mrf.mxu0
    %v878 = vadd.f32 %v165, %v877
    %v879 = vpop.f32.mrf.mxu0
    %v880 = vadd.f32 %v165, %v879
    %881 = vmatmul.bf16.gmra.mxu0 %v456
    %v882 = vpop.f32.mrf.mxu0
    %v883 = vadd.f32 %v165, %v882
    %v884 = vpop.f32.mrf.mxu0
    %v885 = vadd.f32 %v165, %v884
    %886 = vmatmul.bf16.gmra.mxu0 %v459
    %v887 = vpop.f32.mrf.mxu0
    %v888 = vadd.f32 %v165, %v887
    %v889 = vpop.f32.mrf.mxu0
    %v890 = vadd.f32 %v165, %v889
    %891 = vmatmul.bf16.gmra.mxu0 %v462
    %v892 = vpop.f32.mrf.mxu0
    %v893 = vadd.f32 %v165, %v892
    %v894 = vpop.f32.mrf.mxu0
    %v895 = vadd.f32 %v165, %v894
    %896 = vmatmul.bf16.gmra.mxu0 %v465
    %v897 = vpop.f32.mrf.mxu0
    %v898 = vadd.f32 %v165, %v897
    %v899 = vpop.f32.mrf.mxu0
    %v900 = vadd.f32 %v165, %v899
    %901 = vmatmul.bf16.gmra.mxu0 %v468
    %v902 = vpop.f32.mrf.mxu0
    %v903 = vadd.f32 %v165, %v902
    %v904 = vpop.f32.mrf.mxu0
    %v905 = vadd.f32 %v165, %v904
    %906 = vmatmul.bf16.gmra.mxu0 %v471
    %v907 = vpop.f32.mrf.mxu0
    %v908 = vadd.f32 %v165, %v907
    %v909 = vpop.f32.mrf.mxu0
    %v910 = vadd.f32 %v165, %v909
    %911 = vmatmul.bf16.gmra.mxu0 %v474
    %v912 = vpop.f32.mrf.mxu0
    %v913 = vadd.f32 %v165, %v912
    %v914 = vpop.f32.mrf.mxu0
    %v915 = vadd.f32 %v165, %v914
    %916 = vmatmul.bf16.gmra.mxu0 %v477
    %v917 = vpop.f32.mrf.mxu0
    %v918 = vadd.f32 %v165, %v917
    %v919 = vpop.f32.mrf.mxu0
    %v920 = vadd.f32 %v165, %v919
    %921 = vmatmul.bf16.gmra.mxu0 %v480
    %v922 = vpop.f32.mrf.mxu0
    %v923 = vadd.f32 %v165, %v922
    %v924 = vpop.f32.mrf.mxu0
    %v925 = vadd.f32 %v165, %v924
    %926 = vdwg.mxu0
    %927 = vmatpush.bf16.msra.mxu0 0
    %928 = vmatpush.bf16.msra.mxu0 0
    %929 = vmatpush.bf16.msra.mxu0 0
    %930 = vmatpush.bf16.msra.mxu0 0
    %931 = vmatpush.bf16.msra.mxu0 0
    %932 = vmatpush.bf16.msra.mxu0 %v374
    %933 = vmatpush.bf16.msra.mxu0 %v358
    %934 = vmatpush.bf16.msra.mxu0 %v342
    %935 = vmatmul.bf16.gmra.mxu0 %v435
    %v936 = vpop.f32.mrf.mxu0
    %v937 = vadd.f32 %v166, %v936
    %v938 = vpop.f32.mrf.mxu0
    %v939 = vadd.f32 %v166, %v938
    %940 = vmatmul.bf16.gmra.mxu0 %v438
    %v941 = vpop.f32.mrf.mxu0
    %v942 = vadd.f32 %v166, %v941
    %v943 = vpop.f32.mrf.mxu0
    %v944 = vadd.f32 %v166, %v943
    %945 = vmatmul.bf16.gmra.mxu0 %v441
    %v946 = vpop.f32.mrf.mxu0
    %v947 = vadd.f32 %v166, %v946
    %v948 = vpop.f32.mrf.mxu0
    %v949 = vadd.f32 %v166, %v948
    %950 = vmatmul.bf16.gmra.mxu0 %v444
    %v951 = vpop.f32.mrf.mxu0
    %v952 = vadd.f32 %v166, %v951
    %v953 = vpop.f32.mrf.mxu0
    %v954 = vadd.f32 %v166, %v953
    %955 = vmatmul.bf16.gmra.mxu0 %v447
    %v956 = vpop.f32.mrf.mxu0
    %v957 = vadd.f32 %v166, %v956
    %v958 = vpop.f32.mrf.mxu0
    %v959 = vadd.f32 %v166, %v958
    %960 = vmatmul.bf16.gmra.mxu0 %v450
    %v961 = vpop.f32.mrf.mxu0
    %v962 = vadd.f32 %v166, %v961
    %v963 = vpop.f32.mrf.mxu0
    %v964 = vadd.f32 %v166, %v963
    %965 = vmatmul.bf16.gmra.mxu0 %v453
    %v966 = vpop.f32.mrf.mxu0
    %v967 = vadd.f32 %v166, %v966
    %v968 = vpop.f32.mrf.mxu0
    %v969 = vadd.f32 %v166, %v968
    %970 = vmatmul.bf16.gmra.mxu0 %v456
    %v971 = vpop.f32.mrf.mxu0
    %v972 = vadd.f32 %v166, %v971
    %v973 = vpop.f32.mrf.mxu0
    %v974 = vadd.f32 %v166, %v973
    %975 = vmatmul.bf16.gmra.mxu0 %v459
    %v976 = vpop.f32.mrf.mxu0
    %v977 = vadd.f32 %v166, %v976
    %v978 = vpop.f32.mrf.mxu0
    %v979 = vadd.f32 %v166, %v978
    %980 = vmatmul.bf16.gmra.mxu0 %v462
    %v981 = vpop.f32.mrf.mxu0
    %v982 = vadd.f32 %v166, %v981
    %v983 = vpop.f32.mrf.mxu0
    %v984 = vadd.f32 %v166, %v983
    %985 = vmatmul.bf16.gmra.mxu0 %v465
    %v986 = vpop.f32.mrf.mxu0
    %v987 = vadd.f32 %v166, %v986
    %v988 = vpop.f32.mrf.mxu0
    %v989 = vadd.f32 %v166, %v988
    %990 = vmatmul.bf16.gmra.mxu0 %v468
    %v991 = vpop.f32.mrf.mxu0
    %v992 = vadd.f32 %v166, %v991
    %v993 = vpop.f32.mrf.mxu0
    %v994 = vadd.f32 %v166, %v993
    %995 = vmatmul.bf16.gmra.mxu0 %v471
    %v996 = vpop.f32.mrf.mxu0
    %v997 = vadd.f32 %v166, %v996
    %v998 = vpop.f32.mrf.mxu0
    %v999 = vadd.f32 %v166, %v998
    %1000 = vmatmul.bf16.gmra.mxu0 %v474
    %v1001 = vpop.f32.mrf.mxu0
    %v1002 = vadd.f32 %v166, %v1001
    %v1003 = vpop.f32.mrf.mxu0
    %v1004 = vadd.f32 %v166, %v1003
    %1005 = vmatmul.bf16.gmra.mxu0 %v477
    %v1006 = vpop.f32.mrf.mxu0
    %v1007 = vadd.f32 %v166, %v1006
    %v1008 = vpop.f32.mrf.mxu0
    %v1009 = vadd.f32 %v166, %v1008
    %1010 = vmatmul.bf16.gmra.mxu0 %v480
    %v1011 = vpop.f32.mrf.mxu0
    %v1012 = vadd.f32 %v166, %v1011
    %v1013 = vpop.f32.mrf.mxu0
    %v1014 = vadd.f32 %v166, %v1013
    %1015 = vdwg.mxu0
    %1016 = vmatpush.bf16.msra.mxu0 0
    %1017 = vmatpush.bf16.msra.mxu0 0
    %1018 = vmatpush.bf16.msra.mxu0 0
    %1019 = vmatpush.bf16.msra.mxu0 0
    %1020 = vmatpush.bf16.msra.mxu0 0
    %1021 = vmatpush.bf16.msra.mxu0 %v375
    %1022 = vmatpush.bf16.msra.mxu0 %v359
    %1023 = vmatpush.bf16.msra.mxu0 %v343
    %1024 = vmatmul.bf16.gmra.mxu0 %v435
    %v1025 = vpop.f32.mrf.mxu0
    %v1026 = vadd.f32 %v167, %v1025
    %v1027 = vpop.f32.mrf.mxu0
    %v1028 = vadd.f32 %v167, %v1027
    %1029 = vmatmul.bf16.gmra.mxu0 %v438
    %v1030 = vpop.f32.mrf.mxu0
    %v1031 = vadd.f32 %v167, %v1030
    %v1032 = vpop.f32.mrf.mxu0
    %v1033 = vadd.f32 %v167, %v1032
    %1034 = vmatmul.bf16.gmra.mxu0 %v441
    %v1035 = vpop.f32.mrf.mxu0
    %v1036 = vadd.f32 %v167, %v1035
    %v1037 = vpop.f32.mrf.mxu0
    %v1038 = vadd.f32 %v167, %v1037
    %1039 = vmatmul.bf16.gmra.mxu0 %v444
    %v1040 = vpop.f32.mrf.mxu0
    %v1041 = vadd.f32 %v167, %v1040
    %v1042 = vpop.f32.mrf.mxu0
    %v1043 = vadd.f32 %v167, %v1042
    %1044 = vmatmul.bf16.gmra.mxu0 %v447
    %v1045 = vpop.f32.mrf.mxu0
    %v1046 = vadd.f32 %v167, %v1045
    %v1047 = vpop.f32.mrf.mxu0
    %v1048 = vadd.f32 %v167, %v1047
    %1049 = vmatmul.bf16.gmra.mxu0 %v450
    %v1050 = vpop.f32.mrf.mxu0
    %v1051 = vadd.f32 %v167, %v1050
    %v1052 = vpop.f32.mrf.mxu0
    %v1053 = vadd.f32 %v167, %v1052
    %1054 = vmatmul.bf16.gmra.mxu0 %v453
    %v1055 = vpop.f32.mrf.mxu0
    %v1056 = vadd.f32 %v167, %v1055
    %v1057 = vpop.f32.mrf.mxu0
    %v1058 = vadd.f32 %v167, %v1057
    %1059 = vmatmul.bf16.gmra.mxu0 %v456
    %v1060 = vpop.f32.mrf.mxu0
    %v1061 = vadd.f32 %v167, %v1060
    %v1062 = vpop.f32.mrf.mxu0
    %v1063 = vadd.f32 %v167, %v1062
    %1064 = vmatmul.bf16.gmra.mxu0 %v459
    %v1065 = vpop.f32.mrf.mxu0
    %v1066 = vadd.f32 %v167, %v1065
    %v1067 = vpop.f32.mrf.mxu0
    %v1068 = vadd.f32 %v167, %v1067
    %1069 = vmatmul.bf16.gmra.mxu0 %v462
    %v1070 = vpop.f32.mrf.mxu0
    %v1071 = vadd.f32 %v167, %v1070
    %v1072 = vpop.f32.mrf.mxu0
    %v1073 = vadd.f32 %v167, %v1072
    %1074 = vmatmul.bf16.gmra.mxu0 %v465
    %v1075 = vpop.f32.mrf.mxu0
    %v1076 = vadd.f32 %v167, %v1075
    %v1077 = vpop.f32.mrf.mxu0
    %v1078 = vadd.f32 %v167, %v1077
    %1079 = vmatmul.bf16.gmra.mxu0 %v468
    %v1080 = vpop.f32.mrf.mxu0
    %v1081 = vadd.f32 %v167, %v1080
    %v1082 = vpop.f32.mrf.mxu0
    %v1083 = vadd.f32 %v167, %v1082
    %1084 = vmatmul.bf16.gmra.mxu0 %v471
    %v1085 = vpop.f32.mrf.mxu0
    %v1086 = vadd.f32 %v167, %v1085
    %v1087 = vpop.f32.mrf.mxu0
    %v1088 = vadd.f32 %v167, %v1087
    %1089 = vmatmul.bf16.gmra.mxu0 %v474
    %v1090 = vpop.f32.mrf.mxu0
    %v1091 = vadd.f32 %v167, %v1090
    %v1092 = vpop.f32.mrf.mxu0
    %v1093 = vadd.f32 %v167, %v1092
    %1094 = vmatmul.bf16.gmra.mxu0 %v477
    %v1095 = vpop.f32.mrf.mxu0
    %v1096 = vadd.f32 %v167, %v1095
    %v1097 = vpop.f32.mrf.mxu0
    %v1098 = vadd.f32 %v167, %v1097
    %1099 = vmatmul.bf16.gmra.mxu0 %v480
    %v1100 = vpop.f32.mrf.mxu0
    %v1101 = vadd.f32 %v167, %v1100
    %v1102 = vpop.f32.mrf.mxu0
    %v1103 = vadd.f32 %v167, %v1102
    %1104 = vdwg.mxu0
    %1105 = vmatpush.bf16.msra.mxu0 0
    %1106 = vmatpush.bf16.msra.mxu0 0
    %1107 = vmatpush.bf16.msra.mxu0 0
    %1108 = vmatpush.bf16.msra.mxu0 0
    %1109 = vmatpush.bf16.msra.mxu0 0
    %1110 = vmatpush.bf16.msra.mxu0 %v376
    %1111 = vmatpush.bf16.msra.mxu0 %v360
    %1112 = vmatpush.bf16.msra.mxu0 %v344
    %1113 = vmatmul.bf16.gmra.mxu0 %v435
    %v1114 = vpop.f32.mrf.mxu0
    %v1115 = vadd.f32 %v168, %v1114
    %v1116 = vpop.f32.mrf.mxu0
    %v1117 = vadd.f32 %v168, %v1116
    %1118 = vmatmul.bf16.gmra.mxu0 %v438
    %v1119 = vpop.f32.mrf.mxu0
    %v1120 = vadd.f32 %v168, %v1119
    %v1121 = vpop.f32.mrf.mxu0
    %v1122 = vadd.f32 %v168, %v1121
    %1123 = vmatmul.bf16.gmra.mxu0 %v441
    %v1124 = vpop.f32.mrf.mxu0
    %v1125 = vadd.f32 %v168, %v1124
    %v1126 = vpop.f32.mrf.mxu0
    %v1127 = vadd.f32 %v168, %v1126
    %1128 = vmatmul.bf16.gmra.mxu0 %v444
    %v1129 = vpop.f32.mrf.mxu0
    %v1130 = vadd.f32 %v168, %v1129
    %v1131 = vpop.f32.mrf.mxu0
    %v1132 = vadd.f32 %v168, %v1131
    %1133 = vmatmul.bf16.gmra.mxu0 %v447
    %v1134 = vpop.f32.mrf.mxu0
    %v1135 = vadd.f32 %v168, %v1134
    %v1136 = vpop.f32.mrf.mxu0
    %v1137 = vadd.f32 %v168, %v1136
    %1138 = vmatmul.bf16.gmra.mxu0 %v450
    %v1139 = vpop.f32.mrf.mxu0
    %v1140 = vadd.f32 %v168, %v1139
    %v1141 = vpop.f32.mrf.mxu0
    %v1142 = vadd.f32 %v168, %v1141
    %1143 = vmatmul.bf16.gmra.mxu0 %v453
    %v1144 = vpop.f32.mrf.mxu0
    %v1145 = vadd.f32 %v168, %v1144
    %v1146 = vpop.f32.mrf.mxu0
    %v1147 = vadd.f32 %v168, %v1146
    %1148 = vmatmul.bf16.gmra.mxu0 %v456
    %v1149 = vpop.f32.mrf.mxu0
    %v1150 = vadd.f32 %v168, %v1149
    %v1151 = vpop.f32.mrf.mxu0
    %v1152 = vadd.f32 %v168, %v1151
    %1153 = vmatmul.bf16.gmra.mxu0 %v459
    %v1154 = vpop.f32.mrf.mxu0
    %v1155 = vadd.f32 %v168, %v1154
    %v1156 = vpop.f32.mrf.mxu0
    %v1157 = vadd.f32 %v168, %v1156
    %1158 = vmatmul.bf16.gmra.mxu0 %v462
    %v1159 = vpop.f32.mrf.mxu0
    %v1160 = vadd.f32 %v168, %v1159
    %v1161 = vpop.f32.mrf.mxu0
    %v1162 = vadd.f32 %v168, %v1161
    %1163 = vmatmul.bf16.gmra.mxu0 %v465
    %v1164 = vpop.f32.mrf.mxu0
    %v1165 = vadd.f32 %v168, %v1164
    %v1166 = vpop.f32.mrf.mxu0
    %v1167 = vadd.f32 %v168, %v1166
    %1168 = vmatmul.bf16.gmra.mxu0 %v468
    %v1169 = vpop.f32.mrf.mxu0
    %v1170 = vadd.f32 %v168, %v1169
    %v1171 = vpop.f32.mrf.mxu0
    %v1172 = vadd.f32 %v168, %v1171
    %1173 = vmatmul.bf16.gmra.mxu0 %v471
    %v1174 = vpop.f32.mrf.mxu0
    %v1175 = vadd.f32 %v168, %v1174
    %v1176 = vpop.f32.mrf.mxu0
    %v1177 = vadd.f32 %v168, %v1176
    %1178 = vmatmul.bf16.gmra.mxu0 %v474
    %v1179 = vpop.f32.mrf.mxu0
    %v1180 = vadd.f32 %v168, %v1179
    %v1181 = vpop.f32.mrf.mxu0
    %v1182 = vadd.f32 %v168, %v1181
    %1183 = vmatmul.bf16.gmra.mxu0 %v477
    %v1184 = vpop.f32.mrf.mxu0
    %v1185 = vadd.f32 %v168, %v1184
    %v1186 = vpop.f32.mrf.mxu0
    %v1187 = vadd.f32 %v168, %v1186
    %1188 = vmatmul.bf16.gmra.mxu0 %v480
    %v1189 = vpop.f32.mrf.mxu0
    %v1190 = vadd.f32 %v168, %v1189
    %v1191 = vpop.f32.mrf.mxu0
    %v1192 = vadd.f32 %v168, %v1191
    %1193 = vdwg.mxu0
    %1194 = vmatpush.bf16.msra.mxu0 0
    %1195 = vmatpush.bf16.msra.mxu0 0
    %1196 = vmatpush.bf16.msra.mxu0 0
    %1197 = vmatpush.bf16.msra.mxu0 0
    %1198 = vmatpush.bf16.msra.mxu0 0
    %1199 = vmatpush.bf16.msra.mxu0 %v377
    %1200 = vmatpush.bf16.msra.mxu0 %v361
    %1201 = vmatpush.bf16.msra.mxu0 %v345
    %1202 = vmatmul.bf16.gmra.mxu0 %v435
    %v1203 = vpop.f32.mrf.mxu0
    %v1204 = vadd.f32 %v169, %v1203
    %v1205 = vpop.f32.mrf.mxu0
    %v1206 = vadd.f32 %v169, %v1205
    %1207 = vmatmul.bf16.gmra.mxu0 %v438
    %v1208 = vpop.f32.mrf.mxu0
    %v1209 = vadd.f32 %v169, %v1208
    %v1210 = vpop.f32.mrf.mxu0
    %v1211 = vadd.f32 %v169, %v1210
    %1212 = vmatmul.bf16.gmra.mxu0 %v441
    %v1213 = vpop.f32.mrf.mxu0
    %v1214 = vadd.f32 %v169, %v1213
    %v1215 = vpop.f32.mrf.mxu0
    %v1216 = vadd.f32 %v169, %v1215
    %1217 = vmatmul.bf16.gmra.mxu0 %v444
    %v1218 = vpop.f32.mrf.mxu0
    %v1219 = vadd.f32 %v169, %v1218
    %v1220 = vpop.f32.mrf.mxu0
    %v1221 = vadd.f32 %v169, %v1220
    %1222 = vmatmul.bf16.gmra.mxu0 %v447
    %v1223 = vpop.f32.mrf.mxu0
    %v1224 = vadd.f32 %v169, %v1223
    %v1225 = vpop.f32.mrf.mxu0
    %v1226 = vadd.f32 %v169, %v1225
    %1227 = vmatmul.bf16.gmra.mxu0 %v450
    %v1228 = vpop.f32.mrf.mxu0
    %v1229 = vadd.f32 %v169, %v1228
    %v1230 = vpop.f32.mrf.mxu0
    %v1231 = vadd.f32 %v169, %v1230
    %1232 = vmatmul.bf16.gmra.mxu0 %v453
    %v1233 = vpop.f32.mrf.mxu0
    %v1234 = vadd.f32 %v169, %v1233
    %v1235 = vpop.f32.mrf.mxu0
    %v1236 = vadd.f32 %v169, %v1235
    %1237 = vmatmul.bf16.gmra.mxu0 %v456
    %v1238 = vpop.f32.mrf.mxu0
    %v1239 = vadd.f32 %v169, %v1238
    %v1240 = vpop.f32.mrf.mxu0
    %v1241 = vadd.f32 %v169, %v1240
    %1242 = vmatmul.bf16.gmra.mxu0 %v459
    %v1243 = vpop.f32.mrf.mxu0
    %v1244 = vadd.f32 %v169, %v1243
    %v1245 = vpop.f32.mrf.mxu0
    %v1246 = vadd.f32 %v169, %v1245
    %1247 = vmatmul.bf16.gmra.mxu0 %v462
    %v1248 = vpop.f32.mrf.mxu0
    %v1249 = vadd.f32 %v169, %v1248
    %v1250 = vpop.f32.mrf.mxu0
    %v1251 = vadd.f32 %v169, %v1250
    %1252 = vmatmul.bf16.gmra.mxu0 %v465
    %v1253 = vpop.f32.mrf.mxu0
    %v1254 = vadd.f32 %v169, %v1253
    %v1255 = vpop.f32.mrf.mxu0
    %v1256 = vadd.f32 %v169, %v1255
    %1257 = vmatmul.bf16.gmra.mxu0 %v468
    %v1258 = vpop.f32.mrf.mxu0
    %v1259 = vadd.f32 %v169, %v1258
    %v1260 = vpop.f32.mrf.mxu0
    %v1261 = vadd.f32 %v169, %v1260
    %1262 = vmatmul.bf16.gmra.mxu0 %v471
    %v1263 = vpop.f32.mrf.mxu0
    %v1264 = vadd.f32 %v169, %v1263
    %v1265 = vpop.f32.mrf.mxu0
    %v1266 = vadd.f32 %v169, %v1265
    %1267 = vmatmul.bf16.gmra.mxu0 %v474
    %v1268 = vpop.f32.mrf.mxu0
    %v1269 = vadd.f32 %v169, %v1268
    %v1270 = vpop.f32.mrf.mxu0
    %v1271 = vadd.f32 %v169, %v1270
    %1272 = vmatmul.bf16.gmra.mxu0 %v477
    %v1273 = vpop.f32.mrf.mxu0
    %v1274 = vadd.f32 %v169, %v1273
    %v1275 = vpop.f32.mrf.mxu0
    %v1276 = vadd.f32 %v169, %v1275
    %1277 = vmatmul.bf16.gmra.mxu0 %v480
    %v1278 = vpop.f32.mrf.mxu0
    %v1279 = vadd.f32 %v169, %v1278
    %v1280 = vpop.f32.mrf.mxu0
    %v1281 = vadd.f32 %v169, %v1280
    %1282 = vdwg.mxu0
    %1283 = vmatpush.bf16.msra.mxu0 0
    %1284 = vmatpush.bf16.msra.mxu0 0
    %1285 = vmatpush.bf16.msra.mxu0 0
    %1286 = vmatpush.bf16.msra.mxu0 0
    %1287 = vmatpush.bf16.msra.mxu0 0
    %1288 = vmatpush.bf16.msra.mxu0 %v378
    %1289 = vmatpush.bf16.msra.mxu0 %v362
    %1290 = vmatpush.bf16.msra.mxu0 %v346
    %1291 = vmatmul.bf16.gmra.mxu0 %v435
    %v1292 = vpop.f32.mrf.mxu0
    %v1293 = vadd.f32 %v170, %v1292
    %v1294 = vpop.f32.mrf.mxu0
    %v1295 = vadd.f32 %v170, %v1294
    %1296 = vmatmul.bf16.gmra.mxu0 %v438
    %v1297 = vpop.f32.mrf.mxu0
    %v1298 = vadd.f32 %v170, %v1297
    %v1299 = vpop.f32.mrf.mxu0
    %v1300 = vadd.f32 %v170, %v1299
    %1301 = vmatmul.bf16.gmra.mxu0 %v441
    %v1302 = vpop.f32.mrf.mxu0
    %v1303 = vadd.f32 %v170, %v1302
    %v1304 = vpop.f32.mrf.mxu0
    %v1305 = vadd.f32 %v170, %v1304
    %1306 = vmatmul.bf16.gmra.mxu0 %v444
    %v1307 = vpop.f32.mrf.mxu0
    %v1308 = vadd.f32 %v170, %v1307
    %v1309 = vpop.f32.mrf.mxu0
    %v1310 = vadd.f32 %v170, %v1309
    %1311 = vmatmul.bf16.gmra.mxu0 %v447
    %v1312 = vpop.f32.mrf.mxu0
    %v1313 = vadd.f32 %v170, %v1312
    %v1314 = vpop.f32.mrf.mxu0
    %v1315 = vadd.f32 %v170, %v1314
    %1316 = vmatmul.bf16.gmra.mxu0 %v450
    %v1317 = vpop.f32.mrf.mxu0
    %v1318 = vadd.f32 %v170, %v1317
    %v1319 = vpop.f32.mrf.mxu0
    %v1320 = vadd.f32 %v170, %v1319
    %1321 = vmatmul.bf16.gmra.mxu0 %v453
    %v1322 = vpop.f32.mrf.mxu0
    %v1323 = vadd.f32 %v170, %v1322
    %v1324 = vpop.f32.mrf.mxu0
    %v1325 = vadd.f32 %v170, %v1324
    %1326 = vmatmul.bf16.gmra.mxu0 %v456
    %v1327 = vpop.f32.mrf.mxu0
    %v1328 = vadd.f32 %v170, %v1327
    %v1329 = vpop.f32.mrf.mxu0
    %v1330 = vadd.f32 %v170, %v1329
    %1331 = vmatmul.bf16.gmra.mxu0 %v459
    %v1332 = vpop.f32.mrf.mxu0
    %v1333 = vadd.f32 %v170, %v1332
    %v1334 = vpop.f32.mrf.mxu0
    %v1335 = vadd.f32 %v170, %v1334
    %1336 = vmatmul.bf16.gmra.mxu0 %v462
    %v1337 = vpop.f32.mrf.mxu0
    %v1338 = vadd.f32 %v170, %v1337
    %v1339 = vpop.f32.mrf.mxu0
    %v1340 = vadd.f32 %v170, %v1339
    %1341 = vmatmul.bf16.gmra.mxu0 %v465
    %v1342 = vpop.f32.mrf.mxu0
    %v1343 = vadd.f32 %v170, %v1342
    %v1344 = vpop.f32.mrf.mxu0
    %v1345 = vadd.f32 %v170, %v1344
    %1346 = vmatmul.bf16.gmra.mxu0 %v468
    %v1347 = vpop.f32.mrf.mxu0
    %v1348 = vadd.f32 %v170, %v1347
    %v1349 = vpop.f32.mrf.mxu0
    %v1350 = vadd.f32 %v170, %v1349
    %1351 = vmatmul.bf16.gmra.mxu0 %v471
    %v1352 = vpop.f32.mrf.mxu0
    %v1353 = vadd.f32 %v170, %v1352
    %v1354 = vpop.f32.mrf.mxu0
    %v1355 = vadd.f32 %v170, %v1354
    %1356 = vmatmul.bf16.gmra.mxu0 %v474
    %v1357 = vpop.f32.mrf.mxu0
    %v1358 = vadd.f32 %v170, %v1357
    %v1359 = vpop.f32.mrf.mxu0
    %v1360 = vadd.f32 %v170, %v1359
    %1361 = vmatmul.bf16.gmra.mxu0 %v477
    %v1362 = vpop.f32.mrf.mxu0
    %v1363 = vadd.f32 %v170, %v1362
    %v1364 = vpop.f32.mrf.mxu0
    %v1365 = vadd.f32 %v170, %v1364
    %1366 = vmatmul.bf16.gmra.mxu0 %v480
    %v1367 = vpop.f32.mrf.mxu0
    %v1368 = vadd.f32 %v170, %v1367
    %v1369 = vpop.f32.mrf.mxu0
    %v1370 = vadd.f32 %v170, %v1369
    %1371 = vdwg.mxu0
    %1372 = vmatpush.bf16.msra.mxu0 0
    %1373 = vmatpush.bf16.msra.mxu0 0
    %1374 = vmatpush.bf16.msra.mxu0 0
    %1375 = vmatpush.bf16.msra.mxu0 0
    %1376 = vmatpush.bf16.msra.mxu0 0
    %1377 = vmatpush.bf16.msra.mxu0 %v379
    %1378 = vmatpush.bf16.msra.mxu0 %v363
    %1379 = vmatpush.bf16.msra.mxu0 %v347
    %1380 = vmatmul.bf16.gmra.mxu0 %v435
    %v1381 = vpop.f32.mrf.mxu0
    %v1382 = vadd.f32 %v171, %v1381
    %v1383 = vpop.f32.mrf.mxu0
    %v1384 = vadd.f32 %v171, %v1383
    %1385 = vmatmul.bf16.gmra.mxu0 %v438
    %v1386 = vpop.f32.mrf.mxu0
    %v1387 = vadd.f32 %v171, %v1386
    %v1388 = vpop.f32.mrf.mxu0
    %v1389 = vadd.f32 %v171, %v1388
    %1390 = vmatmul.bf16.gmra.mxu0 %v441
    %v1391 = vpop.f32.mrf.mxu0
    %v1392 = vadd.f32 %v171, %v1391
    %v1393 = vpop.f32.mrf.mxu0
    %v1394 = vadd.f32 %v171, %v1393
    %1395 = vmatmul.bf16.gmra.mxu0 %v444
    %v1396 = vpop.f32.mrf.mxu0
    %v1397 = vadd.f32 %v171, %v1396
    %v1398 = vpop.f32.mrf.mxu0
    %v1399 = vadd.f32 %v171, %v1398
    %1400 = vmatmul.bf16.gmra.mxu0 %v447
    %v1401 = vpop.f32.mrf.mxu0
    %v1402 = vadd.f32 %v171, %v1401
    %v1403 = vpop.f32.mrf.mxu0
    %v1404 = vadd.f32 %v171, %v1403
    %1405 = vmatmul.bf16.gmra.mxu0 %v450
    %v1406 = vpop.f32.mrf.mxu0
    %v1407 = vadd.f32 %v171, %v1406
    %v1408 = vpop.f32.mrf.mxu0
    %v1409 = vadd.f32 %v171, %v1408
    %1410 = vmatmul.bf16.gmra.mxu0 %v453
    %v1411 = vpop.f32.mrf.mxu0
    %v1412 = vadd.f32 %v171, %v1411
    %v1413 = vpop.f32.mrf.mxu0
    %v1414 = vadd.f32 %v171, %v1413
    %1415 = vmatmul.bf16.gmra.mxu0 %v456
    %v1416 = vpop.f32.mrf.mxu0
    %v1417 = vadd.f32 %v171, %v1416
    %v1418 = vpop.f32.mrf.mxu0
    %v1419 = vadd.f32 %v171, %v1418
    %1420 = vmatmul.bf16.gmra.mxu0 %v459
    %v1421 = vpop.f32.mrf.mxu0
    %v1422 = vadd.f32 %v171, %v1421
    %v1423 = vpop.f32.mrf.mxu0
    %v1424 = vadd.f32 %v171, %v1423
    %1425 = vmatmul.bf16.gmra.mxu0 %v462
    %v1426 = vpop.f32.mrf.mxu0
    %v1427 = vadd.f32 %v171, %v1426
    %v1428 = vpop.f32.mrf.mxu0
    %v1429 = vadd.f32 %v171, %v1428
    %1430 = vmatmul.bf16.gmra.mxu0 %v465
    %v1431 = vpop.f32.mrf.mxu0
    %v1432 = vadd.f32 %v171, %v1431
    %v1433 = vpop.f32.mrf.mxu0
    %v1434 = vadd.f32 %v171, %v1433
    %1435 = vmatmul.bf16.gmra.mxu0 %v468
    %v1436 = vpop.f32.mrf.mxu0
    %v1437 = vadd.f32 %v171, %v1436
    %v1438 = vpop.f32.mrf.mxu0
    %v1439 = vadd.f32 %v171, %v1438
    %1440 = vmatmul.bf16.gmra.mxu0 %v471
    %v1441 = vpop.f32.mrf.mxu0
    %v1442 = vadd.f32 %v171, %v1441
    %v1443 = vpop.f32.mrf.mxu0
    %v1444 = vadd.f32 %v171, %v1443
    %1445 = vmatmul.bf16.gmra.mxu0 %v474
    %v1446 = vpop.f32.mrf.mxu0
    %v1447 = vadd.f32 %v171, %v1446
    %v1448 = vpop.f32.mrf.mxu0
    %v1449 = vadd.f32 %v171, %v1448
    %1450 = vmatmul.bf16.gmra.mxu0 %v477
    %v1451 = vpop.f32.mrf.mxu0
    %v1452 = vadd.f32 %v171, %v1451
    %v1453 = vpop.f32.mrf.mxu0
    %v1454 = vadd.f32 %v171, %v1453
    %1455 = vmatmul.bf16.gmra.mxu0 %v480
    %v1456 = vpop.f32.mrf.mxu0
    %v1457 = vadd.f32 %v171, %v1456
    %v1458 = vpop.f32.mrf.mxu0
    %v1459 = vadd.f32 %v171, %v1458
    %1460 = vdwg.mxu0
    %1461 = vmatpush.bf16.msra.mxu0 0
    %1462 = vmatpush.bf16.msra.mxu0 0
    %1463 = vmatpush.bf16.msra.mxu0 0
    %1464 = vmatpush.bf16.msra.mxu0 0
    %1465 = vmatpush.bf16.msra.mxu0 0
    %1466 = vmatpush.bf16.msra.mxu0 %v380
    %1467 = vmatpush.bf16.msra.mxu0 %v364
    %1468 = vmatpush.bf16.msra.mxu0 %v348
    %1469 = vmatmul.bf16.gmra.mxu0 %v435
    %v1470 = vpop.f32.mrf.mxu0
    %v1471 = vadd.f32 %v172, %v1470
    %v1472 = vpop.f32.mrf.mxu0
    %v1473 = vadd.f32 %v172, %v1472
    %1474 = vmatmul.bf16.gmra.mxu0 %v438
    %v1475 = vpop.f32.mrf.mxu0
    %v1476 = vadd.f32 %v172, %v1475
    %v1477 = vpop.f32.mrf.mxu0
    %v1478 = vadd.f32 %v172, %v1477
    %1479 = vmatmul.bf16.gmra.mxu0 %v441
    %v1480 = vpop.f32.mrf.mxu0
    %v1481 = vadd.f32 %v172, %v1480
    %v1482 = vpop.f32.mrf.mxu0
    %v1483 = vadd.f32 %v172, %v1482
    %1484 = vmatmul.bf16.gmra.mxu0 %v444
    %v1485 = vpop.f32.mrf.mxu0
    %v1486 = vadd.f32 %v172, %v1485
    %v1487 = vpop.f32.mrf.mxu0
    %v1488 = vadd.f32 %v172, %v1487
    %1489 = vmatmul.bf16.gmra.mxu0 %v447
    %v1490 = vpop.f32.mrf.mxu0
    %v1491 = vadd.f32 %v172, %v1490
    %v1492 = vpop.f32.mrf.mxu0
    %v1493 = vadd.f32 %v172, %v1492
    %1494 = vmatmul.bf16.gmra.mxu0 %v450
    %v1495 = vpop.f32.mrf.mxu0
    %v1496 = vadd.f32 %v172, %v1495
    %v1497 = vpop.f32.mrf.mxu0
    %v1498 = vadd.f32 %v172, %v1497
    %1499 = vmatmul.bf16.gmra.mxu0 %v453
    %v1500 = vpop.f32.mrf.mxu0
    %v1501 = vadd.f32 %v172, %v1500
    %v1502 = vpop.f32.mrf.mxu0
    %v1503 = vadd.f32 %v172, %v1502
    %1504 = vmatmul.bf16.gmra.mxu0 %v456
    %v1505 = vpop.f32.mrf.mxu0
    %v1506 = vadd.f32 %v172, %v1505
    %v1507 = vpop.f32.mrf.mxu0
    %v1508 = vadd.f32 %v172, %v1507
    %1509 = vmatmul.bf16.gmra.mxu0 %v459
    %v1510 = vpop.f32.mrf.mxu0
    %v1511 = vadd.f32 %v172, %v1510
    %v1512 = vpop.f32.mrf.mxu0
    %v1513 = vadd.f32 %v172, %v1512
    %1514 = vmatmul.bf16.gmra.mxu0 %v462
    %v1515 = vpop.f32.mrf.mxu0
    %v1516 = vadd.f32 %v172, %v1515
    %v1517 = vpop.f32.mrf.mxu0
    %v1518 = vadd.f32 %v172, %v1517
    %1519 = vmatmul.bf16.gmra.mxu0 %v465
    %v1520 = vpop.f32.mrf.mxu0
    %v1521 = vadd.f32 %v172, %v1520
    %v1522 = vpop.f32.mrf.mxu0
    %v1523 = vadd.f32 %v172, %v1522
    %1524 = vmatmul.bf16.gmra.mxu0 %v468
    %v1525 = vpop.f32.mrf.mxu0
    %v1526 = vadd.f32 %v172, %v1525
    %v1527 = vpop.f32.mrf.mxu0
    %v1528 = vadd.f32 %v172, %v1527
    %1529 = vmatmul.bf16.gmra.mxu0 %v471
    %v1530 = vpop.f32.mrf.mxu0
    %v1531 = vadd.f32 %v172, %v1530
    %v1532 = vpop.f32.mrf.mxu0
    %v1533 = vadd.f32 %v172, %v1532
    %1534 = vmatmul.bf16.gmra.mxu0 %v474
    %v1535 = vpop.f32.mrf.mxu0
    %v1536 = vadd.f32 %v172, %v1535
    %v1537 = vpop.f32.mrf.mxu0
    %v1538 = vadd.f32 %v172, %v1537
    %1539 = vmatmul.bf16.gmra.mxu0 %v477
    %v1540 = vpop.f32.mrf.mxu0
    %v1541 = vadd.f32 %v172, %v1540
    %v1542 = vpop.f32.mrf.mxu0
    %v1543 = vadd.f32 %v172, %v1542
    %1544 = vmatmul.bf16.gmra.mxu0 %v480
    %v1545 = vpop.f32.mrf.mxu0
    %v1546 = vadd.f32 %v172, %v1545
    %v1547 = vpop.f32.mrf.mxu0
    %v1548 = vadd.f32 %v172, %v1547
    %1549 = vdwg.mxu0
    %1550 = vmatpush.bf16.msra.mxu0 0
    %1551 = vmatpush.bf16.msra.mxu0 0
    %1552 = vmatpush.bf16.msra.mxu0 0
    %1553 = vmatpush.bf16.msra.mxu0 0
    %1554 = vmatpush.bf16.msra.mxu0 0
    %1555 = vmatpush.bf16.msra.mxu0 %v381
    %1556 = vmatpush.bf16.msra.mxu0 %v365
    %1557 = vmatpush.bf16.msra.mxu0 %v349
    %1558 = vmatmul.bf16.gmra.mxu0 %v435
    %v1559 = vpop.f32.mrf.mxu0
    %v1560 = vadd.f32 %v173, %v1559
    %v1561 = vpop.f32.mrf.mxu0
    %v1562 = vadd.f32 %v173, %v1561
    %1563 = vmatmul.bf16.gmra.mxu0 %v438
    %v1564 = vpop.f32.mrf.mxu0
    %v1565 = vadd.f32 %v173, %v1564
    %v1566 = vpop.f32.mrf.mxu0
    %v1567 = vadd.f32 %v173, %v1566
    %1568 = vmatmul.bf16.gmra.mxu0 %v441
    %v1569 = vpop.f32.mrf.mxu0
    %v1570 = vadd.f32 %v173, %v1569
    %v1571 = vpop.f32.mrf.mxu0
    %v1572 = vadd.f32 %v173, %v1571
    %1573 = vmatmul.bf16.gmra.mxu0 %v444
    %v1574 = vpop.f32.mrf.mxu0
    %v1575 = vadd.f32 %v173, %v1574
    %v1576 = vpop.f32.mrf.mxu0
    %v1577 = vadd.f32 %v173, %v1576
    %1578 = vmatmul.bf16.gmra.mxu0 %v447
    %v1579 = vpop.f32.mrf.mxu0
    %v1580 = vadd.f32 %v173, %v1579
    %v1581 = vpop.f32.mrf.mxu0
    %v1582 = vadd.f32 %v173, %v1581
    %1583 = vmatmul.bf16.gmra.mxu0 %v450
    %v1584 = vpop.f32.mrf.mxu0
    %v1585 = vadd.f32 %v173, %v1584
    %v1586 = vpop.f32.mrf.mxu0
    %v1587 = vadd.f32 %v173, %v1586
    %1588 = vmatmul.bf16.gmra.mxu0 %v453
    %v1589 = vpop.f32.mrf.mxu0
    %v1590 = vadd.f32 %v173, %v1589
    %v1591 = vpop.f32.mrf.mxu0
    %v1592 = vadd.f32 %v173, %v1591
    %1593 = vmatmul.bf16.gmra.mxu0 %v456
    %v1594 = vpop.f32.mrf.mxu0
    %v1595 = vadd.f32 %v173, %v1594
    %v1596 = vpop.f32.mrf.mxu0
    %v1597 = vadd.f32 %v173, %v1596
    %1598 = vmatmul.bf16.gmra.mxu0 %v459
    %v1599 = vpop.f32.mrf.mxu0
    %v1600 = vadd.f32 %v173, %v1599
    %v1601 = vpop.f32.mrf.mxu0
    %v1602 = vadd.f32 %v173, %v1601
    %1603 = vmatmul.bf16.gmra.mxu0 %v462
    %v1604 = vpop.f32.mrf.mxu0
    %v1605 = vadd.f32 %v173, %v1604
    %v1606 = vpop.f32.mrf.mxu0
    %v1607 = vadd.f32 %v173, %v1606
    %1608 = vmatmul.bf16.gmra.mxu0 %v465
    %v1609 = vpop.f32.mrf.mxu0
    %v1610 = vadd.f32 %v173, %v1609
    %v1611 = vpop.f32.mrf.mxu0
    %v1612 = vadd.f32 %v173, %v1611
    %1613 = vmatmul.bf16.gmra.mxu0 %v468
    %v1614 = vpop.f32.mrf.mxu0
    %v1615 = vadd.f32 %v173, %v1614
    %v1616 = vpop.f32.mrf.mxu0
    %v1617 = vadd.f32 %v173, %v1616
    %1618 = vmatmul.bf16.gmra.mxu0 %v471
    %v1619 = vpop.f32.mrf.mxu0
    %v1620 = vadd.f32 %v173, %v1619
    %v1621 = vpop.f32.mrf.mxu0
    %v1622 = vadd.f32 %v173, %v1621
    %1623 = vmatmul.bf16.gmra.mxu0 %v474
    %v1624 = vpop.f32.mrf.mxu0
    %v1625 = vadd.f32 %v173, %v1624
    %v1626 = vpop.f32.mrf.mxu0
    %v1627 = vadd.f32 %v173, %v1626
    %1628 = vmatmul.bf16.gmra.mxu0 %v477
    %v1629 = vpop.f32.mrf.mxu0
    %v1630 = vadd.f32 %v173, %v1629
    %v1631 = vpop.f32.mrf.mxu0
    %v1632 = vadd.f32 %v173, %v1631
    %1633 = vmatmul.bf16.gmra.mxu0 %v480
    %v1634 = vpop.f32.mrf.mxu0
    %v1635 = vadd.f32 %v173, %v1634
    %v1636 = vpop.f32.mrf.mxu0
    %v1637 = vadd.f32 %v173, %v1636
    %1638 = vdwg.mxu0
    %1639 = vmatpush.bf16.msra.mxu0 0
    %1640 = vmatpush.bf16.msra.mxu0 0
    %1641 = vmatpush.bf16.msra.mxu0 0
    %1642 = vmatpush.bf16.msra.mxu0 0
    %1643 = vmatpush.bf16.msra.mxu0 0
    %1644 = vmatpush.bf16.msra.mxu0 %v382
    %1645 = vmatpush.bf16.msra.mxu0 %v366
    %1646 = vmatpush.bf16.msra.mxu0 %v350
    %1647 = vmatmul.bf16.gmra.mxu0 %v435
    %v1648 = vpop.f32.mrf.mxu0
    %v1649 = vadd.f32 %v174, %v1648
    %v1650 = vpop.f32.mrf.mxu0
    %v1651 = vadd.f32 %v174, %v1650
    %1652 = vmatmul.bf16.gmra.mxu0 %v438
    %v1653 = vpop.f32.mrf.mxu0
    %v1654 = vadd.f32 %v174, %v1653
    %v1655 = vpop.f32.mrf.mxu0
    %v1656 = vadd.f32 %v174, %v1655
    %1657 = vmatmul.bf16.gmra.mxu0 %v441
    %v1658 = vpop.f32.mrf.mxu0
    %v1659 = vadd.f32 %v174, %v1658
    %v1660 = vpop.f32.mrf.mxu0
    %v1661 = vadd.f32 %v174, %v1660
    %1662 = vmatmul.bf16.gmra.mxu0 %v444
    %v1663 = vpop.f32.mrf.mxu0
    %v1664 = vadd.f32 %v174, %v1663
    %v1665 = vpop.f32.mrf.mxu0
    %v1666 = vadd.f32 %v174, %v1665
    %1667 = vmatmul.bf16.gmra.mxu0 %v447
    %v1668 = vpop.f32.mrf.mxu0
    %v1669 = vadd.f32 %v174, %v1668
    %v1670 = vpop.f32.mrf.mxu0
    %v1671 = vadd.f32 %v174, %v1670
    %1672 = vmatmul.bf16.gmra.mxu0 %v450
    %v1673 = vpop.f32.mrf.mxu0
    %v1674 = vadd.f32 %v174, %v1673
    %v1675 = vpop.f32.mrf.mxu0
    %v1676 = vadd.f32 %v174, %v1675
    %1677 = vmatmul.bf16.gmra.mxu0 %v453
    %v1678 = vpop.f32.mrf.mxu0
    %v1679 = vadd.f32 %v174, %v1678
    %v1680 = vpop.f32.mrf.mxu0
    %v1681 = vadd.f32 %v174, %v1680
    %1682 = vmatmul.bf16.gmra.mxu0 %v456
    %v1683 = vpop.f32.mrf.mxu0
    %v1684 = vadd.f32 %v174, %v1683
    %v1685 = vpop.f32.mrf.mxu0
    %v1686 = vadd.f32 %v174, %v1685
    %1687 = vmatmul.bf16.gmra.mxu0 %v459
    %v1688 = vpop.f32.mrf.mxu0
    %v1689 = vadd.f32 %v174, %v1688
    %v1690 = vpop.f32.mrf.mxu0
    %v1691 = vadd.f32 %v174, %v1690
    %1692 = vmatmul.bf16.gmra.mxu0 %v462
    %v1693 = vpop.f32.mrf.mxu0
    %v1694 = vadd.f32 %v174, %v1693
    %v1695 = vpop.f32.mrf.mxu0
    %v1696 = vadd.f32 %v174, %v1695
    %1697 = vmatmul.bf16.gmra.mxu0 %v465
    %v1698 = vpop.f32.mrf.mxu0
    %v1699 = vadd.f32 %v174, %v1698
    %v1700 = vpop.f32.mrf.mxu0
    %v1701 = vadd.f32 %v174, %v1700
    %1702 = vmatmul.bf16.gmra.mxu0 %v468
    %v1703 = vpop.f32.mrf.mxu0
    %v1704 = vadd.f32 %v174, %v1703
    %v1705 = vpop.f32.mrf.mxu0
    %v1706 = vadd.f32 %v174, %v1705
    %1707 = vmatmul.bf16.gmra.mxu0 %v471
    %v1708 = vpop.f32.mrf.mxu0
    %v1709 = vadd.f32 %v174, %v1708
    %v1710 = vpop.f32.mrf.mxu0
    %v1711 = vadd.f32 %v174, %v1710
    %1712 = vmatmul.bf16.gmra.mxu0 %v474
    %v1713 = vpop.f32.mrf.mxu0
    %v1714 = vadd.f32 %v174, %v1713
    %v1715 = vpop.f32.mrf.mxu0
    %v1716 = vadd.f32 %v174, %v1715
    %1717 = vmatmul.bf16.gmra.mxu0 %v477
    %v1718 = vpop.f32.mrf.mxu0
    %v1719 = vadd.f32 %v174, %v1718
    %v1720 = vpop.f32.mrf.mxu0
    %v1721 = vadd.f32 %v174, %v1720
    %1722 = vmatmul.bf16.gmra.mxu0 %v480
    %v1723 = vpop.f32.mrf.mxu0
    %v1724 = vadd.f32 %v174, %v1723
    %v1725 = vpop.f32.mrf.mxu0
    %v1726 = vadd.f32 %v174, %v1725
    %1727 = vdwg.mxu0
    %1728 = vmatpush.bf16.msra.mxu0 0
    %1729 = vmatpush.bf16.msra.mxu0 0
    %1730 = vmatpush.bf16.msra.mxu0 0
    %1731 = vmatpush.bf16.msra.mxu0 0
    %1732 = vmatpush.bf16.msra.mxu0 0
    %1733 = vmatpush.bf16.msra.mxu0 %v383
    %1734 = vmatpush.bf16.msra.mxu0 %v367
    %1735 = vmatpush.bf16.msra.mxu0 %v351
    %1736 = vmatmul.bf16.gmra.mxu0 %v435
    %v1737 = vpop.f32.mrf.mxu0
    %v1738 = vadd.f32 %v175, %v1737
    %v1739 = vpop.f32.mrf.mxu0
    %v1740 = vadd.f32 %v175, %v1739
    %1741 = vmatmul.bf16.gmra.mxu0 %v438
    %v1742 = vpop.f32.mrf.mxu0
    %v1743 = vadd.f32 %v175, %v1742
    %v1744 = vpop.f32.mrf.mxu0
    %v1745 = vadd.f32 %v175, %v1744
    %1746 = vmatmul.bf16.gmra.mxu0 %v441
    %v1747 = vpop.f32.mrf.mxu0
    %v1748 = vadd.f32 %v175, %v1747
    %v1749 = vpop.f32.mrf.mxu0
    %v1750 = vadd.f32 %v175, %v1749
    %1751 = vmatmul.bf16.gmra.mxu0 %v444
    %v1752 = vpop.f32.mrf.mxu0
    %v1753 = vadd.f32 %v175, %v1752
    %v1754 = vpop.f32.mrf.mxu0
    %v1755 = vadd.f32 %v175, %v1754
    %1756 = vmatmul.bf16.gmra.mxu0 %v447
    %v1757 = vpop.f32.mrf.mxu0
    %v1758 = vadd.f32 %v175, %v1757
    %v1759 = vpop.f32.mrf.mxu0
    %v1760 = vadd.f32 %v175, %v1759
    %1761 = vmatmul.bf16.gmra.mxu0 %v450
    %v1762 = vpop.f32.mrf.mxu0
    %v1763 = vadd.f32 %v175, %v1762
    %v1764 = vpop.f32.mrf.mxu0
    %v1765 = vadd.f32 %v175, %v1764
    %1766 = vmatmul.bf16.gmra.mxu0 %v453
    %v1767 = vpop.f32.mrf.mxu0
    %v1768 = vadd.f32 %v175, %v1767
    %v1769 = vpop.f32.mrf.mxu0
    %v1770 = vadd.f32 %v175, %v1769
    %1771 = vmatmul.bf16.gmra.mxu0 %v456
    %v1772 = vpop.f32.mrf.mxu0
    %v1773 = vadd.f32 %v175, %v1772
    %v1774 = vpop.f32.mrf.mxu0
    %v1775 = vadd.f32 %v175, %v1774
    %1776 = vmatmul.bf16.gmra.mxu0 %v459
    %v1777 = vpop.f32.mrf.mxu0
    %v1778 = vadd.f32 %v175, %v1777
    %v1779 = vpop.f32.mrf.mxu0
    %v1780 = vadd.f32 %v175, %v1779
    %1781 = vmatmul.bf16.gmra.mxu0 %v462
    %v1782 = vpop.f32.mrf.mxu0
    %v1783 = vadd.f32 %v175, %v1782
    %v1784 = vpop.f32.mrf.mxu0
    %v1785 = vadd.f32 %v175, %v1784
    %1786 = vmatmul.bf16.gmra.mxu0 %v465
    %v1787 = vpop.f32.mrf.mxu0
    %v1788 = vadd.f32 %v175, %v1787
    %v1789 = vpop.f32.mrf.mxu0
    %v1790 = vadd.f32 %v175, %v1789
    %1791 = vmatmul.bf16.gmra.mxu0 %v468
    %v1792 = vpop.f32.mrf.mxu0
    %v1793 = vadd.f32 %v175, %v1792
    %v1794 = vpop.f32.mrf.mxu0
    %v1795 = vadd.f32 %v175, %v1794
    %1796 = vmatmul.bf16.gmra.mxu0 %v471
    %v1797 = vpop.f32.mrf.mxu0
    %v1798 = vadd.f32 %v175, %v1797
    %v1799 = vpop.f32.mrf.mxu0
    %v1800 = vadd.f32 %v175, %v1799
    %1801 = vmatmul.bf16.gmra.mxu0 %v474
    %v1802 = vpop.f32.mrf.mxu0
    %v1803 = vadd.f32 %v175, %v1802
    %v1804 = vpop.f32.mrf.mxu0
    %v1805 = vadd.f32 %v175, %v1804
    %1806 = vmatmul.bf16.gmra.mxu0 %v477
    %v1807 = vpop.f32.mrf.mxu0
    %v1808 = vadd.f32 %v175, %v1807
    %v1809 = vpop.f32.mrf.mxu0
    %v1810 = vadd.f32 %v175, %v1809
    %1811 = vmatmul.bf16.gmra.mxu0 %v480
    %v1812 = vpop.f32.mrf.mxu0
    %v1813 = vadd.f32 %v175, %v1812
    %v1814 = vpop.f32.mrf.mxu0
    %v1815 = vadd.f32 %v175, %v1814
    %1816 = vdwg.mxu0
    %1817 = vmatpush.bf16.msra.mxu0 0
    %1818 = vmatpush.bf16.msra.mxu0 0
    %1819 = vmatpush.bf16.msra.mxu0 0
    %1820 = vmatpush.bf16.msra.mxu0 0
    %1821 = vmatpush.bf16.msra.mxu0 0
    %1822 = vmatpush.bf16.msra.mxu0 %v384
    %1823 = vmatpush.bf16.msra.mxu0 %v368
    %1824 = vmatpush.bf16.msra.mxu0 %v352
    %1825 = vmatmul.bf16.gmra.mxu0 %v435
    %v1826 = vpop.f32.mrf.mxu0
    %v1827 = vadd.f32 %v176, %v1826
    %v1828 = vpop.f32.mrf.mxu0
    %v1829 = vadd.f32 %v176, %v1828
    %1830 = vmatmul.bf16.gmra.mxu0 %v438
    %v1831 = vpop.f32.mrf.mxu0
    %v1832 = vadd.f32 %v176, %v1831
    %v1833 = vpop.f32.mrf.mxu0
    %v1834 = vadd.f32 %v176, %v1833
    %1835 = vmatmul.bf16.gmra.mxu0 %v441
    %v1836 = vpop.f32.mrf.mxu0
    %v1837 = vadd.f32 %v176, %v1836
    %v1838 = vpop.f32.mrf.mxu0
    %v1839 = vadd.f32 %v176, %v1838
    %1840 = vmatmul.bf16.gmra.mxu0 %v444
    %v1841 = vpop.f32.mrf.mxu0
    %v1842 = vadd.f32 %v176, %v1841
    %v1843 = vpop.f32.mrf.mxu0
    %v1844 = vadd.f32 %v176, %v1843
    %1845 = vmatmul.bf16.gmra.mxu0 %v447
    %v1846 = vpop.f32.mrf.mxu0
    %v1847 = vadd.f32 %v176, %v1846
    %v1848 = vpop.f32.mrf.mxu0
    %v1849 = vadd.f32 %v176, %v1848
    %1850 = vmatmul.bf16.gmra.mxu0 %v450
    %v1851 = vpop.f32.mrf.mxu0
    %v1852 = vadd.f32 %v176, %v1851
    %v1853 = vpop.f32.mrf.mxu0
    %v1854 = vadd.f32 %v176, %v1853
    %1855 = vmatmul.bf16.gmra.mxu0 %v453
    %v1856 = vpop.f32.mrf.mxu0
    %v1857 = vadd.f32 %v176, %v1856
    %v1858 = vpop.f32.mrf.mxu0
    %v1859 = vadd.f32 %v176, %v1858
    %1860 = vmatmul.bf16.gmra.mxu0 %v456
    %v1861 = vpop.f32.mrf.mxu0
    %v1862 = vadd.f32 %v176, %v1861
    %v1863 = vpop.f32.mrf.mxu0
    %v1864 = vadd.f32 %v176, %v1863
    %1865 = vmatmul.bf16.gmra.mxu0 %v459
    %v1866 = vpop.f32.mrf.mxu0
    %v1867 = vadd.f32 %v176, %v1866
    %v1868 = vpop.f32.mrf.mxu0
    %v1869 = vadd.f32 %v176, %v1868
    %1870 = vmatmul.bf16.gmra.mxu0 %v462
    %v1871 = vpop.f32.mrf.mxu0
    %v1872 = vadd.f32 %v176, %v1871
    %v1873 = vpop.f32.mrf.mxu0
    %v1874 = vadd.f32 %v176, %v1873
    %1875 = vmatmul.bf16.gmra.mxu0 %v465
    %v1876 = vpop.f32.mrf.mxu0
    %v1877 = vadd.f32 %v176, %v1876
    %v1878 = vpop.f32.mrf.mxu0
    %v1879 = vadd.f32 %v176, %v1878
    %1880 = vmatmul.bf16.gmra.mxu0 %v468
    %v1881 = vpop.f32.mrf.mxu0
    %v1882 = vadd.f32 %v176, %v1881
    %v1883 = vpop.f32.mrf.mxu0
    %v1884 = vadd.f32 %v176, %v1883
    %1885 = vmatmul.bf16.gmra.mxu0 %v471
    %v1886 = vpop.f32.mrf.mxu0
    %v1887 = vadd.f32 %v176, %v1886
    %v1888 = vpop.f32.mrf.mxu0
    %v1889 = vadd.f32 %v176, %v1888
    %1890 = vmatmul.bf16.gmra.mxu0 %v474
    %v1891 = vpop.f32.mrf.mxu0
    %v1892 = vadd.f32 %v176, %v1891
    %v1893 = vpop.f32.mrf.mxu0
    %v1894 = vadd.f32 %v176, %v1893
    %1895 = vmatmul.bf16.gmra.mxu0 %v477
    %v1896 = vpop.f32.mrf.mxu0
    %v1897 = vadd.f32 %v176, %v1896
    %v1898 = vpop.f32.mrf.mxu0
    %v1899 = vadd.f32 %v176, %v1898
    %1900 = vmatmul.bf16.gmra.mxu0 %v480
    %v1901 = vpop.f32.mrf.mxu0
    %v1902 = vadd.f32 %v176, %v1901
    %v1903 = vpop.f32.mrf.mxu0
    %v1904 = vadd.f32 %v176, %v1903
    %1905 = vdwg.mxu0
    %v1906 = vmax.f32 %v492, 0.0
    %v1907 = vmax.f32 %v581, 0.0
    %v1908 = vmax.f32 %v670, 0.0
    %v1909 = vmax.f32 %v759, 0.0
    %v1910 = vmax.f32 %v848, 0.0
    %v1911 = vmax.f32 %v937, 0.0
    %v1912 = vmax.f32 %v1026, 0.0
    %v1913 = vmax.f32 %v1115, 0.0
    %v1914 = vmax.f32 %v1204, 0.0
    %v1915 = vmax.f32 %v1293, 0.0
    %v1916 = vmax.f32 %v1382, 0.0
    %v1917 = vmax.f32 %v1471, 0.0
    %v1918 = vmax.f32 %v1560, 0.0
    %v1919 = vmax.f32 %v1649, 0.0
    %v1920 = vmax.f32 %v1738, 0.0
    %v1921 = vmax.f32 %v1827, 0.0
    %v1922 = vmax.f32 %v494, 0.0
    %v1923 = vmax.f32 %v583, 0.0
    %v1924 = vmax.f32 %v672, 0.0
    %v1925 = vmax.f32 %v761, 0.0
    %v1926 = vmax.f32 %v850, 0.0
    %v1927 = vmax.f32 %v939, 0.0
    %v1928 = vmax.f32 %v1028, 0.0
    %v1929 = vmax.f32 %v1117, 0.0
    %v1930 = vmax.f32 %v1206, 0.0
    %v1931 = vmax.f32 %v1295, 0.0
    %v1932 = vmax.f32 %v1384, 0.0
    %v1933 = vmax.f32 %v1473, 0.0
    %v1934 = vmax.f32 %v1562, 0.0
    %v1935 = vmax.f32 %v1651, 0.0
    %v1936 = vmax.f32 %v1740, 0.0
    %v1937 = vmax.f32 %v1829, 0.0
    %v1938 = vmax.f32 %v497, 0.0
    %v1939 = vmax.f32 %v586, 0.0
    %v1940 = vmax.f32 %v675, 0.0
    %v1941 = vmax.f32 %v764, 0.0
    %v1942 = vmax.f32 %v853, 0.0
    %v1943 = vmax.f32 %v942, 0.0
    %v1944 = vmax.f32 %v1031, 0.0
    %v1945 = vmax.f32 %v1120, 0.0
    %v1946 = vmax.f32 %v1209, 0.0
    %v1947 = vmax.f32 %v1298, 0.0
    %v1948 = vmax.f32 %v1387, 0.0
    %v1949 = vmax.f32 %v1476, 0.0
    %v1950 = vmax.f32 %v1565, 0.0
    %v1951 = vmax.f32 %v1654, 0.0
    %v1952 = vmax.f32 %v1743, 0.0
    %v1953 = vmax.f32 %v1832, 0.0
    %v1954 = vmax.f32 %v499, 0.0
    %v1955 = vmax.f32 %v588, 0.0
    %v1956 = vmax.f32 %v677, 0.0
    %v1957 = vmax.f32 %v766, 0.0
    %v1958 = vmax.f32 %v855, 0.0
    %v1959 = vmax.f32 %v944, 0.0
    %v1960 = vmax.f32 %v1033, 0.0
    %v1961 = vmax.f32 %v1122, 0.0
    %v1962 = vmax.f32 %v1211, 0.0
    %v1963 = vmax.f32 %v1300, 0.0
    %v1964 = vmax.f32 %v1389, 0.0
    %v1965 = vmax.f32 %v1478, 0.0
    %v1966 = vmax.f32 %v1567, 0.0
    %v1967 = vmax.f32 %v1656, 0.0
    %v1968 = vmax.f32 %v1745, 0.0
    %v1969 = vmax.f32 %v1834, 0.0
    %v1970 = vmax.f32 %v502, 0.0
    %v1971 = vmax.f32 %v591, 0.0
    %v1972 = vmax.f32 %v680, 0.0
    %v1973 = vmax.f32 %v769, 0.0
    %v1974 = vmax.f32 %v858, 0.0
    %v1975 = vmax.f32 %v947, 0.0
    %v1976 = vmax.f32 %v1036, 0.0
    %v1977 = vmax.f32 %v1125, 0.0
    %v1978 = vmax.f32 %v1214, 0.0
    %v1979 = vmax.f32 %v1303, 0.0
    %v1980 = vmax.f32 %v1392, 0.0
    %v1981 = vmax.f32 %v1481, 0.0
    %v1982 = vmax.f32 %v1570, 0.0
    %v1983 = vmax.f32 %v1659, 0.0
    %v1984 = vmax.f32 %v1748, 0.0
    %v1985 = vmax.f32 %v1837, 0.0
    %v1986 = vmax.f32 %v504, 0.0
    %v1987 = vmax.f32 %v593, 0.0
    %v1988 = vmax.f32 %v682, 0.0
    %v1989 = vmax.f32 %v771, 0.0
    %v1990 = vmax.f32 %v860, 0.0
    %v1991 = vmax.f32 %v949, 0.0
    %v1992 = vmax.f32 %v1038, 0.0
    %v1993 = vmax.f32 %v1127, 0.0
    %v1994 = vmax.f32 %v1216, 0.0
    %v1995 = vmax.f32 %v1305, 0.0
    %v1996 = vmax.f32 %v1394, 0.0
    %v1997 = vmax.f32 %v1483, 0.0
    %v1998 = vmax.f32 %v1572, 0.0
    %v1999 = vmax.f32 %v1661, 0.0
    %v2000 = vmax.f32 %v1750, 0.0
    %v2001 = vmax.f32 %v1839, 0.0
    %v2002 = vmax.f32 %v507, 0.0
    %v2003 = vmax.f32 %v596, 0.0
    %v2004 = vmax.f32 %v685, 0.0
    %v2005 = vmax.f32 %v774, 0.0
    %v2006 = vmax.f32 %v863, 0.0
    %v2007 = vmax.f32 %v952, 0.0
    %v2008 = vmax.f32 %v1041, 0.0
    %v2009 = vmax.f32 %v1130, 0.0
    %v2010 = vmax.f32 %v1219, 0.0
    %v2011 = vmax.f32 %v1308, 0.0
    %v2012 = vmax.f32 %v1397, 0.0
    %v2013 = vmax.f32 %v1486, 0.0
    %v2014 = vmax.f32 %v1575, 0.0
    %v2015 = vmax.f32 %v1664, 0.0
    %v2016 = vmax.f32 %v1753, 0.0
    %v2017 = vmax.f32 %v1842, 0.0
    %v2018 = vmax.f32 %v509, 0.0
    %v2019 = vmax.f32 %v598, 0.0
    %v2020 = vmax.f32 %v687, 0.0
    %v2021 = vmax.f32 %v776, 0.0
    %v2022 = vmax.f32 %v865, 0.0
    %v2023 = vmax.f32 %v954, 0.0
    %v2024 = vmax.f32 %v1043, 0.0
    %v2025 = vmax.f32 %v1132, 0.0
    %v2026 = vmax.f32 %v1221, 0.0
    %v2027 = vmax.f32 %v1310, 0.0
    %v2028 = vmax.f32 %v1399, 0.0
    %v2029 = vmax.f32 %v1488, 0.0
    %v2030 = vmax.f32 %v1577, 0.0
    %v2031 = vmax.f32 %v1666, 0.0
    %v2032 = vmax.f32 %v1755, 0.0
    %v2033 = vmax.f32 %v1844, 0.0
    %v2034 = vmax.f32 %v512, 0.0
    %v2035 = vmax.f32 %v601, 0.0
    %v2036 = vmax.f32 %v690, 0.0
    %v2037 = vmax.f32 %v779, 0.0
    %v2038 = vmax.f32 %v868, 0.0
    %v2039 = vmax.f32 %v957, 0.0
    %v2040 = vmax.f32 %v1046, 0.0
    %v2041 = vmax.f32 %v1135, 0.0
    %v2042 = vmax.f32 %v1224, 0.0
    %v2043 = vmax.f32 %v1313, 0.0
    %v2044 = vmax.f32 %v1402, 0.0
    %v2045 = vmax.f32 %v1491, 0.0
    %v2046 = vmax.f32 %v1580, 0.0
    %v2047 = vmax.f32 %v1669, 0.0
    %v2048 = vmax.f32 %v1758, 0.0
    %v2049 = vmax.f32 %v1847, 0.0
    %v2050 = vmax.f32 %v514, 0.0
    %v2051 = vmax.f32 %v603, 0.0
    %v2052 = vmax.f32 %v692, 0.0
    %v2053 = vmax.f32 %v781, 0.0
    %v2054 = vmax.f32 %v870, 0.0
    %v2055 = vmax.f32 %v959, 0.0
    %v2056 = vmax.f32 %v1048, 0.0
    %v2057 = vmax.f32 %v1137, 0.0
    %v2058 = vmax.f32 %v1226, 0.0
    %v2059 = vmax.f32 %v1315, 0.0
    %v2060 = vmax.f32 %v1404, 0.0
    %v2061 = vmax.f32 %v1493, 0.0
    %v2062 = vmax.f32 %v1582, 0.0
    %v2063 = vmax.f32 %v1671, 0.0
    %v2064 = vmax.f32 %v1760, 0.0
    %v2065 = vmax.f32 %v1849, 0.0
    %v2066 = vmax.f32 %v517, 0.0
    %v2067 = vmax.f32 %v606, 0.0
    %v2068 = vmax.f32 %v695, 0.0
    %v2069 = vmax.f32 %v784, 0.0
    %v2070 = vmax.f32 %v873, 0.0
    %v2071 = vmax.f32 %v962, 0.0
    %v2072 = vmax.f32 %v1051, 0.0
    %v2073 = vmax.f32 %v1140, 0.0
    %v2074 = vmax.f32 %v1229, 0.0
    %v2075 = vmax.f32 %v1318, 0.0
    %v2076 = vmax.f32 %v1407, 0.0
    %v2077 = vmax.f32 %v1496, 0.0
    %v2078 = vmax.f32 %v1585, 0.0
    %v2079 = vmax.f32 %v1674, 0.0
    %v2080 = vmax.f32 %v1763, 0.0
    %v2081 = vmax.f32 %v1852, 0.0
    %v2082 = vmax.f32 %v519, 0.0
    %v2083 = vmax.f32 %v608, 0.0
    %v2084 = vmax.f32 %v697, 0.0
    %v2085 = vmax.f32 %v786, 0.0
    %v2086 = vmax.f32 %v875, 0.0
    %v2087 = vmax.f32 %v964, 0.0
    %v2088 = vmax.f32 %v1053, 0.0
    %v2089 = vmax.f32 %v1142, 0.0
    %v2090 = vmax.f32 %v1231, 0.0
    %v2091 = vmax.f32 %v1320, 0.0
    %v2092 = vmax.f32 %v1409, 0.0
    %v2093 = vmax.f32 %v1498, 0.0
    %v2094 = vmax.f32 %v1587, 0.0
    %v2095 = vmax.f32 %v1676, 0.0
    %v2096 = vmax.f32 %v1765, 0.0
    %v2097 = vmax.f32 %v1854, 0.0
    %v2098 = vmax.f32 %v522, 0.0
    %v2099 = vmax.f32 %v611, 0.0
    %v2100 = vmax.f32 %v700, 0.0
    %v2101 = vmax.f32 %v789, 0.0
    %v2102 = vmax.f32 %v878, 0.0
    %v2103 = vmax.f32 %v967, 0.0
    %v2104 = vmax.f32 %v1056, 0.0
    %v2105 = vmax.f32 %v1145, 0.0
    %v2106 = vmax.f32 %v1234, 0.0
    %v2107 = vmax.f32 %v1323, 0.0
    %v2108 = vmax.f32 %v1412, 0.0
    %v2109 = vmax.f32 %v1501, 0.0
    %v2110 = vmax.f32 %v1590, 0.0
    %v2111 = vmax.f32 %v1679, 0.0
    %v2112 = vmax.f32 %v1768, 0.0
    %v2113 = vmax.f32 %v1857, 0.0
    %v2114 = vmax.f32 %v524, 0.0
    %v2115 = vmax.f32 %v613, 0.0
    %v2116 = vmax.f32 %v702, 0.0
    %v2117 = vmax.f32 %v791, 0.0
    %v2118 = vmax.f32 %v880, 0.0
    %v2119 = vmax.f32 %v969, 0.0
    %v2120 = vmax.f32 %v1058, 0.0
    %v2121 = vmax.f32 %v1147, 0.0
    %v2122 = vmax.f32 %v1236, 0.0
    %v2123 = vmax.f32 %v1325, 0.0
    %v2124 = vmax.f32 %v1414, 0.0
    %v2125 = vmax.f32 %v1503, 0.0
    %v2126 = vmax.f32 %v1592, 0.0
    %v2127 = vmax.f32 %v1681, 0.0
    %v2128 = vmax.f32 %v1770, 0.0
    %v2129 = vmax.f32 %v1859, 0.0
    %v2130 = vmax.f32 %v527, 0.0
    %v2131 = vmax.f32 %v616, 0.0
    %v2132 = vmax.f32 %v705, 0.0
    %v2133 = vmax.f32 %v794, 0.0
    %v2134 = vmax.f32 %v883, 0.0
    %v2135 = vmax.f32 %v972, 0.0
    %v2136 = vmax.f32 %v1061, 0.0
    %v2137 = vmax.f32 %v1150, 0.0
    %v2138 = vmax.f32 %v1239, 0.0
    %v2139 = vmax.f32 %v1328, 0.0
    %v2140 = vmax.f32 %v1417, 0.0
    %v2141 = vmax.f32 %v1506, 0.0
    %v2142 = vmax.f32 %v1595, 0.0
    %v2143 = vmax.f32 %v1684, 0.0
    %v2144 = vmax.f32 %v1773, 0.0
    %v2145 = vmax.f32 %v1862, 0.0
    %v2146 = vmax.f32 %v529, 0.0
    %v2147 = vmax.f32 %v618, 0.0
    %v2148 = vmax.f32 %v707, 0.0
    %v2149 = vmax.f32 %v796, 0.0
    %v2150 = vmax.f32 %v885, 0.0
    %v2151 = vmax.f32 %v974, 0.0
    %v2152 = vmax.f32 %v1063, 0.0
    %v2153 = vmax.f32 %v1152, 0.0
    %v2154 = vmax.f32 %v1241, 0.0
    %v2155 = vmax.f32 %v1330, 0.0
    %v2156 = vmax.f32 %v1419, 0.0
    %v2157 = vmax.f32 %v1508, 0.0
    %v2158 = vmax.f32 %v1597, 0.0
    %v2159 = vmax.f32 %v1686, 0.0
    %v2160 = vmax.f32 %v1775, 0.0
    %v2161 = vmax.f32 %v1864, 0.0
    %v2162 = vmax.f32 %v532, 0.0
    %v2163 = vmax.f32 %v621, 0.0
    %v2164 = vmax.f32 %v710, 0.0
    %v2165 = vmax.f32 %v799, 0.0
    %v2166 = vmax.f32 %v888, 0.0
    %v2167 = vmax.f32 %v977, 0.0
    %v2168 = vmax.f32 %v1066, 0.0
    %v2169 = vmax.f32 %v1155, 0.0
    %v2170 = vmax.f32 %v1244, 0.0
    %v2171 = vmax.f32 %v1333, 0.0
    %v2172 = vmax.f32 %v1422, 0.0
    %v2173 = vmax.f32 %v1511, 0.0
    %v2174 = vmax.f32 %v1600, 0.0
    %v2175 = vmax.f32 %v1689, 0.0
    %v2176 = vmax.f32 %v1778, 0.0
    %v2177 = vmax.f32 %v1867, 0.0
    %v2178 = vmax.f32 %v534, 0.0
    %v2179 = vmax.f32 %v623, 0.0
    %v2180 = vmax.f32 %v712, 0.0
    %v2181 = vmax.f32 %v801, 0.0
    %v2182 = vmax.f32 %v890, 0.0
    %v2183 = vmax.f32 %v979, 0.0
    %v2184 = vmax.f32 %v1068, 0.0
    %v2185 = vmax.f32 %v1157, 0.0
    %v2186 = vmax.f32 %v1246, 0.0
    %v2187 = vmax.f32 %v1335, 0.0
    %v2188 = vmax.f32 %v1424, 0.0
    %v2189 = vmax.f32 %v1513, 0.0
    %v2190 = vmax.f32 %v1602, 0.0
    %v2191 = vmax.f32 %v1691, 0.0
    %v2192 = vmax.f32 %v1780, 0.0
    %v2193 = vmax.f32 %v1869, 0.0
    %v2194 = vmax.f32 %v537, 0.0
    %v2195 = vmax.f32 %v626, 0.0
    %v2196 = vmax.f32 %v715, 0.0
    %v2197 = vmax.f32 %v804, 0.0
    %v2198 = vmax.f32 %v893, 0.0
    %v2199 = vmax.f32 %v982, 0.0
    %v2200 = vmax.f32 %v1071, 0.0
    %v2201 = vmax.f32 %v1160, 0.0
    %v2202 = vmax.f32 %v1249, 0.0
    %v2203 = vmax.f32 %v1338, 0.0
    %v2204 = vmax.f32 %v1427, 0.0
    %v2205 = vmax.f32 %v1516, 0.0
    %v2206 = vmax.f32 %v1605, 0.0
    %v2207 = vmax.f32 %v1694, 0.0
    %v2208 = vmax.f32 %v1783, 0.0
    %v2209 = vmax.f32 %v1872, 0.0
    %v2210 = vmax.f32 %v539, 0.0
    %v2211 = vmax.f32 %v628, 0.0
    %v2212 = vmax.f32 %v717, 0.0
    %v2213 = vmax.f32 %v806, 0.0
    %v2214 = vmax.f32 %v895, 0.0
    %v2215 = vmax.f32 %v984, 0.0
    %v2216 = vmax.f32 %v1073, 0.0
    %v2217 = vmax.f32 %v1162, 0.0
    %v2218 = vmax.f32 %v1251, 0.0
    %v2219 = vmax.f32 %v1340, 0.0
    %v2220 = vmax.f32 %v1429, 0.0
    %v2221 = vmax.f32 %v1518, 0.0
    %v2222 = vmax.f32 %v1607, 0.0
    %v2223 = vmax.f32 %v1696, 0.0
    %v2224 = vmax.f32 %v1785, 0.0
    %v2225 = vmax.f32 %v1874, 0.0
    %v2226 = vmax.f32 %v542, 0.0
    %v2227 = vmax.f32 %v631, 0.0
    %v2228 = vmax.f32 %v720, 0.0
    %v2229 = vmax.f32 %v809, 0.0
    %v2230 = vmax.f32 %v898, 0.0
    %v2231 = vmax.f32 %v987, 0.0
    %v2232 = vmax.f32 %v1076, 0.0
    %v2233 = vmax.f32 %v1165, 0.0
    %v2234 = vmax.f32 %v1254, 0.0
    %v2235 = vmax.f32 %v1343, 0.0
    %v2236 = vmax.f32 %v1432, 0.0
    %v2237 = vmax.f32 %v1521, 0.0
    %v2238 = vmax.f32 %v1610, 0.0
    %v2239 = vmax.f32 %v1699, 0.0
    %v2240 = vmax.f32 %v1788, 0.0
    %v2241 = vmax.f32 %v1877, 0.0
    %v2242 = vmax.f32 %v544, 0.0
    %v2243 = vmax.f32 %v633, 0.0
    %v2244 = vmax.f32 %v722, 0.0
    %v2245 = vmax.f32 %v811, 0.0
    %v2246 = vmax.f32 %v900, 0.0
    %v2247 = vmax.f32 %v989, 0.0
    %v2248 = vmax.f32 %v1078, 0.0
    %v2249 = vmax.f32 %v1167, 0.0
    %v2250 = vmax.f32 %v1256, 0.0
    %v2251 = vmax.f32 %v1345, 0.0
    %v2252 = vmax.f32 %v1434, 0.0
    %v2253 = vmax.f32 %v1523, 0.0
    %v2254 = vmax.f32 %v1612, 0.0
    %v2255 = vmax.f32 %v1701, 0.0
    %v2256 = vmax.f32 %v1790, 0.0
    %v2257 = vmax.f32 %v1879, 0.0
    %v2258 = vmax.f32 %v547, 0.0
    %v2259 = vmax.f32 %v636, 0.0
    %v2260 = vmax.f32 %v725, 0.0
    %v2261 = vmax.f32 %v814, 0.0
    %v2262 = vmax.f32 %v903, 0.0
    %v2263 = vmax.f32 %v992, 0.0
    %v2264 = vmax.f32 %v1081, 0.0
    %v2265 = vmax.f32 %v1170, 0.0
    %v2266 = vmax.f32 %v1259, 0.0
    %v2267 = vmax.f32 %v1348, 0.0
    %v2268 = vmax.f32 %v1437, 0.0
    %v2269 = vmax.f32 %v1526, 0.0
    %v2270 = vmax.f32 %v1615, 0.0
    %v2271 = vmax.f32 %v1704, 0.0
    %v2272 = vmax.f32 %v1793, 0.0
    %v2273 = vmax.f32 %v1882, 0.0
    %v2274 = vmax.f32 %v549, 0.0
    %v2275 = vmax.f32 %v638, 0.0
    %v2276 = vmax.f32 %v727, 0.0
    %v2277 = vmax.f32 %v816, 0.0
    %v2278 = vmax.f32 %v905, 0.0
    %v2279 = vmax.f32 %v994, 0.0
    %v2280 = vmax.f32 %v1083, 0.0
    %v2281 = vmax.f32 %v1172, 0.0
    %v2282 = vmax.f32 %v1261, 0.0
    %v2283 = vmax.f32 %v1350, 0.0
    %v2284 = vmax.f32 %v1439, 0.0
    %v2285 = vmax.f32 %v1528, 0.0
    %v2286 = vmax.f32 %v1617, 0.0
    %v2287 = vmax.f32 %v1706, 0.0
    %v2288 = vmax.f32 %v1795, 0.0
    %v2289 = vmax.f32 %v1884, 0.0
    %v2290 = vmax.f32 %v552, 0.0
    %v2291 = vmax.f32 %v641, 0.0
    %v2292 = vmax.f32 %v730, 0.0
    %v2293 = vmax.f32 %v819, 0.0
    %v2294 = vmax.f32 %v908, 0.0
    %v2295 = vmax.f32 %v997, 0.0
    %v2296 = vmax.f32 %v1086, 0.0
    %v2297 = vmax.f32 %v1175, 0.0
    %v2298 = vmax.f32 %v1264, 0.0
    %v2299 = vmax.f32 %v1353, 0.0
    %v2300 = vmax.f32 %v1442, 0.0
    %v2301 = vmax.f32 %v1531, 0.0
    %v2302 = vmax.f32 %v1620, 0.0
    %v2303 = vmax.f32 %v1709, 0.0
    %v2304 = vmax.f32 %v1798, 0.0
    %v2305 = vmax.f32 %v1887, 0.0
    %v2306 = vmax.f32 %v554, 0.0
    %v2307 = vmax.f32 %v643, 0.0
    %v2308 = vmax.f32 %v732, 0.0
    %v2309 = vmax.f32 %v821, 0.0
    %v2310 = vmax.f32 %v910, 0.0
    %v2311 = vmax.f32 %v999, 0.0
    %v2312 = vmax.f32 %v1088, 0.0
    %v2313 = vmax.f32 %v1177, 0.0
    %v2314 = vmax.f32 %v1266, 0.0
    %v2315 = vmax.f32 %v1355, 0.0
    %v2316 = vmax.f32 %v1444, 0.0
    %v2317 = vmax.f32 %v1533, 0.0
    %v2318 = vmax.f32 %v1622, 0.0
    %v2319 = vmax.f32 %v1711, 0.0
    %v2320 = vmax.f32 %v1800, 0.0
    %v2321 = vmax.f32 %v1889, 0.0
    %v2322 = vmax.f32 %v557, 0.0
    %v2323 = vmax.f32 %v646, 0.0
    %v2324 = vmax.f32 %v735, 0.0
    %v2325 = vmax.f32 %v824, 0.0
    %v2326 = vmax.f32 %v913, 0.0
    %v2327 = vmax.f32 %v1002, 0.0
    %v2328 = vmax.f32 %v1091, 0.0
    %v2329 = vmax.f32 %v1180, 0.0
    %v2330 = vmax.f32 %v1269, 0.0
    %v2331 = vmax.f32 %v1358, 0.0
    %v2332 = vmax.f32 %v1447, 0.0
    %v2333 = vmax.f32 %v1536, 0.0
    %v2334 = vmax.f32 %v1625, 0.0
    %v2335 = vmax.f32 %v1714, 0.0
    %v2336 = vmax.f32 %v1803, 0.0
    %v2337 = vmax.f32 %v1892, 0.0
    %v2338 = vmax.f32 %v559, 0.0
    %v2339 = vmax.f32 %v648, 0.0
    %v2340 = vmax.f32 %v737, 0.0
    %v2341 = vmax.f32 %v826, 0.0
    %v2342 = vmax.f32 %v915, 0.0
    %v2343 = vmax.f32 %v1004, 0.0
    %v2344 = vmax.f32 %v1093, 0.0
    %v2345 = vmax.f32 %v1182, 0.0
    %v2346 = vmax.f32 %v1271, 0.0
    %v2347 = vmax.f32 %v1360, 0.0
    %v2348 = vmax.f32 %v1449, 0.0
    %v2349 = vmax.f32 %v1538, 0.0
    %v2350 = vmax.f32 %v1627, 0.0
    %v2351 = vmax.f32 %v1716, 0.0
    %v2352 = vmax.f32 %v1805, 0.0
    %v2353 = vmax.f32 %v1894, 0.0
    %v2354 = vmax.f32 %v562, 0.0
    %v2355 = vmax.f32 %v651, 0.0
    %v2356 = vmax.f32 %v740, 0.0
    %v2357 = vmax.f32 %v829, 0.0
    %v2358 = vmax.f32 %v918, 0.0
    %v2359 = vmax.f32 %v1007, 0.0
    %v2360 = vmax.f32 %v1096, 0.0
    %v2361 = vmax.f32 %v1185, 0.0
    %v2362 = vmax.f32 %v1274, 0.0
    %v2363 = vmax.f32 %v1363, 0.0
    %v2364 = vmax.f32 %v1452, 0.0
    %v2365 = vmax.f32 %v1541, 0.0
    %v2366 = vmax.f32 %v1630, 0.0
    %v2367 = vmax.f32 %v1719, 0.0
    %v2368 = vmax.f32 %v1808, 0.0
    %v2369 = vmax.f32 %v1897, 0.0
    %v2370 = vmax.f32 %v564, 0.0
    %v2371 = vmax.f32 %v653, 0.0
    %v2372 = vmax.f32 %v742, 0.0
    %v2373 = vmax.f32 %v831, 0.0
    %v2374 = vmax.f32 %v920, 0.0
    %v2375 = vmax.f32 %v1009, 0.0
    %v2376 = vmax.f32 %v1098, 0.0
    %v2377 = vmax.f32 %v1187, 0.0
    %v2378 = vmax.f32 %v1276, 0.0
    %v2379 = vmax.f32 %v1365, 0.0
    %v2380 = vmax.f32 %v1454, 0.0
    %v2381 = vmax.f32 %v1543, 0.0
    %v2382 = vmax.f32 %v1632, 0.0
    %v2383 = vmax.f32 %v1721, 0.0
    %v2384 = vmax.f32 %v1810, 0.0
    %v2385 = vmax.f32 %v1899, 0.0
    %v2386 = vmax.f32 %v567, 0.0
    %v2387 = vmax.f32 %v656, 0.0
    %v2388 = vmax.f32 %v745, 0.0
    %v2389 = vmax.f32 %v834, 0.0
    %v2390 = vmax.f32 %v923, 0.0
    %v2391 = vmax.f32 %v1012, 0.0
    %v2392 = vmax.f32 %v1101, 0.0
    %v2393 = vmax.f32 %v1190, 0.0
    %v2394 = vmax.f32 %v1279, 0.0
    %v2395 = vmax.f32 %v1368, 0.0
    %v2396 = vmax.f32 %v1457, 0.0
    %v2397 = vmax.f32 %v1546, 0.0
    %v2398 = vmax.f32 %v1635, 0.0
    %v2399 = vmax.f32 %v1724, 0.0
    %v2400 = vmax.f32 %v1813, 0.0
    %v2401 = vmax.f32 %v1902, 0.0
    %v2402 = vmax.f32 %v569, 0.0
    %v2403 = vmax.f32 %v658, 0.0
    %v2404 = vmax.f32 %v747, 0.0
    %v2405 = vmax.f32 %v836, 0.0
    %v2406 = vmax.f32 %v925, 0.0
    %v2407 = vmax.f32 %v1014, 0.0
    %v2408 = vmax.f32 %v1103, 0.0
    %v2409 = vmax.f32 %v1192, 0.0
    %v2410 = vmax.f32 %v1281, 0.0
    %v2411 = vmax.f32 %v1370, 0.0
    %v2412 = vmax.f32 %v1459, 0.0
    %v2413 = vmax.f32 %v1548, 0.0
    %v2414 = vmax.f32 %v1637, 0.0
    %v2415 = vmax.f32 %v1726, 0.0
    %v2416 = vmax.f32 %v1815, 0.0
    %v2417 = vmax.f32 %v1904, 0.0
    %v2418 = vpack.c.bf16 %v1922, %v1906
    %v2419 = vpack.c.bf16 %v1923, %v1907
    %v2420 = vpack.c.bf16 %v1924, %v1908
    %v2421 = vpack.c.bf16 %v1925, %v1909
    %v2422 = vpack.c.bf16 %v1926, %v1910
    %v2423 = vpack.c.bf16 %v1927, %v1911
    %v2424 = vpack.c.bf16 %v1928, %v1912
    %v2425 = vpack.c.bf16 %v1929, %v1913
    %v2426 = vpack.c.bf16 %v1930, %v1914
    %v2427 = vpack.c.bf16 %v1931, %v1915
    %v2428 = vpack.c.bf16 %v1932, %v1916
    %v2429 = vpack.c.bf16 %v1933, %v1917
    %v2430 = vpack.c.bf16 %v1934, %v1918
    %v2431 = vpack.c.bf16 %v1935, %v1919
    %v2432 = vpack.c.bf16 %v1936, %v1920
    %v2433 = vpack.c.bf16 %v1937, %v1921
    %v2434 = vpack.c.bf16 %v1954, %v1938
    %v2435 = vpack.c.bf16 %v1955, %v1939
    %v2436 = vpack.c.bf16 %v1956, %v1940
    %v2437 = vpack.c.bf16 %v1957, %v1941
    %v2438 = vpack.c.bf16 %v1958, %v1942
    %v2439 = vpack.c.bf16 %v1959, %v1943
    %v2440 = vpack.c.bf16 %v1960, %v1944
    %v2441 = vpack.c.bf16 %v1961, %v1945
    %v2442 = vpack.c.bf16 %v1962, %v1946
    %v2443 = vpack.c.bf16 %v1963, %v1947
    %v2444 = vpack.c.bf16 %v1964, %v1948
    %v2445 = vpack.c.bf16 %v1965, %v1949
    %v2446 = vpack.c.bf16 %v1966, %v1950
    %v2447 = vpack.c.bf16 %v1967, %v1951
    %v2448 = vpack.c.bf16 %v1968, %v1952
    %v2449 = vpack.c.bf16 %v1969, %v1953
    %v2450 = vpack.c.bf16 %v1986, %v1970
    %v2451 = vpack.c.bf16 %v1987, %v1971
    %v2452 = vpack.c.bf16 %v1988, %v1972
    %v2453 = vpack.c.bf16 %v1989, %v1973
    %v2454 = vpack.c.bf16 %v1990, %v1974
    %v2455 = vpack.c.bf16 %v1991, %v1975
    %v2456 = vpack.c.bf16 %v1992, %v1976
    %v2457 = vpack.c.bf16 %v1993, %v1977
    %v2458 = vpack.c.bf16 %v1994, %v1978
    %v2459 = vpack.c.bf16 %v1995, %v1979
    %v2460 = vpack.c.bf16 %v1996, %v1980
    %v2461 = vpack.c.bf16 %v1997, %v1981
    %v2462 = vpack.c.bf16 %v1998, %v1982
    %v2463 = vpack.c.bf16 %v1999, %v1983
    %v2464 = vpack.c.bf16 %v2000, %v1984
    %v2465 = vpack.c.bf16 %v2001, %v1985
    %v2466 = vpack.c.bf16 %v2018, %v2002
    %v2467 = vpack.c.bf16 %v2019, %v2003
    %v2468 = vpack.c.bf16 %v2020, %v2004
    %v2469 = vpack.c.bf16 %v2021, %v2005
    %v2470 = vpack.c.bf16 %v2022, %v2006
    %v2471 = vpack.c.bf16 %v2023, %v2007
    %v2472 = vpack.c.bf16 %v2024, %v2008
    %v2473 = vpack.c.bf16 %v2025, %v2009
    %v2474 = vpack.c.bf16 %v2026, %v2010
    %v2475 = vpack.c.bf16 %v2027, %v2011
    %v2476 = vpack.c.bf16 %v2028, %v2012
    %v2477 = vpack.c.bf16 %v2029, %v2013
    %v2478 = vpack.c.bf16 %v2030, %v2014
    %v2479 = vpack.c.bf16 %v2031, %v2015
    %v2480 = vpack.c.bf16 %v2032, %v2016
    %v2481 = vpack.c.bf16 %v2033, %v2017
    %v2482 = vpack.c.bf16 %v2050, %v2034
    %v2483 = vpack.c.bf16 %v2051, %v2035
    %v2484 = vpack.c.bf16 %v2052, %v2036
    %v2485 = vpack.c.bf16 %v2053, %v2037
    %v2486 = vpack.c.bf16 %v2054, %v2038
    %v2487 = vpack.c.bf16 %v2055, %v2039
    %v2488 = vpack.c.bf16 %v2056, %v2040
    %v2489 = vpack.c.bf16 %v2057, %v2041
    %v2490 = vpack.c.bf16 %v2058, %v2042
    %v2491 = vpack.c.bf16 %v2059, %v2043
    %v2492 = vpack.c.bf16 %v2060, %v2044
    %v2493 = vpack.c.bf16 %v2061, %v2045
    %v2494 = vpack.c.bf16 %v2062, %v2046
    %v2495 = vpack.c.bf16 %v2063, %v2047
    %v2496 = vpack.c.bf16 %v2064, %v2048
    %v2497 = vpack.c.bf16 %v2065, %v2049
    %v2498 = vpack.c.bf16 %v2082, %v2066
    %v2499 = vpack.c.bf16 %v2083, %v2067
    %v2500 = vpack.c.bf16 %v2084, %v2068
    %v2501 = vpack.c.bf16 %v2085, %v2069
    %v2502 = vpack.c.bf16 %v2086, %v2070
    %v2503 = vpack.c.bf16 %v2087, %v2071
    %v2504 = vpack.c.bf16 %v2088, %v2072
    %v2505 = vpack.c.bf16 %v2089, %v2073
    %v2506 = vpack.c.bf16 %v2090, %v2074
    %v2507 = vpack.c.bf16 %v2091, %v2075
    %v2508 = vpack.c.bf16 %v2092, %v2076
    %v2509 = vpack.c.bf16 %v2093, %v2077
    %v2510 = vpack.c.bf16 %v2094, %v2078
    %v2511 = vpack.c.bf16 %v2095, %v2079
    %v2512 = vpack.c.bf16 %v2096, %v2080
    %v2513 = vpack.c.bf16 %v2097, %v2081
    %v2514 = vpack.c.bf16 %v2114, %v2098
    %v2515 = vpack.c.bf16 %v2115, %v2099
    %v2516 = vpack.c.bf16 %v2116, %v2100
    %v2517 = vpack.c.bf16 %v2117, %v2101
    %v2518 = vpack.c.bf16 %v2118, %v2102
    %v2519 = vpack.c.bf16 %v2119, %v2103
    %v2520 = vpack.c.bf16 %v2120, %v2104
    %v2521 = vpack.c.bf16 %v2121, %v2105
    %v2522 = vpack.c.bf16 %v2122, %v2106
    %v2523 = vpack.c.bf16 %v2123, %v2107
    %v2524 = vpack.c.bf16 %v2124, %v2108
    %v2525 = vpack.c.bf16 %v2125, %v2109
    %v2526 = vpack.c.bf16 %v2126, %v2110
    %v2527 = vpack.c.bf16 %v2127, %v2111
    %v2528 = vpack.c.bf16 %v2128, %v2112
    %v2529 = vpack.c.bf16 %v2129, %v2113
    %v2530 = vpack.c.bf16 %v2146, %v2130
    %v2531 = vpack.c.bf16 %v2147, %v2131
    %v2532 = vpack.c.bf16 %v2148, %v2132
    %v2533 = vpack.c.bf16 %v2149, %v2133
    %v2534 = vpack.c.bf16 %v2150, %v2134
    %v2535 = vpack.c.bf16 %v2151, %v2135
    %v2536 = vpack.c.bf16 %v2152, %v2136
    %v2537 = vpack.c.bf16 %v2153, %v2137
    %v2538 = vpack.c.bf16 %v2154, %v2138
    %v2539 = vpack.c.bf16 %v2155, %v2139
    %v2540 = vpack.c.bf16 %v2156, %v2140
    %v2541 = vpack.c.bf16 %v2157, %v2141
    %v2542 = vpack.c.bf16 %v2158, %v2142
    %v2543 = vpack.c.bf16 %v2159, %v2143
    %v2544 = vpack.c.bf16 %v2160, %v2144
    %v2545 = vpack.c.bf16 %v2161, %v2145
    %v2546 = vpack.c.bf16 %v2178, %v2162
    %v2547 = vpack.c.bf16 %v2179, %v2163
    %v2548 = vpack.c.bf16 %v2180, %v2164
    %v2549 = vpack.c.bf16 %v2181, %v2165
    %v2550 = vpack.c.bf16 %v2182, %v2166
    %v2551 = vpack.c.bf16 %v2183, %v2167
    %v2552 = vpack.c.bf16 %v2184, %v2168
    %v2553 = vpack.c.bf16 %v2185, %v2169
    %v2554 = vpack.c.bf16 %v2186, %v2170
    %v2555 = vpack.c.bf16 %v2187, %v2171
    %v2556 = vpack.c.bf16 %v2188, %v2172
    %v2557 = vpack.c.bf16 %v2189, %v2173
    %v2558 = vpack.c.bf16 %v2190, %v2174
    %v2559 = vpack.c.bf16 %v2191, %v2175
    %v2560 = vpack.c.bf16 %v2192, %v2176
    %v2561 = vpack.c.bf16 %v2193, %v2177
    %v2562 = vpack.c.bf16 %v2210, %v2194
    %v2563 = vpack.c.bf16 %v2211, %v2195
    %v2564 = vpack.c.bf16 %v2212, %v2196
    %v2565 = vpack.c.bf16 %v2213, %v2197
    %v2566 = vpack.c.bf16 %v2214, %v2198
    %v2567 = vpack.c.bf16 %v2215, %v2199
    %v2568 = vpack.c.bf16 %v2216, %v2200
    %v2569 = vpack.c.bf16 %v2217, %v2201
    %v2570 = vpack.c.bf16 %v2218, %v2202
    %v2571 = vpack.c.bf16 %v2219, %v2203
    %v2572 = vpack.c.bf16 %v2220, %v2204
    %v2573 = vpack.c.bf16 %v2221, %v2205
    %v2574 = vpack.c.bf16 %v2222, %v2206
    %v2575 = vpack.c.bf16 %v2223, %v2207
    %v2576 = vpack.c.bf16 %v2224, %v2208
    %v2577 = vpack.c.bf16 %v2225, %v2209
    %v2578 = vpack.c.bf16 %v2242, %v2226
    %v2579 = vpack.c.bf16 %v2243, %v2227
    %v2580 = vpack.c.bf16 %v2244, %v2228
    %v2581 = vpack.c.bf16 %v2245, %v2229
    %v2582 = vpack.c.bf16 %v2246, %v2230
    %v2583 = vpack.c.bf16 %v2247, %v2231
    %v2584 = vpack.c.bf16 %v2248, %v2232
    %v2585 = vpack.c.bf16 %v2249, %v2233
    %v2586 = vpack.c.bf16 %v2250, %v2234
    %v2587 = vpack.c.bf16 %v2251, %v2235
    %v2588 = vpack.c.bf16 %v2252, %v2236
    %v2589 = vpack.c.bf16 %v2253, %v2237
    %v2590 = vpack.c.bf16 %v2254, %v2238
    %v2591 = vpack.c.bf16 %v2255, %v2239
    %v2592 = vpack.c.bf16 %v2256, %v2240
    %v2593 = vpack.c.bf16 %v2257, %v2241
    %v2594 = vpack.c.bf16 %v2274, %v2258
    %v2595 = vpack.c.bf16 %v2275, %v2259
    %v2596 = vpack.c.bf16 %v2276, %v2260
    %v2597 = vpack.c.bf16 %v2277, %v2261
    %v2598 = vpack.c.bf16 %v2278, %v2262
    %v2599 = vpack.c.bf16 %v2279, %v2263
    %v2600 = vpack.c.bf16 %v2280, %v2264
    %v2601 = vpack.c.bf16 %v2281, %v2265
    %v2602 = vpack.c.bf16 %v2282, %v2266
    %v2603 = vpack.c.bf16 %v2283, %v2267
    %v2604 = vpack.c.bf16 %v2284, %v2268
    %v2605 = vpack.c.bf16 %v2285, %v2269
    %v2606 = vpack.c.bf16 %v2286, %v2270
    %v2607 = vpack.c.bf16 %v2287, %v2271
    %v2608 = vpack.c.bf16 %v2288, %v2272
    %v2609 = vpack.c.bf16 %v2289, %v2273
    %v2610 = vpack.c.bf16 %v2306, %v2290
    %v2611 = vpack.c.bf16 %v2307, %v2291
    %v2612 = vpack.c.bf16 %v2308, %v2292
    %v2613 = vpack.c.bf16 %v2309, %v2293
    %v2614 = vpack.c.bf16 %v2310, %v2294
    %v2615 = vpack.c.bf16 %v2311, %v2295
    %v2616 = vpack.c.bf16 %v2312, %v2296
    %v2617 = vpack.c.bf16 %v2313, %v2297
    %v2618 = vpack.c.bf16 %v2314, %v2298
    %v2619 = vpack.c.bf16 %v2315, %v2299
    %v2620 = vpack.c.bf16 %v2316, %v2300
    %v2621 = vpack.c.bf16 %v2317, %v2301
    %v2622 = vpack.c.bf16 %v2318, %v2302
    %v2623 = vpack.c.bf16 %v2319, %v2303
    %v2624 = vpack.c.bf16 %v2320, %v2304
    %v2625 = vpack.c.bf16 %v2321, %v2305
    %v2626 = vpack.c.bf16 %v2338, %v2322
    %v2627 = vpack.c.bf16 %v2339, %v2323
    %v2628 = vpack.c.bf16 %v2340, %v2324
    %v2629 = vpack.c.bf16 %v2341, %v2325
    %v2630 = vpack.c.bf16 %v2342, %v2326
    %v2631 = vpack.c.bf16 %v2343, %v2327
    %v2632 = vpack.c.bf16 %v2344, %v2328
    %v2633 = vpack.c.bf16 %v2345, %v2329
    %v2634 = vpack.c.bf16 %v2346, %v2330
    %v2635 = vpack.c.bf16 %v2347, %v2331
    %v2636 = vpack.c.bf16 %v2348, %v2332
    %v2637 = vpack.c.bf16 %v2349, %v2333
    %v2638 = vpack.c.bf16 %v2350, %v2334
    %v2639 = vpack.c.bf16 %v2351, %v2335
    %v2640 = vpack.c.bf16 %v2352, %v2336
    %v2641 = vpack.c.bf16 %v2353, %v2337
    %v2642 = vpack.c.bf16 %v2370, %v2354
    %v2643 = vpack.c.bf16 %v2371, %v2355
    %v2644 = vpack.c.bf16 %v2372, %v2356
    %v2645 = vpack.c.bf16 %v2373, %v2357
    %v2646 = vpack.c.bf16 %v2374, %v2358
    %v2647 = vpack.c.bf16 %v2375, %v2359
    %v2648 = vpack.c.bf16 %v2376, %v2360
    %v2649 = vpack.c.bf16 %v2377, %v2361
    %v2650 = vpack.c.bf16 %v2378, %v2362
    %v2651 = vpack.c.bf16 %v2379, %v2363
    %v2652 = vpack.c.bf16 %v2380, %v2364
    %v2653 = vpack.c.bf16 %v2381, %v2365
    %v2654 = vpack.c.bf16 %v2382, %v2366
    %v2655 = vpack.c.bf16 %v2383, %v2367
    %v2656 = vpack.c.bf16 %v2384, %v2368
    %v2657 = vpack.c.bf16 %v2385, %v2369
    %v2658 = vpack.c.bf16 %v2402, %v2386
    %v2659 = vpack.c.bf16 %v2403, %v2387
    %v2660 = vpack.c.bf16 %v2404, %v2388
    %v2661 = vpack.c.bf16 %v2405, %v2389
    %v2662 = vpack.c.bf16 %v2406, %v2390
    %v2663 = vpack.c.bf16 %v2407, %v2391
    %v2664 = vpack.c.bf16 %v2408, %v2392
    %v2665 = vpack.c.bf16 %v2409, %v2393
    %v2666 = vpack.c.bf16 %v2410, %v2394
    %v2667 = vpack.c.bf16 %v2411, %v2395
    %v2668 = vpack.c.bf16 %v2412, %v2396
    %v2669 = vpack.c.bf16 %v2413, %v2397
    %v2670 = vpack.c.bf16 %v2414, %v2398
    %v2671 = vpack.c.bf16 %v2415, %v2399
    %v2672 = vpack.c.bf16 %v2416, %v2400
    %v2673 = vpack.c.bf16 %v2417, %v2401
    %v2674 = vld [vmem:[#allocation5] sm:$0xf]
    %v2675 = vld [vmem:[#allocation5 + $0x4] sm:$0xf]
    %v2676 = vld [vmem:[#allocation5 + $0x8] sm:$0xf]
    %v2677 = vld [vmem:[#allocation5 + $0xc] sm:$0xf]
    %v2678 = vld [vmem:[#allocation5 + $0x10] sm:$0xf]
    %v2679 = vld [vmem:[#allocation5 + $0x14] sm:$0xf]
    %v2680 = vld [vmem:[#allocation5 + $0x18] sm:$0xf]
    %v2681 = vld [vmem:[#allocation5 + $0x1c] sm:$0xf]
    %v2682 = vld [vmem:[#allocation5 + $0x20] sm:$0xf]
    %v2683 = vld [vmem:[#allocation5 + $0x24] sm:$0xf]
    %v2684 = vld [vmem:[#allocation5 + $0x28] sm:$0xf]
    %v2685 = vld [vmem:[#allocation5 + $0x2c] sm:$0xf]
    %v2686 = vld [vmem:[#allocation5 + $0x30] sm:$0xf]
    %v2687 = vld [vmem:[#allocation5 + $0x34] sm:$0xf]
    %v2688 = vld [vmem:[#allocation5 + $0x38] sm:$0xf]
    %v2689 = vld [vmem:[#allocation5 + $0x3c] sm:$0xf]
    %v2690 = vld [vmem:[#allocation5 + $0x40] sm:$0xf]
    %v2691 = vld [vmem:[#allocation5 + $0x44] sm:$0xf]
    %v2692 = vld [vmem:[#allocation5 + $0x48] sm:$0xf]
    %v2693 = vld [vmem:[#allocation5 + $0x4c] sm:$0xf]
    %v2694 = vld [vmem:[#allocation5 + $0x50] sm:$0xf]
    %v2695 = vld [vmem:[#allocation5 + $0x54] sm:$0xf]
    %v2696 = vld [vmem:[#allocation5 + $0x58] sm:$0xf]
    %v2697 = vld [vmem:[#allocation5 + $0x5c] sm:$0xf]
    %v2698 = vld [vmem:[#allocation5 + $0x60] sm:$0xf]
    %v2699 = vld [vmem:[#allocation5 + $0x64] sm:$0xf]
    %v2700 = vld [vmem:[#allocation5 + $0x68] sm:$0xf]
    %v2701 = vld [vmem:[#allocation5 + $0x6c] sm:$0xf]
    %v2702 = vld [vmem:[#allocation5 + $0x70] sm:$0xf]
    %v2703 = vld [vmem:[#allocation5 + $0x74] sm:$0xf]
    %v2704 = vld [vmem:[#allocation5 + $0x78] sm:$0xf]
    %v2705 = vld [vmem:[#allocation5 + $0x7c] sm:$0xf]
    %v2706 = vld [vmem:[#allocation5 + $0x80] sm:$0xf]
    %v2707 = vld [vmem:[#allocation5 + $0x84] sm:$0xf]
    %v2708 = vld [vmem:[#allocation5 + $0x88] sm:$0xf]
    %v2709 = vld [vmem:[#allocation5 + $0x8c] sm:$0xf]
    %v2710 = vld [vmem:[#allocation5 + $0x90] sm:$0xf]
    %v2711 = vld [vmem:[#allocation5 + $0x94] sm:$0xf]
    %v2712 = vld [vmem:[#allocation5 + $0x98] sm:$0xf]
    %v2713 = vld [vmem:[#allocation5 + $0x9c] sm:$0xf]
    %v2714 = vld [vmem:[#allocation5 + $0xa0] sm:$0xf]
    %v2715 = vld [vmem:[#allocation5 + $0xa4] sm:$0xf]
    %v2716 = vld [vmem:[#allocation5 + $0xa8] sm:$0xf]
    %v2717 = vld [vmem:[#allocation5 + $0xac] sm:$0xf]
    %v2718 = vld [vmem:[#allocation5 + $0xb0] sm:$0xf]
    %v2719 = vld [vmem:[#allocation5 + $0xb4] sm:$0xf]
    %v2720 = vld [vmem:[#allocation5 + $0xb8] sm:$0xf]
    %v2721 = vld [vmem:[#allocation5 + $0xbc] sm:$0xf]
    %v2722 = vld [vmem:[#allocation5 + $0xc0] sm:$0xf]
    %v2723 = vld [vmem:[#allocation5 + $0xc4] sm:$0xf]
    %v2724 = vld [vmem:[#allocation5 + $0xc8] sm:$0xf]
    %v2725 = vld [vmem:[#allocation5 + $0xcc] sm:$0xf]
    %v2726 = vld [vmem:[#allocation5 + $0xd0] sm:$0xf]
    %v2727 = vld [vmem:[#allocation5 + $0xd4] sm:$0xf]
    %v2728 = vld [vmem:[#allocation5 + $0xd8] sm:$0xf]
    %v2729 = vld [vmem:[#allocation5 + $0xdc] sm:$0xf]
    %v2730 = vld [vmem:[#allocation5 + $0xe0] sm:$0xf]
    %v2731 = vld [vmem:[#allocation5 + $0xe4] sm:$0xf]
    %v2732 = vld [vmem:[#allocation5 + $0xe8] sm:$0xf]
    %v2733 = vld [vmem:[#allocation5 + $0xec] sm:$0xf]
    %v2734 = vld [vmem:[#allocation5 + $0xf0] sm:$0xf]
    %v2735 = vld [vmem:[#allocation5 + $0xf4] sm:$0xf]
    %v2736 = vld [vmem:[#allocation5 + $0xf8] sm:$0xf]
    %v2737 = vld [vmem:[#allocation5 + $0xfc] sm:$0xf]
    %v2738 = vld [vmem:[#allocation5 + $0x100] sm:$0xf]
    %v2739 = vld [vmem:[#allocation5 + $0x104] sm:$0xf]
    %v2740 = vld [vmem:[#allocation5 + $0x108] sm:$0xf]
    %v2741 = vld [vmem:[#allocation5 + $0x10c] sm:$0xf]
    %v2742 = vld [vmem:[#allocation5 + $0x110] sm:$0xf]
    %v2743 = vld [vmem:[#allocation5 + $0x114] sm:$0xf]
    %v2744 = vld [vmem:[#allocation5 + $0x118] sm:$0xf]
    %v2745 = vld [vmem:[#allocation5 + $0x11c] sm:$0xf]
    %v2746 = vld [vmem:[#allocation5 + $0x120] sm:$0xf]
    %v2747 = vld [vmem:[#allocation5 + $0x124] sm:$0xf]
    %v2748 = vld [vmem:[#allocation5 + $0x128] sm:$0xf]
    %v2749 = vld [vmem:[#allocation5 + $0x12c] sm:$0xf]
    %v2750 = vld [vmem:[#allocation5 + $0x130] sm:$0xf]
    %v2751 = vld [vmem:[#allocation5 + $0x134] sm:$0xf]
    %v2752 = vld [vmem:[#allocation5 + $0x138] sm:$0xf]
    %v2753 = vld [vmem:[#allocation5 + $0x13c] sm:$0xf]
    %v2754 = vld [vmem:[#allocation5 + $0x140] sm:$0xf]
    %v2755 = vld [vmem:[#allocation5 + $0x144] sm:$0xf]
    %v2756 = vld [vmem:[#allocation5 + $0x148] sm:$0xf]
    %v2757 = vld [vmem:[#allocation5 + $0x14c] sm:$0xf]
    %v2758 = vld [vmem:[#allocation5 + $0x150] sm:$0xf]
    %v2759 = vld [vmem:[#allocation5 + $0x154] sm:$0xf]
    %v2760 = vld [vmem:[#allocation5 + $0x158] sm:$0xf]
    %v2761 = vld [vmem:[#allocation5 + $0x15c] sm:$0xf]
    %v2762 = vld [vmem:[#allocation5 + $0x160] sm:$0xf]
    %v2763 = vld [vmem:[#allocation5 + $0x164] sm:$0xf]
    %v2764 = vld [vmem:[#allocation5 + $0x168] sm:$0xf]
    %v2765 = vld [vmem:[#allocation5 + $0x16c] sm:$0xf]
    %v2766 = vld [vmem:[#allocation5 + $0x170] sm:$0xf]
    %v2767 = vld [vmem:[#allocation5 + $0x174] sm:$0xf]
    %v2768 = vld [vmem:[#allocation5 + $0x178] sm:$0xf]
    %v2769 = vld [vmem:[#allocation5 + $0x17c] sm:$0xf]
    %v2770 = vld [vmem:[#allocation5 + $0x180] sm:$0xf]
    %v2771 = vld [vmem:[#allocation5 + $0x184] sm:$0xf]
    %v2772 = vld [vmem:[#allocation5 + $0x188] sm:$0xf]
    %v2773 = vld [vmem:[#allocation5 + $0x18c] sm:$0xf]
    %v2774 = vld [vmem:[#allocation5 + $0x190] sm:$0xf]
    %v2775 = vld [vmem:[#allocation5 + $0x194] sm:$0xf]
    %v2776 = vld [vmem:[#allocation5 + $0x198] sm:$0xf]
    %v2777 = vld [vmem:[#allocation5 + $0x19c] sm:$0xf]
    %v2778 = vld [vmem:[#allocation5 + $0x1a0] sm:$0xf]
    %v2779 = vld [vmem:[#allocation5 + $0x1a4] sm:$0xf]
    %v2780 = vld [vmem:[#allocation5 + $0x1a8] sm:$0xf]
    %v2781 = vld [vmem:[#allocation5 + $0x1ac] sm:$0xf]
    %v2782 = vld [vmem:[#allocation5 + $0x1b0] sm:$0xf]
    %v2783 = vld [vmem:[#allocation5 + $0x1b4] sm:$0xf]
    %v2784 = vld [vmem:[#allocation5 + $0x1b8] sm:$0xf]
    %v2785 = vld [vmem:[#allocation5 + $0x1bc] sm:$0xf]
    %v2786 = vld [vmem:[#allocation5 + $0x1c0] sm:$0xf]
    %v2787 = vld [vmem:[#allocation5 + $0x1c4] sm:$0xf]
    %v2788 = vld [vmem:[#allocation5 + $0x1c8] sm:$0xf]
    %v2789 = vld [vmem:[#allocation5 + $0x1cc] sm:$0xf]
    %v2790 = vld [vmem:[#allocation5 + $0x1d0] sm:$0xf]
    %v2791 = vld [vmem:[#allocation5 + $0x1d4] sm:$0xf]
    %v2792 = vld [vmem:[#allocation5 + $0x1d8] sm:$0xf]
    %v2793 = vld [vmem:[#allocation5 + $0x1dc] sm:$0xf]
    %v2794 = vld [vmem:[#allocation5 + $0x1e0] sm:$0xf]
    %v2795 = vld [vmem:[#allocation5 + $0x1e4] sm:$0xf]
    %v2796 = vld [vmem:[#allocation5 + $0x1e8] sm:$0xf]
    %v2797 = vld [vmem:[#allocation5 + $0x1ec] sm:$0xf]
    %v2798 = vld [vmem:[#allocation5 + $0x1f0] sm:$0xf]
    %v2799 = vld [vmem:[#allocation5 + $0x1f4] sm:$0xf]
    %v2800 = vld [vmem:[#allocation5 + $0x1f8] sm:$0xf]
    %v2801 = vld [vmem:[#allocation5 + $0x1fc] sm:$0xf]
    %v2802 = vld [vmem:[#allocation5 + $0x200] sm:$0xf]
    %v2803 = vld [vmem:[#allocation5 + $0x204] sm:$0xf]
    %v2804 = vld [vmem:[#allocation5 + $0x208] sm:$0xf]
    %v2805 = vld [vmem:[#allocation5 + $0x20c] sm:$0xf]
    %v2806 = vld [vmem:[#allocation5 + $0x210] sm:$0xf]
    %v2807 = vld [vmem:[#allocation5 + $0x214] sm:$0xf]
    %v2808 = vld [vmem:[#allocation5 + $0x218] sm:$0xf]
    %v2809 = vld [vmem:[#allocation5 + $0x21c] sm:$0xf]
    %v2810 = vld [vmem:[#allocation5 + $0x220] sm:$0xf]
    %v2811 = vld [vmem:[#allocation5 + $0x224] sm:$0xf]
    %v2812 = vld [vmem:[#allocation5 + $0x228] sm:$0xf]
    %v2813 = vld [vmem:[#allocation5 + $0x22c] sm:$0xf]
    %v2814 = vld [vmem:[#allocation5 + $0x230] sm:$0xf]
    %v2815 = vld [vmem:[#allocation5 + $0x234] sm:$0xf]
    %v2816 = vld [vmem:[#allocation5 + $0x238] sm:$0xf]
    %v2817 = vld [vmem:[#allocation5 + $0x23c] sm:$0xf]
    %v2818 = vld [vmem:[#allocation5 + $0x240] sm:$0xf]
    %v2819 = vld [vmem:[#allocation5 + $0x244] sm:$0xf]
    %v2820 = vld [vmem:[#allocation5 + $0x248] sm:$0xf]
    %v2821 = vld [vmem:[#allocation5 + $0x24c] sm:$0xf]
    %v2822 = vld [vmem:[#allocation5 + $0x250] sm:$0xf]
    %v2823 = vld [vmem:[#allocation5 + $0x254] sm:$0xf]
    %v2824 = vld [vmem:[#allocation5 + $0x258] sm:$0xf]
    %v2825 = vld [vmem:[#allocation5 + $0x25c] sm:$0xf]
    %v2826 = vld [vmem:[#allocation5 + $0x260] sm:$0xf]
    %v2827 = vld [vmem:[#allocation5 + $0x264] sm:$0xf]
    %v2828 = vld [vmem:[#allocation5 + $0x268] sm:$0xf]
    %v2829 = vld [vmem:[#allocation5 + $0x26c] sm:$0xf]
    %v2830 = vld [vmem:[#allocation5 + $0x270] sm:$0xf]
    %v2831 = vld [vmem:[#allocation5 + $0x274] sm:$0xf]
    %v2832 = vld [vmem:[#allocation5 + $0x278] sm:$0xf]
    %v2833 = vld [vmem:[#allocation5 + $0x27c] sm:$0xf]
    %v2834 = vld [vmem:[#allocation5 + $0x280] sm:$0xf]
    %v2835 = vld [vmem:[#allocation5 + $0x284] sm:$0xf]
    %v2836 = vld [vmem:[#allocation5 + $0x288] sm:$0xf]
    %v2837 = vld [vmem:[#allocation5 + $0x28c] sm:$0xf]
    %v2838 = vld [vmem:[#allocation5 + $0x290] sm:$0xf]
    %v2839 = vld [vmem:[#allocation5 + $0x294] sm:$0xf]
    %v2840 = vld [vmem:[#allocation5 + $0x298] sm:$0xf]
    %v2841 = vld [vmem:[#allocation5 + $0x29c] sm:$0xf]
    %v2842 = vld [vmem:[#allocation5 + $0x2a0] sm:$0xf]
    %v2843 = vld [vmem:[#allocation5 + $0x2a4] sm:$0xf]
    %v2844 = vld [vmem:[#allocation5 + $0x2a8] sm:$0xf]
    %v2845 = vld [vmem:[#allocation5 + $0x2ac] sm:$0xf]
    %v2846 = vld [vmem:[#allocation5 + $0x2b0] sm:$0xf]
    %v2847 = vld [vmem:[#allocation5 + $0x2b4] sm:$0xf]
    %v2848 = vld [vmem:[#allocation5 + $0x2b8] sm:$0xf]
    %v2849 = vld [vmem:[#allocation5 + $0x2bc] sm:$0xf]
    %v2850 = vld [vmem:[#allocation5 + $0x2c0] sm:$0xf]
    %v2851 = vld [vmem:[#allocation5 + $0x2c4] sm:$0xf]
    %v2852 = vld [vmem:[#allocation5 + $0x2c8] sm:$0xf]
    %v2853 = vld [vmem:[#allocation5 + $0x2cc] sm:$0xf]
    %v2854 = vld [vmem:[#allocation5 + $0x2d0] sm:$0xf]
    %v2855 = vld [vmem:[#allocation5 + $0x2d4] sm:$0xf]
    %v2856 = vld [vmem:[#allocation5 + $0x2d8] sm:$0xf]
    %v2857 = vld [vmem:[#allocation5 + $0x2dc] sm:$0xf]
    %v2858 = vld [vmem:[#allocation5 + $0x2e0] sm:$0xf]
    %v2859 = vld [vmem:[#allocation5 + $0x2e4] sm:$0xf]
    %v2860 = vld [vmem:[#allocation5 + $0x2e8] sm:$0xf]
    %v2861 = vld [vmem:[#allocation5 + $0x2ec] sm:$0xf]
    %v2862 = vld [vmem:[#allocation5 + $0x2f0] sm:$0xf]
    %v2863 = vld [vmem:[#allocation5 + $0x2f4] sm:$0xf]
    %v2864 = vld [vmem:[#allocation5 + $0x2f8] sm:$0xf]
    %v2865 = vld [vmem:[#allocation5 + $0x2fc] sm:$0xf]
    %v2866 = vld [vmem:[#allocation5 + $0x300] sm:$0xf]
    %v2867 = vld [vmem:[#allocation5 + $0x304] sm:$0xf]
    %v2868 = vld [vmem:[#allocation5 + $0x308] sm:$0xf]
    %v2869 = vld [vmem:[#allocation5 + $0x30c] sm:$0xf]
    %v2870 = vld [vmem:[#allocation5 + $0x310] sm:$0xf]
    %v2871 = vld [vmem:[#allocation5 + $0x314] sm:$0xf]
    %v2872 = vld [vmem:[#allocation5 + $0x318] sm:$0xf]
    %v2873 = vld [vmem:[#allocation5 + $0x31c] sm:$0xf]
    %v2874 = vld [vmem:[#allocation5 + $0x320] sm:$0xf]
    %v2875 = vld [vmem:[#allocation5 + $0x324] sm:$0xf]
    %v2876 = vld [vmem:[#allocation5 + $0x328] sm:$0xf]
    %v2877 = vld [vmem:[#allocation5 + $0x32c] sm:$0xf]
    %v2878 = vld [vmem:[#allocation5 + $0x330] sm:$0xf]
    %v2879 = vld [vmem:[#allocation5 + $0x334] sm:$0xf]
    %v2880 = vld [vmem:[#allocation5 + $0x338] sm:$0xf]
    %v2881 = vld [vmem:[#allocation5 + $0x33c] sm:$0xf]
    %v2882 = vld [vmem:[#allocation5 + $0x340] sm:$0xf]
    %v2883 = vld [vmem:[#allocation5 + $0x344] sm:$0xf]
    %v2884 = vld [vmem:[#allocation5 + $0x348] sm:$0xf]
    %v2885 = vld [vmem:[#allocation5 + $0x34c] sm:$0xf]
    %v2886 = vld [vmem:[#allocation5 + $0x350] sm:$0xf]
    %v2887 = vld [vmem:[#allocation5 + $0x354] sm:$0xf]
    %v2888 = vld [vmem:[#allocation5 + $0x358] sm:$0xf]
    %v2889 = vld [vmem:[#allocation5 + $0x35c] sm:$0xf]
    %v2890 = vld [vmem:[#allocation5 + $0x360] sm:$0xf]
    %v2891 = vld [vmem:[#allocation5 + $0x364] sm:$0xf]
    %v2892 = vld [vmem:[#allocation5 + $0x368] sm:$0xf]
    %v2893 = vld [vmem:[#allocation5 + $0x36c] sm:$0xf]
    %v2894 = vld [vmem:[#allocation5 + $0x370] sm:$0xf]
    %v2895 = vld [vmem:[#allocation5 + $0x374] sm:$0xf]
    %v2896 = vld [vmem:[#allocation5 + $0x378] sm:$0xf]
    %v2897 = vld [vmem:[#allocation5 + $0x37c] sm:$0xf]
    %v2898 = vld [vmem:[#allocation5 + $0x380] sm:$0xf]
    %v2899 = vld [vmem:[#allocation5 + $0x384] sm:$0xf]
    %v2900 = vld [vmem:[#allocation5 + $0x388] sm:$0xf]
    %v2901 = vld [vmem:[#allocation5 + $0x38c] sm:$0xf]
    %v2902 = vld [vmem:[#allocation5 + $0x390] sm:$0xf]
    %v2903 = vld [vmem:[#allocation5 + $0x394] sm:$0xf]
    %v2904 = vld [vmem:[#allocation5 + $0x398] sm:$0xf]
    %v2905 = vld [vmem:[#allocation5 + $0x39c] sm:$0xf]
    %v2906 = vld [vmem:[#allocation5 + $0x3a0] sm:$0xf]
    %v2907 = vld [vmem:[#allocation5 + $0x3a4] sm:$0xf]
    %v2908 = vld [vmem:[#allocation5 + $0x3a8] sm:$0xf]
    %v2909 = vld [vmem:[#allocation5 + $0x3ac] sm:$0xf]
    %v2910 = vld [vmem:[#allocation5 + $0x3b0] sm:$0xf]
    %v2911 = vld [vmem:[#allocation5 + $0x3b4] sm:$0xf]
    %v2912 = vld [vmem:[#allocation5 + $0x3b8] sm:$0xf]
    %v2913 = vld [vmem:[#allocation5 + $0x3bc] sm:$0xf]
    %v2914 = vld [vmem:[#allocation5 + $0x3c0] sm:$0xf]
    %v2915 = vld [vmem:[#allocation5 + $0x3c4] sm:$0xf]
    %v2916 = vld [vmem:[#allocation5 + $0x3c8] sm:$0xf]
    %v2917 = vld [vmem:[#allocation5 + $0x3cc] sm:$0xf]
    %v2918 = vld [vmem:[#allocation5 + $0x3d0] sm:$0xf]
    %v2919 = vld [vmem:[#allocation5 + $0x3d4] sm:$0xf]
    %v2920 = vld [vmem:[#allocation5 + $0x3d8] sm:$0xf]
    %v2921 = vld [vmem:[#allocation5 + $0x3dc] sm:$0xf]
    %v2922 = vld [vmem:[#allocation5 + $0x3e0] sm:$0xf]
    %v2923 = vld [vmem:[#allocation5 + $0x3e4] sm:$0xf]
    %v2924 = vld [vmem:[#allocation5 + $0x3e8] sm:$0xf]
    %v2925 = vld [vmem:[#allocation5 + $0x3ec] sm:$0xf]
    %v2926 = vld [vmem:[#allocation5 + $0x3f0] sm:$0xf]
    %v2927 = vld [vmem:[#allocation5 + $0x3f4] sm:$0xf]
    %v2928 = vld [vmem:[#allocation5 + $0x3f8] sm:$0xf]
    %v2929 = vld [vmem:[#allocation5 + $0x3fc] sm:$0xf]
    %v2930 = vld [vmem:[%s4] sm:$0x1]
    %v2932 = vperm.slane %v2930, 0
    %v3190 = vunpack.c.l.b16 %v2674
    %v3191 = vunpack.c.l.b16 %v2675
    %v3192 = vunpack.c.l.b16 %v2676
    %v3193 = vunpack.c.l.b16 %v2677
    %v3194 = vunpack.c.l.b16 %v2678
    %v3195 = vunpack.c.l.b16 %v2679
    %v3196 = vunpack.c.l.b16 %v2680
    %v3197 = vunpack.c.l.b16 %v2681
    %v3198 = vunpack.c.l.b16 %v2682
    %v3199 = vunpack.c.l.b16 %v2683
    %v3200 = vunpack.c.l.b16 %v2684
    %v3201 = vunpack.c.l.b16 %v2685
    %v3202 = vunpack.c.l.b16 %v2686
    %v3203 = vunpack.c.l.b16 %v2687
    %v3204 = vunpack.c.l.b16 %v2688
    %v3205 = vunpack.c.l.b16 %v2689
    %v3206 = vunpack.c.l.b16 %v2690
    %v3207 = vunpack.c.l.b16 %v2691
    %v3208 = vunpack.c.l.b16 %v2692
    %v3209 = vunpack.c.l.b16 %v2693
    %v3210 = vunpack.c.l.b16 %v2694
    %v3211 = vunpack.c.l.b16 %v2695
    %v3212 = vunpack.c.l.b16 %v2696
    %v3213 = vunpack.c.l.b16 %v2697
    %v3214 = vunpack.c.l.b16 %v2698
    %v3215 = vunpack.c.l.b16 %v2699
    %v3216 = vunpack.c.l.b16 %v2700
    %v3217 = vunpack.c.l.b16 %v2701
    %v3218 = vunpack.c.l.b16 %v2702
    %v3219 = vunpack.c.l.b16 %v2703
    %v3220 = vunpack.c.l.b16 %v2704
    %v3221 = vunpack.c.l.b16 %v2705
    %v3222 = vunpack.c.l.b16 %v2706
    %v3223 = vunpack.c.l.b16 %v2707
    %v3224 = vunpack.c.l.b16 %v2708
    %v3225 = vunpack.c.l.b16 %v2709
    %v3226 = vunpack.c.l.b16 %v2710
    %v3227 = vunpack.c.l.b16 %v2711
    %v3228 = vunpack.c.l.b16 %v2712
    %v3229 = vunpack.c.l.b16 %v2713
    %v3230 = vunpack.c.l.b16 %v2714
    %v3231 = vunpack.c.l.b16 %v2715
    %v3232 = vunpack.c.l.b16 %v2716
    %v3233 = vunpack.c.l.b16 %v2717
    %v3234 = vunpack.c.l.b16 %v2718
    %v3235 = vunpack.c.l.b16 %v2719
    %v3236 = vunpack.c.l.b16 %v2720
    %v3237 = vunpack.c.l.b16 %v2721
    %v3238 = vunpack.c.l.b16 %v2722
    %v3239 = vunpack.c.l.b16 %v2723
    %v3240 = vunpack.c.l.b16 %v2724
    %v3241 = vunpack.c.l.b16 %v2725
    %v3242 = vunpack.c.l.b16 %v2726
    %v3243 = vunpack.c.l.b16 %v2727
    %v3244 = vunpack.c.l.b16 %v2728
    %v3245 = vunpack.c.l.b16 %v2729
    %v3246 = vunpack.c.l.b16 %v2730
    %v3247 = vunpack.c.l.b16 %v2731
    %v3248 = vunpack.c.l.b16 %v2732
    %v3249 = vunpack.c.l.b16 %v2733
    %v3250 = vunpack.c.l.b16 %v2734
    %v3251 = vunpack.c.l.b16 %v2735
    %v3252 = vunpack.c.l.b16 %v2736
    %v3253 = vunpack.c.l.b16 %v2737
    %v3254 = vunpack.c.l.b16 %v2738
    %v3255 = vunpack.c.l.b16 %v2739
    %v3256 = vunpack.c.l.b16 %v2740
    %v3257 = vunpack.c.l.b16 %v2741
    %v3258 = vunpack.c.l.b16 %v2742
    %v3259 = vunpack.c.l.b16 %v2743
    %v3260 = vunpack.c.l.b16 %v2744
    %v3261 = vunpack.c.l.b16 %v2745
    %v3262 = vunpack.c.l.b16 %v2746
    %v3263 = vunpack.c.l.b16 %v2747
    %v3264 = vunpack.c.l.b16 %v2748
    %v3265 = vunpack.c.l.b16 %v2749
    %v3266 = vunpack.c.l.b16 %v2750
    %v3267 = vunpack.c.l.b16 %v2751
    %v3268 = vunpack.c.l.b16 %v2752
    %v3269 = vunpack.c.l.b16 %v2753
    %v3270 = vunpack.c.l.b16 %v2754
    %v3271 = vunpack.c.l.b16 %v2755
    %v3272 = vunpack.c.l.b16 %v2756
    %v3273 = vunpack.c.l.b16 %v2757
    %v3274 = vunpack.c.l.b16 %v2758
    %v3275 = vunpack.c.l.b16 %v2759
    %v3276 = vunpack.c.l.b16 %v2760
    %v3277 = vunpack.c.l.b16 %v2761
    %v3278 = vunpack.c.l.b16 %v2762
    %v3279 = vunpack.c.l.b16 %v2763
    %v3280 = vunpack.c.l.b16 %v2764
    %v3281 = vunpack.c.l.b16 %v2765
    %v3282 = vunpack.c.l.b16 %v2766
    %v3283 = vunpack.c.l.b16 %v2767
    %v3284 = vunpack.c.l.b16 %v2768
    %v3285 = vunpack.c.l.b16 %v2769
    %v3286 = vunpack.c.l.b16 %v2770
    %v3287 = vunpack.c.l.b16 %v2771
    %v3288 = vunpack.c.l.b16 %v2772
    %v3289 = vunpack.c.l.b16 %v2773
    %v3290 = vunpack.c.l.b16 %v2774
    %v3291 = vunpack.c.l.b16 %v2775
    %v3292 = vunpack.c.l.b16 %v2776
    %v3293 = vunpack.c.l.b16 %v2777
    %v3294 = vunpack.c.l.b16 %v2778
    %v3295 = vunpack.c.l.b16 %v2779
    %v3296 = vunpack.c.l.b16 %v2780
    %v3297 = vunpack.c.l.b16 %v2781
    %v3298 = vunpack.c.l.b16 %v2782
    %v3299 = vunpack.c.l.b16 %v2783
    %v3300 = vunpack.c.l.b16 %v2784
    %v3301 = vunpack.c.l.b16 %v2785
    %v3302 = vunpack.c.l.b16 %v2786
    %v3303 = vunpack.c.l.b16 %v2787
    %v3304 = vunpack.c.l.b16 %v2788
    %v3305 = vunpack.c.l.b16 %v2789
    %v3306 = vunpack.c.l.b16 %v2790
    %v3307 = vunpack.c.l.b16 %v2791
    %v3308 = vunpack.c.l.b16 %v2792
    %v3309 = vunpack.c.l.b16 %v2793
    %v3310 = vunpack.c.l.b16 %v2794
    %v3311 = vunpack.c.l.b16 %v2795
    %v3312 = vunpack.c.l.b16 %v2796
    %v3313 = vunpack.c.l.b16 %v2797
    %v3314 = vunpack.c.l.b16 %v2798
    %v3315 = vunpack.c.l.b16 %v2799
    %v3316 = vunpack.c.l.b16 %v2800
    %v3317 = vunpack.c.l.b16 %v2801
    %v3318 = vunpack.c.l.b16 %v2802
    %v3319 = vunpack.c.l.b16 %v2803
    %v3320 = vunpack.c.l.b16 %v2804
    %v3321 = vunpack.c.l.b16 %v2805
    %v3322 = vunpack.c.l.b16 %v2806
    %v3323 = vunpack.c.l.b16 %v2807
    %v3324 = vunpack.c.l.b16 %v2808
    %v3325 = vunpack.c.l.b16 %v2809
    %v3326 = vunpack.c.l.b16 %v2810
    %v3327 = vunpack.c.l.b16 %v2811
    %v3328 = vunpack.c.l.b16 %v2812
    %v3329 = vunpack.c.l.b16 %v2813
    %v3330 = vunpack.c.l.b16 %v2814
    %v3331 = vunpack.c.l.b16 %v2815
    %v3332 = vunpack.c.l.b16 %v2816
    %v3333 = vunpack.c.l.b16 %v2817
    %v3334 = vunpack.c.l.b16 %v2818
    %v3335 = vunpack.c.l.b16 %v2819
    %v3336 = vunpack.c.l.b16 %v2820
    %v3337 = vunpack.c.l.b16 %v2821
    %v3338 = vunpack.c.l.b16 %v2822
    %v3339 = vunpack.c.l.b16 %v2823
    %v3340 = vunpack.c.l.b16 %v2824
    %v3341 = vunpack.c.l.b16 %v2825
    %v3342 = vunpack.c.l.b16 %v2826
    %v3343 = vunpack.c.l.b16 %v2827
    %v3344 = vunpack.c.l.b16 %v2828
    %v3345 = vunpack.c.l.b16 %v2829
    %v3346 = vunpack.c.l.b16 %v2830
    %v3347 = vunpack.c.l.b16 %v2831
    %v3348 = vunpack.c.l.b16 %v2832
    %v3349 = vunpack.c.l.b16 %v2833
    %v3350 = vunpack.c.l.b16 %v2834
    %v3351 = vunpack.c.l.b16 %v2835
    %v3352 = vunpack.c.l.b16 %v2836
    %v3353 = vunpack.c.l.b16 %v2837
    %v3354 = vunpack.c.l.b16 %v2838
    %v3355 = vunpack.c.l.b16 %v2839
    %v3356 = vunpack.c.l.b16 %v2840
    %v3357 = vunpack.c.l.b16 %v2841
    %v3358 = vunpack.c.l.b16 %v2842
    %v3359 = vunpack.c.l.b16 %v2843
    %v3360 = vunpack.c.l.b16 %v2844
    %v3361 = vunpack.c.l.b16 %v2845
    %v3362 = vunpack.c.l.b16 %v2846
    %v3363 = vunpack.c.l.b16 %v2847
    %v3364 = vunpack.c.l.b16 %v2848
    %v3365 = vunpack.c.l.b16 %v2849
    %v3366 = vunpack.c.l.b16 %v2850
    %v3367 = vunpack.c.l.b16 %v2851
    %v3368 = vunpack.c.l.b16 %v2852
    %v3369 = vunpack.c.l.b16 %v2853
    %v3370 = vunpack.c.l.b16 %v2854
    %v3371 = vunpack.c.l.b16 %v2855
    %v3372 = vunpack.c.l.b16 %v2856
    %v3373 = vunpack.c.l.b16 %v2857
    %v3374 = vunpack.c.l.b16 %v2858
    %v3375 = vunpack.c.l.b16 %v2859
    %v3376 = vunpack.c.l.b16 %v2860
    %v3377 = vunpack.c.l.b16 %v2861
    %v3378 = vunpack.c.l.b16 %v2862
    %v3379 = vunpack.c.l.b16 %v2863
    %v3380 = vunpack.c.l.b16 %v2864
    %v3381 = vunpack.c.l.b16 %v2865
    %v3382 = vunpack.c.l.b16 %v2866
    %v3383 = vunpack.c.l.b16 %v2867
    %v3384 = vunpack.c.l.b16 %v2868
    %v3385 = vunpack.c.l.b16 %v2869
    %v3386 = vunpack.c.l.b16 %v2870
    %v3387 = vunpack.c.l.b16 %v2871
    %v3388 = vunpack.c.l.b16 %v2872
    %v3389 = vunpack.c.l.b16 %v2873
    %v3390 = vunpack.c.l.b16 %v2874
    %v3391 = vunpack.c.l.b16 %v2875
    %v3392 = vunpack.c.l.b16 %v2876
    %v3393 = vunpack.c.l.b16 %v2877
    %v3394 = vunpack.c.l.b16 %v2878
    %v3395 = vunpack.c.l.b16 %v2879
    %v3396 = vunpack.c.l.b16 %v2880
    %v3397 = vunpack.c.l.b16 %v2881
    %v3398 = vunpack.c.l.b16 %v2882
    %v3399 = vunpack.c.l.b16 %v2883
    %v3400 = vunpack.c.l.b16 %v2884
    %v3401 = vunpack.c.l.b16 %v2885
    %v3402 = vunpack.c.l.b16 %v2886
    %v3403 = vunpack.c.l.b16 %v2887
    %v3404 = vunpack.c.l.b16 %v2888
    %v3405 = vunpack.c.l.b16 %v2889
    %v3406 = vunpack.c.l.b16 %v2890
    %v3407 = vunpack.c.l.b16 %v2891
    %v3408 = vunpack.c.l.b16 %v2892
    %v3409 = vunpack.c.l.b16 %v2893
    %v3410 = vunpack.c.l.b16 %v2894
    %v3411 = vunpack.c.l.b16 %v2895
    %v3412 = vunpack.c.l.b16 %v2896
    %v3413 = vunpack.c.l.b16 %v2897
    %v3414 = vunpack.c.l.b16 %v2898
    %v3415 = vunpack.c.l.b16 %v2899
    %v3416 = vunpack.c.l.b16 %v2900
    %v3417 = vunpack.c.l.b16 %v2901
    %v3418 = vunpack.c.l.b16 %v2902
    %v3419 = vunpack.c.l.b16 %v2903
    %v3420 = vunpack.c.l.b16 %v2904
    %v3421 = vunpack.c.l.b16 %v2905
    %v3422 = vunpack.c.l.b16 %v2906
    %v3423 = vunpack.c.l.b16 %v2907
    %v3424 = vunpack.c.l.b16 %v2908
    %v3425 = vunpack.c.l.b16 %v2909
    %v3426 = vunpack.c.l.b16 %v2910
    %v3427 = vunpack.c.l.b16 %v2911
    %v3428 = vunpack.c.l.b16 %v2912
    %v3429 = vunpack.c.l.b16 %v2913
    %v3430 = vunpack.c.l.b16 %v2914
    %v3431 = vunpack.c.l.b16 %v2915
    %v3432 = vunpack.c.l.b16 %v2916
    %v3433 = vunpack.c.l.b16 %v2917
    %v3434 = vunpack.c.l.b16 %v2918
    %v3435 = vunpack.c.l.b16 %v2919
    %v3436 = vunpack.c.l.b16 %v2920
    %v3437 = vunpack.c.l.b16 %v2921
    %v3438 = vunpack.c.l.b16 %v2922
    %v3439 = vunpack.c.l.b16 %v2923
    %v3440 = vunpack.c.l.b16 %v2924
    %v3441 = vunpack.c.l.b16 %v2925
    %v3442 = vunpack.c.l.b16 %v2926
    %v3443 = vunpack.c.l.b16 %v2927
    %v3444 = vunpack.c.l.b16 %v2928
    %v3445 = vunpack.c.l.b16 %v2929
    %v3446 = vpack.c.b16 %v3191, %v3190
    %v3447 = vpack.c.b16 %v3193, %v3192
    %v3448 = vpack.c.b16 %v3195, %v3194
    %v3449 = vpack.c.b16 %v3197, %v3196
    %v3450 = vpack.c.b16 %v3199, %v3198
    %v3451 = vpack.c.b16 %v3201, %v3200
    %v3452 = vpack.c.b16 %v3203, %v3202
    %v3453 = vpack.c.b16 %v3205, %v3204
    %v3454 = vpack.c.b16 %v3207, %v3206
    %v3455 = vpack.c.b16 %v3209, %v3208
    %v3456 = vpack.c.b16 %v3211, %v3210
    %v3457 = vpack.c.b16 %v3213, %v3212
    %v3458 = vpack.c.b16 %v3215, %v3214
    %v3459 = vpack.c.b16 %v3217, %v3216
    %v3460 = vpack.c.b16 %v3219, %v3218
    %v3461 = vpack.c.b16 %v3221, %v3220
    %v3462 = vpack.c.b16 %v3223, %v3222
    %v3463 = vpack.c.b16 %v3225, %v3224
    %v3464 = vpack.c.b16 %v3227, %v3226
    %v3465 = vpack.c.b16 %v3229, %v3228
    %v3466 = vpack.c.b16 %v3231, %v3230
    %v3467 = vpack.c.b16 %v3233, %v3232
    %v3468 = vpack.c.b16 %v3235, %v3234
    %v3469 = vpack.c.b16 %v3237, %v3236
    %v3470 = vpack.c.b16 %v3239, %v3238
    %v3471 = vpack.c.b16 %v3241, %v3240
    %v3472 = vpack.c.b16 %v3243, %v3242
    %v3473 = vpack.c.b16 %v3245, %v3244
    %v3474 = vpack.c.b16 %v3247, %v3246
    %v3475 = vpack.c.b16 %v3249, %v3248
    %v3476 = vpack.c.b16 %v3251, %v3250
    %v3477 = vpack.c.b16 %v3253, %v3252
    %v3478 = vpack.c.b16 %v3255, %v3254
    %v3479 = vpack.c.b16 %v3257, %v3256
    %v3480 = vpack.c.b16 %v3259, %v3258
    %v3481 = vpack.c.b16 %v3261, %v3260
    %v3482 = vpack.c.b16 %v3263, %v3262
    %v3483 = vpack.c.b16 %v3265, %v3264
    %v3484 = vpack.c.b16 %v3267, %v3266
    %v3485 = vpack.c.b16 %v3269, %v3268
    %v3486 = vpack.c.b16 %v3271, %v3270
    %v3487 = vpack.c.b16 %v3273, %v3272
    %v3488 = vpack.c.b16 %v3275, %v3274
    %v3489 = vpack.c.b16 %v3277, %v3276
    %v3490 = vpack.c.b16 %v3279, %v3278
    %v3491 = vpack.c.b16 %v3281, %v3280
    %v3492 = vpack.c.b16 %v3283, %v3282
    %v3493 = vpack.c.b16 %v3285, %v3284
    %v3494 = vpack.c.b16 %v3287, %v3286
    %v3495 = vpack.c.b16 %v3289, %v3288
    %v3496 = vpack.c.b16 %v3291, %v3290
    %v3497 = vpack.c.b16 %v3293, %v3292
    %v3498 = vpack.c.b16 %v3295, %v3294
    %v3499 = vpack.c.b16 %v3297, %v3296
    %v3500 = vpack.c.b16 %v3299, %v3298
    %v3501 = vpack.c.b16 %v3301, %v3300
    %v3502 = vpack.c.b16 %v3303, %v3302
    %v3503 = vpack.c.b16 %v3305, %v3304
    %v3504 = vpack.c.b16 %v3307, %v3306
    %v3505 = vpack.c.b16 %v3309, %v3308
    %v3506 = vpack.c.b16 %v3311, %v3310
    %v3507 = vpack.c.b16 %v3313, %v3312
    %v3508 = vpack.c.b16 %v3315, %v3314
    %v3509 = vpack.c.b16 %v3317, %v3316
    %v3510 = vpack.c.b16 %v3319, %v3318
    %v3511 = vpack.c.b16 %v3321, %v3320
    %v3512 = vpack.c.b16 %v3323, %v3322
    %v3513 = vpack.c.b16 %v3325, %v3324
    %v3514 = vpack.c.b16 %v3327, %v3326
    %v3515 = vpack.c.b16 %v3329, %v3328
    %v3516 = vpack.c.b16 %v3331, %v3330
    %v3517 = vpack.c.b16 %v3333, %v3332
    %v3518 = vpack.c.b16 %v3335, %v3334
    %v3519 = vpack.c.b16 %v3337, %v3336
    %v3520 = vpack.c.b16 %v3339, %v3338
    %v3521 = vpack.c.b16 %v3341, %v3340
    %v3522 = vpack.c.b16 %v3343, %v3342
    %v3523 = vpack.c.b16 %v3345, %v3344
    %v3524 = vpack.c.b16 %v3347, %v3346
    %v3525 = vpack.c.b16 %v3349, %v3348
    %v3526 = vpack.c.b16 %v3351, %v3350
    %v3527 = vpack.c.b16 %v3353, %v3352
    %v3528 = vpack.c.b16 %v3355, %v3354
    %v3529 = vpack.c.b16 %v3357, %v3356
    %v3530 = vpack.c.b16 %v3359, %v3358
    %v3531 = vpack.c.b16 %v3361, %v3360
    %v3532 = vpack.c.b16 %v3363, %v3362
    %v3533 = vpack.c.b16 %v3365, %v3364
    %v3534 = vpack.c.b16 %v3367, %v3366
    %v3535 = vpack.c.b16 %v3369, %v3368
    %v3536 = vpack.c.b16 %v3371, %v3370
    %v3537 = vpack.c.b16 %v3373, %v3372
    %v3538 = vpack.c.b16 %v3375, %v3374
    %v3539 = vpack.c.b16 %v3377, %v3376
    %v3540 = vpack.c.b16 %v3379, %v3378
    %v3541 = vpack.c.b16 %v3381, %v3380
    %v3542 = vpack.c.b16 %v3383, %v3382
    %v3543 = vpack.c.b16 %v3385, %v3384
    %v3544 = vpack.c.b16 %v3387, %v3386
    %v3545 = vpack.c.b16 %v3389, %v3388
    %v3546 = vpack.c.b16 %v3391, %v3390
    %v3547 = vpack.c.b16 %v3393, %v3392
    %v3548 = vpack.c.b16 %v3395, %v3394
    %v3549 = vpack.c.b16 %v3397, %v3396
    %v3550 = vpack.c.b16 %v3399, %v3398
    %v3551 = vpack.c.b16 %v3401, %v3400
    %v3552 = vpack.c.b16 %v3403, %v3402
    %v3553 = vpack.c.b16 %v3405, %v3404
    %v3554 = vpack.c.b16 %v3407, %v3406
    %v3555 = vpack.c.b16 %v3409, %v3408
    %v3556 = vpack.c.b16 %v3411, %v3410
    %v3557 = vpack.c.b16 %v3413, %v3412
    %v3558 = vpack.c.b16 %v3415, %v3414
    %v3559 = vpack.c.b16 %v3417, %v3416
    %v3560 = vpack.c.b16 %v3419, %v3418
    %v3561 = vpack.c.b16 %v3421, %v3420
    %v3562 = vpack.c.b16 %v3423, %v3422
    %v3563 = vpack.c.b16 %v3425, %v3424
    %v3564 = vpack.c.b16 %v3427, %v3426
    %v3565 = vpack.c.b16 %v3429, %v3428
    %v3566 = vpack.c.b16 %v3431, %v3430
    %v3567 = vpack.c.b16 %v3433, %v3432
    %v3568 = vpack.c.b16 %v3435, %v3434
    %v3569 = vpack.c.b16 %v3437, %v3436
    %v3570 = vpack.c.b16 %v3439, %v3438
    %v3571 = vpack.c.b16 %v3441, %v3440
    %v3572 = vpack.c.b16 %v3443, %v3442
    %v3573 = vpack.c.b16 %v3445, %v3444
    %3702 = vmatpush.bf16.msra.mxu0 %v3453
    %3703 = vmatpush.bf16.msra.mxu0 %v3452
    %3704 = vmatpush.bf16.msra.mxu0 %v3451
    %3705 = vmatpush.bf16.msra.mxu0 %v3450
    %3706 = vmatpush.bf16.msra.mxu0 %v3449
    %3707 = vmatpush.bf16.msra.mxu0 %v3448
    %3708 = vmatpush.bf16.msra.mxu0 %v3447
    %3709 = vmatpush.bf16.msra.mxu0 %v3446
    %3710 = vmatmul.bf16.gmra.mxu0 %v2418
    %v3711 = vpop.f32.mrf.mxu0
    %v3712 = vadd.f32 %v2932, %v3711
    %v3713 = vpop.f32.mrf.mxu0
    %v3714 = vadd.f32 %v2932, %v3713
    %3715 = vmatmul.bf16.gmra.mxu0 %v2434
    %v3716 = vpop.f32.mrf.mxu0
    %v3717 = vadd.f32 %v2932, %v3716
    %v3718 = vpop.f32.mrf.mxu0
    %v3719 = vadd.f32 %v2932, %v3718
    %3720 = vmatmul.bf16.gmra.mxu0 %v2450
    %v3721 = vpop.f32.mrf.mxu0
    %v3722 = vadd.f32 %v2932, %v3721
    %v3723 = vpop.f32.mrf.mxu0
    %v3724 = vadd.f32 %v2932, %v3723
    %3725 = vmatmul.bf16.gmra.mxu0 %v2466
    %v3726 = vpop.f32.mrf.mxu0
    %v3727 = vadd.f32 %v2932, %v3726
    %v3728 = vpop.f32.mrf.mxu0
    %v3729 = vadd.f32 %v2932, %v3728
    %3730 = vmatmul.bf16.gmra.mxu0 %v2482
    %v3731 = vpop.f32.mrf.mxu0
    %v3732 = vadd.f32 %v2932, %v3731
    %v3733 = vpop.f32.mrf.mxu0
    %v3734 = vadd.f32 %v2932, %v3733
    %3735 = vmatmul.bf16.gmra.mxu0 %v2498
    %v3736 = vpop.f32.mrf.mxu0
    %v3737 = vadd.f32 %v2932, %v3736
    %v3738 = vpop.f32.mrf.mxu0
    %v3739 = vadd.f32 %v2932, %v3738
    %3740 = vmatmul.bf16.gmra.mxu0 %v2514
    %v3741 = vpop.f32.mrf.mxu0
    %v3742 = vadd.f32 %v2932, %v3741
    %v3743 = vpop.f32.mrf.mxu0
    %v3744 = vadd.f32 %v2932, %v3743
    %3745 = vmatmul.bf16.gmra.mxu0 %v2530
    %v3746 = vpop.f32.mrf.mxu0
    %v3747 = vadd.f32 %v2932, %v3746
    %v3748 = vpop.f32.mrf.mxu0
    %v3749 = vadd.f32 %v2932, %v3748
    %3750 = vmatmul.bf16.gmra.mxu0 %v2546
    %v3751 = vpop.f32.mrf.mxu0
    %v3752 = vadd.f32 %v2932, %v3751
    %v3753 = vpop.f32.mrf.mxu0
    %v3754 = vadd.f32 %v2932, %v3753
    %3755 = vmatmul.bf16.gmra.mxu0 %v2562
    %v3756 = vpop.f32.mrf.mxu0
    %v3757 = vadd.f32 %v2932, %v3756
    %v3758 = vpop.f32.mrf.mxu0
    %v3759 = vadd.f32 %v2932, %v3758
    %3760 = vmatmul.bf16.gmra.mxu0 %v2578
    %v3761 = vpop.f32.mrf.mxu0
    %v3762 = vadd.f32 %v2932, %v3761
    %v3763 = vpop.f32.mrf.mxu0
    %v3764 = vadd.f32 %v2932, %v3763
    %3765 = vmatmul.bf16.gmra.mxu0 %v2594
    %v3766 = vpop.f32.mrf.mxu0
    %v3767 = vadd.f32 %v2932, %v3766
    %v3768 = vpop.f32.mrf.mxu0
    %v3769 = vadd.f32 %v2932, %v3768
    %3770 = vmatmul.bf16.gmra.mxu0 %v2610
    %v3771 = vpop.f32.mrf.mxu0
    %v3772 = vadd.f32 %v2932, %v3771
    %v3773 = vpop.f32.mrf.mxu0
    %v3774 = vadd.f32 %v2932, %v3773
    %3775 = vmatmul.bf16.gmra.mxu0 %v2626
    %v3776 = vpop.f32.mrf.mxu0
    %v3777 = vadd.f32 %v2932, %v3776
    %v3778 = vpop.f32.mrf.mxu0
    %v3779 = vadd.f32 %v2932, %v3778
    %3780 = vmatmul.bf16.gmra.mxu0 %v2642
    %v3781 = vpop.f32.mrf.mxu0
    %v3782 = vadd.f32 %v2932, %v3781
    %v3783 = vpop.f32.mrf.mxu0
    %v3784 = vadd.f32 %v2932, %v3783
    %3785 = vmatmul.bf16.gmra.mxu0 %v2658
    %v3786 = vpop.f32.mrf.mxu0
    %v3787 = vadd.f32 %v2932, %v3786
    %v3788 = vpop.f32.mrf.mxu0
    %v3789 = vadd.f32 %v2932, %v3788
    %3790 = vdwg.mxu0
    %3791 = vmatpush.bf16.msra.mxu0 %v3461
    %3792 = vmatpush.bf16.msra.mxu0 %v3460
    %3793 = vmatpush.bf16.msra.mxu0 %v3459
    %3794 = vmatpush.bf16.msra.mxu0 %v3458
    %3795 = vmatpush.bf16.msra.mxu0 %v3457
    %3796 = vmatpush.bf16.msra.mxu0 %v3456
    %3797 = vmatpush.bf16.msra.mxu0 %v3455
    %3798 = vmatpush.bf16.msra.mxu0 %v3454
    %3799 = vmatmul.bf16.gmra.mxu0 %v2419
    %v3800 = vpop.f32.mrf.mxu0
    %v3801 = vadd.f32 %v3712, %v3800
    %v3802 = vpop.f32.mrf.mxu0
    %v3803 = vadd.f32 %v3714, %v3802
    %3804 = vmatmul.bf16.gmra.mxu0 %v2435
    %v3805 = vpop.f32.mrf.mxu0
    %v3806 = vadd.f32 %v3717, %v3805
    %v3807 = vpop.f32.mrf.mxu0
    %v3808 = vadd.f32 %v3719, %v3807
    %3809 = vmatmul.bf16.gmra.mxu0 %v2451
    %v3810 = vpop.f32.mrf.mxu0
    %v3811 = vadd.f32 %v3722, %v3810
    %v3812 = vpop.f32.mrf.mxu0
    %v3813 = vadd.f32 %v3724, %v3812
    %3814 = vmatmul.bf16.gmra.mxu0 %v2467
    %v3815 = vpop.f32.mrf.mxu0
    %v3816 = vadd.f32 %v3727, %v3815
    %v3817 = vpop.f32.mrf.mxu0
    %v3818 = vadd.f32 %v3729, %v3817
    %3819 = vmatmul.bf16.gmra.mxu0 %v2483
    %v3820 = vpop.f32.mrf.mxu0
    %v3821 = vadd.f32 %v3732, %v3820
    %v3822 = vpop.f32.mrf.mxu0
    %v3823 = vadd.f32 %v3734, %v3822
    %3824 = vmatmul.bf16.gmra.mxu0 %v2499
    %v3825 = vpop.f32.mrf.mxu0
    %v3826 = vadd.f32 %v3737, %v3825
    %v3827 = vpop.f32.mrf.mxu0
    %v3828 = vadd.f32 %v3739, %v3827
    %3829 = vmatmul.bf16.gmra.mxu0 %v2515
    %v3830 = vpop.f32.mrf.mxu0
    %v3831 = vadd.f32 %v3742, %v3830
    %v3832 = vpop.f32.mrf.mxu0
    %v3833 = vadd.f32 %v3744, %v3832
    %3834 = vmatmul.bf16.gmra.mxu0 %v2531
    %v3835 = vpop.f32.mrf.mxu0
    %v3836 = vadd.f32 %v3747, %v3835
    %v3837 = vpop.f32.mrf.mxu0
    %v3838 = vadd.f32 %v3749, %v3837
    %3839 = vmatmul.bf16.gmra.mxu0 %v2547
    %v3840 = vpop.f32.mrf.mxu0
    %v3841 = vadd.f32 %v3752, %v3840
    %v3842 = vpop.f32.mrf.mxu0
    %v3843 = vadd.f32 %v3754, %v3842
    %3844 = vmatmul.bf16.gmra.mxu0 %v2563
    %v3845 = vpop.f32.mrf.mxu0
    %v3846 = vadd.f32 %v3757, %v3845
    %v3847 = vpop.f32.mrf.mxu0
    %v3848 = vadd.f32 %v3759, %v3847
    %3849 = vmatmul.bf16.gmra.mxu0 %v2579
    %v3850 = vpop.f32.mrf.mxu0
    %v3851 = vadd.f32 %v3762, %v3850
    %v3852 = vpop.f32.mrf.mxu0
    %v3853 = vadd.f32 %v3764, %v3852
    %3854 = vmatmul.bf16.gmra.mxu0 %v2595
    %v3855 = vpop.f32.mrf.mxu0
    %v3856 = vadd.f32 %v3767, %v3855
    %v3857 = vpop.f32.mrf.mxu0
    %v3858 = vadd.f32 %v3769, %v3857
    %3859 = vmatmul.bf16.gmra.mxu0 %v2611
    %v3860 = vpop.f32.mrf.mxu0
    %v3861 = vadd.f32 %v3772, %v3860
    %v3862 = vpop.f32.mrf.mxu0
    %v3863 = vadd.f32 %v3774, %v3862
    %3864 = vmatmul.bf16.gmra.mxu0 %v2627
    %v3865 = vpop.f32.mrf.mxu0
    %v3866 = vadd.f32 %v3777, %v3865
    %v3867 = vpop.f32.mrf.mxu0
    %v3868 = vadd.f32 %v3779, %v3867
    %3869 = vmatmul.bf16.gmra.mxu0 %v2643
    %v3870 = vpop.f32.mrf.mxu0
    %v3871 = vadd.f32 %v3782, %v3870
    %v3872 = vpop.f32.mrf.mxu0
    %v3873 = vadd.f32 %v3784, %v3872
    %3874 = vmatmul.bf16.gmra.mxu0 %v2659
    %v3875 = vpop.f32.mrf.mxu0
    %v3876 = vadd.f32 %v3787, %v3875
    %v3877 = vpop.f32.mrf.mxu0
    %v3878 = vadd.f32 %v3789, %v3877
    %3879 = vdwg.mxu0
    %3880 = vmatpush.bf16.msra.mxu0 %v3469
    %3881 = vmatpush.bf16.msra.mxu0 %v3468
    %3882 = vmatpush.bf16.msra.mxu0 %v3467
    %3883 = vmatpush.bf16.msra.mxu0 %v3466
    %3884 = vmatpush.bf16.msra.mxu0 %v3465
    %3885 = vmatpush.bf16.msra.mxu0 %v3464
    %3886 = vmatpush.bf16.msra.mxu0 %v3463
    %3887 = vmatpush.bf16.msra.mxu0 %v3462
    %3888 = vmatmul.bf16.gmra.mxu0 %v2420
    %v3889 = vpop.f32.mrf.mxu0
    %v3890 = vadd.f32 %v3801, %v3889
    %v3891 = vpop.f32.mrf.mxu0
    %v3892 = vadd.f32 %v3803, %v3891
    %3893 = vmatmul.bf16.gmra.mxu0 %v2436
    %v3894 = vpop.f32.mrf.mxu0
    %v3895 = vadd.f32 %v3806, %v3894
    %v3896 = vpop.f32.mrf.mxu0
    %v3897 = vadd.f32 %v3808, %v3896
    %3898 = vmatmul.bf16.gmra.mxu0 %v2452
    %v3899 = vpop.f32.mrf.mxu0
    %v3900 = vadd.f32 %v3811, %v3899
    %v3901 = vpop.f32.mrf.mxu0
    %v3902 = vadd.f32 %v3813, %v3901
    %3903 = vmatmul.bf16.gmra.mxu0 %v2468
    %v3904 = vpop.f32.mrf.mxu0
    %v3905 = vadd.f32 %v3816, %v3904
    %v3906 = vpop.f32.mrf.mxu0
    %v3907 = vadd.f32 %v3818, %v3906
    %3908 = vmatmul.bf16.gmra.mxu0 %v2484
    %v3909 = vpop.f32.mrf.mxu0
    %v3910 = vadd.f32 %v3821, %v3909
    %v3911 = vpop.f32.mrf.mxu0
    %v3912 = vadd.f32 %v3823, %v3911
    %3913 = vmatmul.bf16.gmra.mxu0 %v2500
    %v3914 = vpop.f32.mrf.mxu0
    %v3915 = vadd.f32 %v3826, %v3914
    %v3916 = vpop.f32.mrf.mxu0
    %v3917 = vadd.f32 %v3828, %v3916
    %3918 = vmatmul.bf16.gmra.mxu0 %v2516
    %v3919 = vpop.f32.mrf.mxu0
    %v3920 = vadd.f32 %v3831, %v3919
    %v3921 = vpop.f32.mrf.mxu0
    %v3922 = vadd.f32 %v3833, %v3921
    %3923 = vmatmul.bf16.gmra.mxu0 %v2532
    %v3924 = vpop.f32.mrf.mxu0
    %v3925 = vadd.f32 %v3836, %v3924
    %v3926 = vpop.f32.mrf.mxu0
    %v3927 = vadd.f32 %v3838, %v3926
    %3928 = vmatmul.bf16.gmra.mxu0 %v2548
    %v3929 = vpop.f32.mrf.mxu0
    %v3930 = vadd.f32 %v3841, %v3929
    %v3931 = vpop.f32.mrf.mxu0
    %v3932 = vadd.f32 %v3843, %v3931
    %3933 = vmatmul.bf16.gmra.mxu0 %v2564
    %v3934 = vpop.f32.mrf.mxu0
    %v3935 = vadd.f32 %v3846, %v3934
    %v3936 = vpop.f32.mrf.mxu0
    %v3937 = vadd.f32 %v3848, %v3936
    %3938 = vmatmul.bf16.gmra.mxu0 %v2580
    %v3939 = vpop.f32.mrf.mxu0
    %v3940 = vadd.f32 %v3851, %v3939
    %v3941 = vpop.f32.mrf.mxu0
    %v3942 = vadd.f32 %v3853, %v3941
    %3943 = vmatmul.bf16.gmra.mxu0 %v2596
    %v3944 = vpop.f32.mrf.mxu0
    %v3945 = vadd.f32 %v3856, %v3944
    %v3946 = vpop.f32.mrf.mxu0
    %v3947 = vadd.f32 %v3858, %v3946
    %3948 = vmatmul.bf16.gmra.mxu0 %v2612
    %v3949 = vpop.f32.mrf.mxu0
    %v3950 = vadd.f32 %v3861, %v3949
    %v3951 = vpop.f32.mrf.mxu0
    %v3952 = vadd.f32 %v3863, %v3951
    %3953 = vmatmul.bf16.gmra.mxu0 %v2628
    %v3954 = vpop.f32.mrf.mxu0
    %v3955 = vadd.f32 %v3866, %v3954
    %v3956 = vpop.f32.mrf.mxu0
    %v3957 = vadd.f32 %v3868, %v3956
    %3958 = vmatmul.bf16.gmra.mxu0 %v2644
    %v3959 = vpop.f32.mrf.mxu0
    %v3960 = vadd.f32 %v3871, %v3959
    %v3961 = vpop.f32.mrf.mxu0
    %v3962 = vadd.f32 %v3873, %v3961
    %3963 = vmatmul.bf16.gmra.mxu0 %v2660
    %v3964 = vpop.f32.mrf.mxu0
    %v3965 = vadd.f32 %v3876, %v3964
    %v3966 = vpop.f32.mrf.mxu0
    %v3967 = vadd.f32 %v3878, %v3966
    %3968 = vdwg.mxu0
    %3969 = vmatpush.bf16.msra.mxu0 %v3477
    %3970 = vmatpush.bf16.msra.mxu0 %v3476
    %3971 = vmatpush.bf16.msra.mxu0 %v3475
    %3972 = vmatpush.bf16.msra.mxu0 %v3474
    %3973 = vmatpush.bf16.msra.mxu0 %v3473
    %3974 = vmatpush.bf16.msra.mxu0 %v3472
    %3975 = vmatpush.bf16.msra.mxu0 %v3471
    %3976 = vmatpush.bf16.msra.mxu0 %v3470
    %3977 = vmatmul.bf16.gmra.mxu0 %v2421
    %v3978 = vpop.f32.mrf.mxu0
    %v3979 = vadd.f32 %v3890, %v3978
    %v3980 = vpop.f32.mrf.mxu0
    %v3981 = vadd.f32 %v3892, %v3980
    %3982 = vmatmul.bf16.gmra.mxu0 %v2437
    %v3983 = vpop.f32.mrf.mxu0
    %v3984 = vadd.f32 %v3895, %v3983
    %v3985 = vpop.f32.mrf.mxu0
    %v3986 = vadd.f32 %v3897, %v3985
    %3987 = vmatmul.bf16.gmra.mxu0 %v2453
    %v3988 = vpop.f32.mrf.mxu0
    %v3989 = vadd.f32 %v3900, %v3988
    %v3990 = vpop.f32.mrf.mxu0
    %v3991 = vadd.f32 %v3902, %v3990
    %3992 = vmatmul.bf16.gmra.mxu0 %v2469
    %v3993 = vpop.f32.mrf.mxu0
    %v3994 = vadd.f32 %v3905, %v3993
    %v3995 = vpop.f32.mrf.mxu0
    %v3996 = vadd.f32 %v3907, %v3995
    %3997 = vmatmul.bf16.gmra.mxu0 %v2485
    %v3998 = vpop.f32.mrf.mxu0
    %v3999 = vadd.f32 %v3910, %v3998
    %v4000 = vpop.f32.mrf.mxu0
    %v4001 = vadd.f32 %v3912, %v4000
    %4002 = vmatmul.bf16.gmra.mxu0 %v2501
    %v4003 = vpop.f32.mrf.mxu0
    %v4004 = vadd.f32 %v3915, %v4003
    %v4005 = vpop.f32.mrf.mxu0
    %v4006 = vadd.f32 %v3917, %v4005
    %4007 = vmatmul.bf16.gmra.mxu0 %v2517
    %v4008 = vpop.f32.mrf.mxu0
    %v4009 = vadd.f32 %v3920, %v4008
    %v4010 = vpop.f32.mrf.mxu0
    %v4011 = vadd.f32 %v3922, %v4010
    %4012 = vmatmul.bf16.gmra.mxu0 %v2533
    %v4013 = vpop.f32.mrf.mxu0
    %v4014 = vadd.f32 %v3925, %v4013
    %v4015 = vpop.f32.mrf.mxu0
    %v4016 = vadd.f32 %v3927, %v4015
    %4017 = vmatmul.bf16.gmra.mxu0 %v2549
    %v4018 = vpop.f32.mrf.mxu0
    %v4019 = vadd.f32 %v3930, %v4018
    %v4020 = vpop.f32.mrf.mxu0
    %v4021 = vadd.f32 %v3932, %v4020
    %4022 = vmatmul.bf16.gmra.mxu0 %v2565
    %v4023 = vpop.f32.mrf.mxu0
    %v4024 = vadd.f32 %v3935, %v4023
    %v4025 = vpop.f32.mrf.mxu0
    %v4026 = vadd.f32 %v3937, %v4025
    %4027 = vmatmul.bf16.gmra.mxu0 %v2581
    %v4028 = vpop.f32.mrf.mxu0
    %v4029 = vadd.f32 %v3940, %v4028
    %v4030 = vpop.f32.mrf.mxu0
    %v4031 = vadd.f32 %v3942, %v4030
    %4032 = vmatmul.bf16.gmra.mxu0 %v2597
    %v4033 = vpop.f32.mrf.mxu0
    %v4034 = vadd.f32 %v3945, %v4033
    %v4035 = vpop.f32.mrf.mxu0
    %v4036 = vadd.f32 %v3947, %v4035
    %4037 = vmatmul.bf16.gmra.mxu0 %v2613
    %v4038 = vpop.f32.mrf.mxu0
    %v4039 = vadd.f32 %v3950, %v4038
    %v4040 = vpop.f32.mrf.mxu0
    %v4041 = vadd.f32 %v3952, %v4040
    %4042 = vmatmul.bf16.gmra.mxu0 %v2629
    %v4043 = vpop.f32.mrf.mxu0
    %v4044 = vadd.f32 %v3955, %v4043
    %v4045 = vpop.f32.mrf.mxu0
    %v4046 = vadd.f32 %v3957, %v4045
    %4047 = vmatmul.bf16.gmra.mxu0 %v2645
    %v4048 = vpop.f32.mrf.mxu0
    %v4049 = vadd.f32 %v3960, %v4048
    %v4050 = vpop.f32.mrf.mxu0
    %v4051 = vadd.f32 %v3962, %v4050
    %4052 = vmatmul.bf16.gmra.mxu0 %v2661
    %v4053 = vpop.f32.mrf.mxu0
    %v4054 = vadd.f32 %v3965, %v4053
    %v4055 = vpop.f32.mrf.mxu0
    %v4056 = vadd.f32 %v3967, %v4055
    %4057 = vdwg.mxu0
    %4058 = vmatpush.bf16.msra.mxu0 %v3485
    %4059 = vmatpush.bf16.msra.mxu0 %v3484
    %4060 = vmatpush.bf16.msra.mxu0 %v3483
    %4061 = vmatpush.bf16.msra.mxu0 %v3482
    %4062 = vmatpush.bf16.msra.mxu0 %v3481
    %4063 = vmatpush.bf16.msra.mxu0 %v3480
    %4064 = vmatpush.bf16.msra.mxu0 %v3479
    %4065 = vmatpush.bf16.msra.mxu0 %v3478
    %4066 = vmatmul.bf16.gmra.mxu0 %v2422
    %v4067 = vpop.f32.mrf.mxu0
    %v4068 = vadd.f32 %v3979, %v4067
    %v4069 = vpop.f32.mrf.mxu0
    %v4070 = vadd.f32 %v3981, %v4069
    %4071 = vmatmul.bf16.gmra.mxu0 %v2438
    %v4072 = vpop.f32.mrf.mxu0
    %v4073 = vadd.f32 %v3984, %v4072
    %v4074 = vpop.f32.mrf.mxu0
    %v4075 = vadd.f32 %v3986, %v4074
    %4076 = vmatmul.bf16.gmra.mxu0 %v2454
    %v4077 = vpop.f32.mrf.mxu0
    %v4078 = vadd.f32 %v3989, %v4077
    %v4079 = vpop.f32.mrf.mxu0
    %v4080 = vadd.f32 %v3991, %v4079
    %4081 = vmatmul.bf16.gmra.mxu0 %v2470
    %v4082 = vpop.f32.mrf.mxu0
    %v4083 = vadd.f32 %v3994, %v4082
    %v4084 = vpop.f32.mrf.mxu0
    %v4085 = vadd.f32 %v3996, %v4084
    %4086 = vmatmul.bf16.gmra.mxu0 %v2486
    %v4087 = vpop.f32.mrf.mxu0
    %v4088 = vadd.f32 %v3999, %v4087
    %v4089 = vpop.f32.mrf.mxu0
    %v4090 = vadd.f32 %v4001, %v4089
    %4091 = vmatmul.bf16.gmra.mxu0 %v2502
    %v4092 = vpop.f32.mrf.mxu0
    %v4093 = vadd.f32 %v4004, %v4092
    %v4094 = vpop.f32.mrf.mxu0
    %v4095 = vadd.f32 %v4006, %v4094
    %4096 = vmatmul.bf16.gmra.mxu0 %v2518
    %v4097 = vpop.f32.mrf.mxu0
    %v4098 = vadd.f32 %v4009, %v4097
    %v4099 = vpop.f32.mrf.mxu0
    %v4100 = vadd.f32 %v4011, %v4099
    %4101 = vmatmul.bf16.gmra.mxu0 %v2534
    %v4102 = vpop.f32.mrf.mxu0
    %v4103 = vadd.f32 %v4014, %v4102
    %v4104 = vpop.f32.mrf.mxu0
    %v4105 = vadd.f32 %v4016, %v4104
    %4106 = vmatmul.bf16.gmra.mxu0 %v2550
    %v4107 = vpop.f32.mrf.mxu0
    %v4108 = vadd.f32 %v4019, %v4107
    %v4109 = vpop.f32.mrf.mxu0
    %v4110 = vadd.f32 %v4021, %v4109
    %4111 = vmatmul.bf16.gmra.mxu0 %v2566
    %v4112 = vpop.f32.mrf.mxu0
    %v4113 = vadd.f32 %v4024, %v4112
    %v4114 = vpop.f32.mrf.mxu0
    %v4115 = vadd.f32 %v4026, %v4114
    %4116 = vmatmul.bf16.gmra.mxu0 %v2582
    %v4117 = vpop.f32.mrf.mxu0
    %v4118 = vadd.f32 %v4029, %v4117
    %v4119 = vpop.f32.mrf.mxu0
    %v4120 = vadd.f32 %v4031, %v4119
    %4121 = vmatmul.bf16.gmra.mxu0 %v2598
    %v4122 = vpop.f32.mrf.mxu0
    %v4123 = vadd.f32 %v4034, %v4122
    %v4124 = vpop.f32.mrf.mxu0
    %v4125 = vadd.f32 %v4036, %v4124
    %4126 = vmatmul.bf16.gmra.mxu0 %v2614
    %v4127 = vpop.f32.mrf.mxu0
    %v4128 = vadd.f32 %v4039, %v4127
    %v4129 = vpop.f32.mrf.mxu0
    %v4130 = vadd.f32 %v4041, %v4129
    %4131 = vmatmul.bf16.gmra.mxu0 %v2630
    %v4132 = vpop.f32.mrf.mxu0
    %v4133 = vadd.f32 %v4044, %v4132
    %v4134 = vpop.f32.mrf.mxu0
    %v4135 = vadd.f32 %v4046, %v4134
    %4136 = vmatmul.bf16.gmra.mxu0 %v2646
    %v4137 = vpop.f32.mrf.mxu0
    %v4138 = vadd.f32 %v4049, %v4137
    %v4139 = vpop.f32.mrf.mxu0
    %v4140 = vadd.f32 %v4051, %v4139
    %4141 = vmatmul.bf16.gmra.mxu0 %v2662
    %v4142 = vpop.f32.mrf.mxu0
    %v4143 = vadd.f32 %v4054, %v4142
    %v4144 = vpop.f32.mrf.mxu0
    %v4145 = vadd.f32 %v4056, %v4144
    %4146 = vdwg.mxu0
    %4147 = vmatpush.bf16.msra.mxu0 %v3493
    %4148 = vmatpush.bf16.msra.mxu0 %v3492
    %4149 = vmatpush.bf16.msra.mxu0 %v3491
    %4150 = vmatpush.bf16.msra.mxu0 %v3490
    %4151 = vmatpush.bf16.msra.mxu0 %v3489
    %4152 = vmatpush.bf16.msra.mxu0 %v3488
    %4153 = vmatpush.bf16.msra.mxu0 %v3487
    %4154 = vmatpush.bf16.msra.mxu0 %v3486
    %4155 = vmatmul.bf16.gmra.mxu0 %v2423
    %v4156 = vpop.f32.mrf.mxu0
    %v4157 = vadd.f32 %v4068, %v4156
    %v4158 = vpop.f32.mrf.mxu0
    %v4159 = vadd.f32 %v4070, %v4158
    %4160 = vmatmul.bf16.gmra.mxu0 %v2439
    %v4161 = vpop.f32.mrf.mxu0
    %v4162 = vadd.f32 %v4073, %v4161
    %v4163 = vpop.f32.mrf.mxu0
    %v4164 = vadd.f32 %v4075, %v4163
    %4165 = vmatmul.bf16.gmra.mxu0 %v2455
    %v4166 = vpop.f32.mrf.mxu0
    %v4167 = vadd.f32 %v4078, %v4166
    %v4168 = vpop.f32.mrf.mxu0
    %v4169 = vadd.f32 %v4080, %v4168
    %4170 = vmatmul.bf16.gmra.mxu0 %v2471
    %v4171 = vpop.f32.mrf.mxu0
    %v4172 = vadd.f32 %v4083, %v4171
    %v4173 = vpop.f32.mrf.mxu0
    %v4174 = vadd.f32 %v4085, %v4173
    %4175 = vmatmul.bf16.gmra.mxu0 %v2487
    %v4176 = vpop.f32.mrf.mxu0
    %v4177 = vadd.f32 %v4088, %v4176
    %v4178 = vpop.f32.mrf.mxu0
    %v4179 = vadd.f32 %v4090, %v4178
    %4180 = vmatmul.bf16.gmra.mxu0 %v2503
    %v4181 = vpop.f32.mrf.mxu0
    %v4182 = vadd.f32 %v4093, %v4181
    %v4183 = vpop.f32.mrf.mxu0
    %v4184 = vadd.f32 %v4095, %v4183
    %4185 = vmatmul.bf16.gmra.mxu0 %v2519
    %v4186 = vpop.f32.mrf.mxu0
    %v4187 = vadd.f32 %v4098, %v4186
    %v4188 = vpop.f32.mrf.mxu0
    %v4189 = vadd.f32 %v4100, %v4188
    %4190 = vmatmul.bf16.gmra.mxu0 %v2535
    %v4191 = vpop.f32.mrf.mxu0
    %v4192 = vadd.f32 %v4103, %v4191
    %v4193 = vpop.f32.mrf.mxu0
    %v4194 = vadd.f32 %v4105, %v4193
    %4195 = vmatmul.bf16.gmra.mxu0 %v2551
    %v4196 = vpop.f32.mrf.mxu0
    %v4197 = vadd.f32 %v4108, %v4196
    %v4198 = vpop.f32.mrf.mxu0
    %v4199 = vadd.f32 %v4110, %v4198
    %4200 = vmatmul.bf16.gmra.mxu0 %v2567
    %v4201 = vpop.f32.mrf.mxu0
    %v4202 = vadd.f32 %v4113, %v4201
    %v4203 = vpop.f32.mrf.mxu0
    %v4204 = vadd.f32 %v4115, %v4203
    %4205 = vmatmul.bf16.gmra.mxu0 %v2583
    %v4206 = vpop.f32.mrf.mxu0
    %v4207 = vadd.f32 %v4118, %v4206
    %v4208 = vpop.f32.mrf.mxu0
    %v4209 = vadd.f32 %v4120, %v4208
    %4210 = vmatmul.bf16.gmra.mxu0 %v2599
    %v4211 = vpop.f32.mrf.mxu0
    %v4212 = vadd.f32 %v4123, %v4211
    %v4213 = vpop.f32.mrf.mxu0
    %v4214 = vadd.f32 %v4125, %v4213
    %4215 = vmatmul.bf16.gmra.mxu0 %v2615
    %v4216 = vpop.f32.mrf.mxu0
    %v4217 = vadd.f32 %v4128, %v4216
    %v4218 = vpop.f32.mrf.mxu0
    %v4219 = vadd.f32 %v4130, %v4218
    %4220 = vmatmul.bf16.gmra.mxu0 %v2631
    %v4221 = vpop.f32.mrf.mxu0
    %v4222 = vadd.f32 %v4133, %v4221
    %v4223 = vpop.f32.mrf.mxu0
    %v4224 = vadd.f32 %v4135, %v4223
    %4225 = vmatmul.bf16.gmra.mxu0 %v2647
    %v4226 = vpop.f32.mrf.mxu0
    %v4227 = vadd.f32 %v4138, %v4226
    %v4228 = vpop.f32.mrf.mxu0
    %v4229 = vadd.f32 %v4140, %v4228
    %4230 = vmatmul.bf16.gmra.mxu0 %v2663
    %v4231 = vpop.f32.mrf.mxu0
    %v4232 = vadd.f32 %v4143, %v4231
    %v4233 = vpop.f32.mrf.mxu0
    %v4234 = vadd.f32 %v4145, %v4233
    %4235 = vdwg.mxu0
    %4236 = vmatpush.bf16.msra.mxu0 %v3501
    %4237 = vmatpush.bf16.msra.mxu0 %v3500
    %4238 = vmatpush.bf16.msra.mxu0 %v3499
    %4239 = vmatpush.bf16.msra.mxu0 %v3498
    %4240 = vmatpush.bf16.msra.mxu0 %v3497
    %4241 = vmatpush.bf16.msra.mxu0 %v3496
    %4242 = vmatpush.bf16.msra.mxu0 %v3495
    %4243 = vmatpush.bf16.msra.mxu0 %v3494
    %4244 = vmatmul.bf16.gmra.mxu0 %v2424
    %v4245 = vpop.f32.mrf.mxu0
    %v4246 = vadd.f32 %v4157, %v4245
    %v4247 = vpop.f32.mrf.mxu0
    %v4248 = vadd.f32 %v4159, %v4247
    %4249 = vmatmul.bf16.gmra.mxu0 %v2440
    %v4250 = vpop.f32.mrf.mxu0
    %v4251 = vadd.f32 %v4162, %v4250
    %v4252 = vpop.f32.mrf.mxu0
    %v4253 = vadd.f32 %v4164, %v4252
    %4254 = vmatmul.bf16.gmra.mxu0 %v2456
    %v4255 = vpop.f32.mrf.mxu0
    %v4256 = vadd.f32 %v4167, %v4255
    %v4257 = vpop.f32.mrf.mxu0
    %v4258 = vadd.f32 %v4169, %v4257
    %4259 = vmatmul.bf16.gmra.mxu0 %v2472
    %v4260 = vpop.f32.mrf.mxu0
    %v4261 = vadd.f32 %v4172, %v4260
    %v4262 = vpop.f32.mrf.mxu0
    %v4263 = vadd.f32 %v4174, %v4262
    %4264 = vmatmul.bf16.gmra.mxu0 %v2488
    %v4265 = vpop.f32.mrf.mxu0
    %v4266 = vadd.f32 %v4177, %v4265
    %v4267 = vpop.f32.mrf.mxu0
    %v4268 = vadd.f32 %v4179, %v4267
    %4269 = vmatmul.bf16.gmra.mxu0 %v2504
    %v4270 = vpop.f32.mrf.mxu0
    %v4271 = vadd.f32 %v4182, %v4270
    %v4272 = vpop.f32.mrf.mxu0
    %v4273 = vadd.f32 %v4184, %v4272
    %4274 = vmatmul.bf16.gmra.mxu0 %v2520
    %v4275 = vpop.f32.mrf.mxu0
    %v4276 = vadd.f32 %v4187, %v4275
    %v4277 = vpop.f32.mrf.mxu0
    %v4278 = vadd.f32 %v4189, %v4277
    %4279 = vmatmul.bf16.gmra.mxu0 %v2536
    %v4280 = vpop.f32.mrf.mxu0
    %v4281 = vadd.f32 %v4192, %v4280
    %v4282 = vpop.f32.mrf.mxu0
    %v4283 = vadd.f32 %v4194, %v4282
    %4284 = vmatmul.bf16.gmra.mxu0 %v2552
    %v4285 = vpop.f32.mrf.mxu0
    %v4286 = vadd.f32 %v4197, %v4285
    %v4287 = vpop.f32.mrf.mxu0
    %v4288 = vadd.f32 %v4199, %v4287
    %4289 = vmatmul.bf16.gmra.mxu0 %v2568
    %v4290 = vpop.f32.mrf.mxu0
    %v4291 = vadd.f32 %v4202, %v4290
    %v4292 = vpop.f32.mrf.mxu0
    %v4293 = vadd.f32 %v4204, %v4292
    %4294 = vmatmul.bf16.gmra.mxu0 %v2584
    %v4295 = vpop.f32.mrf.mxu0
    %v4296 = vadd.f32 %v4207, %v4295
    %v4297 = vpop.f32.mrf.mxu0
    %v4298 = vadd.f32 %v4209, %v4297
    %4299 = vmatmul.bf16.gmra.mxu0 %v2600
    %v4300 = vpop.f32.mrf.mxu0
    %v4301 = vadd.f32 %v4212, %v4300
    %v4302 = vpop.f32.mrf.mxu0
    %v4303 = vadd.f32 %v4214, %v4302
    %4304 = vmatmul.bf16.gmra.mxu0 %v2616
    %v4305 = vpop.f32.mrf.mxu0
    %v4306 = vadd.f32 %v4217, %v4305
    %v4307 = vpop.f32.mrf.mxu0
    %v4308 = vadd.f32 %v4219, %v4307
    %4309 = vmatmul.bf16.gmra.mxu0 %v2632
    %v4310 = vpop.f32.mrf.mxu0
    %v4311 = vadd.f32 %v4222, %v4310
    %v4312 = vpop.f32.mrf.mxu0
    %v4313 = vadd.f32 %v4224, %v4312
    %4314 = vmatmul.bf16.gmra.mxu0 %v2648
    %v4315 = vpop.f32.mrf.mxu0
    %v4316 = vadd.f32 %v4227, %v4315
    %v4317 = vpop.f32.mrf.mxu0
    %v4318 = vadd.f32 %v4229, %v4317
    %4319 = vmatmul.bf16.gmra.mxu0 %v2664
    %v4320 = vpop.f32.mrf.mxu0
    %v4321 = vadd.f32 %v4232, %v4320
    %v4322 = vpop.f32.mrf.mxu0
    %v4323 = vadd.f32 %v4234, %v4322
    %4324 = vdwg.mxu0
    %4325 = vmatpush.bf16.msra.mxu0 %v3509
    %4326 = vmatpush.bf16.msra.mxu0 %v3508
    %4327 = vmatpush.bf16.msra.mxu0 %v3507
    %4328 = vmatpush.bf16.msra.mxu0 %v3506
    %4329 = vmatpush.bf16.msra.mxu0 %v3505
    %4330 = vmatpush.bf16.msra.mxu0 %v3504
    %4331 = vmatpush.bf16.msra.mxu0 %v3503
    %4332 = vmatpush.bf16.msra.mxu0 %v3502
    %4333 = vmatmul.bf16.gmra.mxu0 %v2425
    %v4334 = vpop.f32.mrf.mxu0
    %v4335 = vadd.f32 %v4246, %v4334
    %v4336 = vpop.f32.mrf.mxu0
    %v4337 = vadd.f32 %v4248, %v4336
    %4338 = vmatmul.bf16.gmra.mxu0 %v2441
    %v4339 = vpop.f32.mrf.mxu0
    %v4340 = vadd.f32 %v4251, %v4339
    %v4341 = vpop.f32.mrf.mxu0
    %v4342 = vadd.f32 %v4253, %v4341
    %4343 = vmatmul.bf16.gmra.mxu0 %v2457
    %v4344 = vpop.f32.mrf.mxu0
    %v4345 = vadd.f32 %v4256, %v4344
    %v4346 = vpop.f32.mrf.mxu0
    %v4347 = vadd.f32 %v4258, %v4346
    %4348 = vmatmul.bf16.gmra.mxu0 %v2473
    %v4349 = vpop.f32.mrf.mxu0
    %v4350 = vadd.f32 %v4261, %v4349
    %v4351 = vpop.f32.mrf.mxu0
    %v4352 = vadd.f32 %v4263, %v4351
    %4353 = vmatmul.bf16.gmra.mxu0 %v2489
    %v4354 = vpop.f32.mrf.mxu0
    %v4355 = vadd.f32 %v4266, %v4354
    %v4356 = vpop.f32.mrf.mxu0
    %v4357 = vadd.f32 %v4268, %v4356
    %4358 = vmatmul.bf16.gmra.mxu0 %v2505
    %v4359 = vpop.f32.mrf.mxu0
    %v4360 = vadd.f32 %v4271, %v4359
    %v4361 = vpop.f32.mrf.mxu0
    %v4362 = vadd.f32 %v4273, %v4361
    %4363 = vmatmul.bf16.gmra.mxu0 %v2521
    %v4364 = vpop.f32.mrf.mxu0
    %v4365 = vadd.f32 %v4276, %v4364
    %v4366 = vpop.f32.mrf.mxu0
    %v4367 = vadd.f32 %v4278, %v4366
    %4368 = vmatmul.bf16.gmra.mxu0 %v2537
    %v4369 = vpop.f32.mrf.mxu0
    %v4370 = vadd.f32 %v4281, %v4369
    %v4371 = vpop.f32.mrf.mxu0
    %v4372 = vadd.f32 %v4283, %v4371
    %4373 = vmatmul.bf16.gmra.mxu0 %v2553
    %v4374 = vpop.f32.mrf.mxu0
    %v4375 = vadd.f32 %v4286, %v4374
    %v4376 = vpop.f32.mrf.mxu0
    %v4377 = vadd.f32 %v4288, %v4376
    %4378 = vmatmul.bf16.gmra.mxu0 %v2569
    %v4379 = vpop.f32.mrf.mxu0
    %v4380 = vadd.f32 %v4291, %v4379
    %v4381 = vpop.f32.mrf.mxu0
    %v4382 = vadd.f32 %v4293, %v4381
    %4383 = vmatmul.bf16.gmra.mxu0 %v2585
    %v4384 = vpop.f32.mrf.mxu0
    %v4385 = vadd.f32 %v4296, %v4384
    %v4386 = vpop.f32.mrf.mxu0
    %v4387 = vadd.f32 %v4298, %v4386
    %4388 = vmatmul.bf16.gmra.mxu0 %v2601
    %v4389 = vpop.f32.mrf.mxu0
    %v4390 = vadd.f32 %v4301, %v4389
    %v4391 = vpop.f32.mrf.mxu0
    %v4392 = vadd.f32 %v4303, %v4391
    %4393 = vmatmul.bf16.gmra.mxu0 %v2617
    %v4394 = vpop.f32.mrf.mxu0
    %v4395 = vadd.f32 %v4306, %v4394
    %v4396 = vpop.f32.mrf.mxu0
    %v4397 = vadd.f32 %v4308, %v4396
    %4398 = vmatmul.bf16.gmra.mxu0 %v2633
    %v4399 = vpop.f32.mrf.mxu0
    %v4400 = vadd.f32 %v4311, %v4399
    %v4401 = vpop.f32.mrf.mxu0
    %v4402 = vadd.f32 %v4313, %v4401
    %4403 = vmatmul.bf16.gmra.mxu0 %v2649
    %v4404 = vpop.f32.mrf.mxu0
    %v4405 = vadd.f32 %v4316, %v4404
    %v4406 = vpop.f32.mrf.mxu0
    %v4407 = vadd.f32 %v4318, %v4406
    %4408 = vmatmul.bf16.gmra.mxu0 %v2665
    %v4409 = vpop.f32.mrf.mxu0
    %v4410 = vadd.f32 %v4321, %v4409
    %v4411 = vpop.f32.mrf.mxu0
    %v4412 = vadd.f32 %v4323, %v4411
    %4413 = vdwg.mxu0
    %4414 = vmatpush.bf16.msra.mxu0 %v3517
    %4415 = vmatpush.bf16.msra.mxu0 %v3516
    %4416 = vmatpush.bf16.msra.mxu0 %v3515
    %4417 = vmatpush.bf16.msra.mxu0 %v3514
    %4418 = vmatpush.bf16.msra.mxu0 %v3513
    %4419 = vmatpush.bf16.msra.mxu0 %v3512
    %4420 = vmatpush.bf16.msra.mxu0 %v3511
    %4421 = vmatpush.bf16.msra.mxu0 %v3510
    %4422 = vmatmul.bf16.gmra.mxu0 %v2426
    %v4423 = vpop.f32.mrf.mxu0
    %v4424 = vadd.f32 %v4335, %v4423
    %v4425 = vpop.f32.mrf.mxu0
    %v4426 = vadd.f32 %v4337, %v4425
    %4427 = vmatmul.bf16.gmra.mxu0 %v2442
    %v4428 = vpop.f32.mrf.mxu0
    %v4429 = vadd.f32 %v4340, %v4428
    %v4430 = vpop.f32.mrf.mxu0
    %v4431 = vadd.f32 %v4342, %v4430
    %4432 = vmatmul.bf16.gmra.mxu0 %v2458
    %v4433 = vpop.f32.mrf.mxu0
    %v4434 = vadd.f32 %v4345, %v4433
    %v4435 = vpop.f32.mrf.mxu0
    %v4436 = vadd.f32 %v4347, %v4435
    %4437 = vmatmul.bf16.gmra.mxu0 %v2474
    %v4438 = vpop.f32.mrf.mxu0
    %v4439 = vadd.f32 %v4350, %v4438
    %v4440 = vpop.f32.mrf.mxu0
    %v4441 = vadd.f32 %v4352, %v4440
    %4442 = vmatmul.bf16.gmra.mxu0 %v2490
    %v4443 = vpop.f32.mrf.mxu0
    %v4444 = vadd.f32 %v4355, %v4443
    %v4445 = vpop.f32.mrf.mxu0
    %v4446 = vadd.f32 %v4357, %v4445
    %4447 = vmatmul.bf16.gmra.mxu0 %v2506
    %v4448 = vpop.f32.mrf.mxu0
    %v4449 = vadd.f32 %v4360, %v4448
    %v4450 = vpop.f32.mrf.mxu0
    %v4451 = vadd.f32 %v4362, %v4450
    %4452 = vmatmul.bf16.gmra.mxu0 %v2522
    %v4453 = vpop.f32.mrf.mxu0
    %v4454 = vadd.f32 %v4365, %v4453
    %v4455 = vpop.f32.mrf.mxu0
    %v4456 = vadd.f32 %v4367, %v4455
    %4457 = vmatmul.bf16.gmra.mxu0 %v2538
    %v4458 = vpop.f32.mrf.mxu0
    %v4459 = vadd.f32 %v4370, %v4458
    %v4460 = vpop.f32.mrf.mxu0
    %v4461 = vadd.f32 %v4372, %v4460
    %4462 = vmatmul.bf16.gmra.mxu0 %v2554
    %v4463 = vpop.f32.mrf.mxu0
    %v4464 = vadd.f32 %v4375, %v4463
    %v4465 = vpop.f32.mrf.mxu0
    %v4466 = vadd.f32 %v4377, %v4465
    %4467 = vmatmul.bf16.gmra.mxu0 %v2570
    %v4468 = vpop.f32.mrf.mxu0
    %v4469 = vadd.f32 %v4380, %v4468
    %v4470 = vpop.f32.mrf.mxu0
    %v4471 = vadd.f32 %v4382, %v4470
    %4472 = vmatmul.bf16.gmra.mxu0 %v2586
    %v4473 = vpop.f32.mrf.mxu0
    %v4474 = vadd.f32 %v4385, %v4473
    %v4475 = vpop.f32.mrf.mxu0
    %v4476 = vadd.f32 %v4387, %v4475
    %4477 = vmatmul.bf16.gmra.mxu0 %v2602
    %v4478 = vpop.f32.mrf.mxu0
    %v4479 = vadd.f32 %v4390, %v4478
    %v4480 = vpop.f32.mrf.mxu0
    %v4481 = vadd.f32 %v4392, %v4480
    %4482 = vmatmul.bf16.gmra.mxu0 %v2618
    %v4483 = vpop.f32.mrf.mxu0
    %v4484 = vadd.f32 %v4395, %v4483
    %v4485 = vpop.f32.mrf.mxu0
    %v4486 = vadd.f32 %v4397, %v4485
    %4487 = vmatmul.bf16.gmra.mxu0 %v2634
    %v4488 = vpop.f32.mrf.mxu0
    %v4489 = vadd.f32 %v4400, %v4488
    %v4490 = vpop.f32.mrf.mxu0
    %v4491 = vadd.f32 %v4402, %v4490
    %4492 = vmatmul.bf16.gmra.mxu0 %v2650
    %v4493 = vpop.f32.mrf.mxu0
    %v4494 = vadd.f32 %v4405, %v4493
    %v4495 = vpop.f32.mrf.mxu0
    %v4496 = vadd.f32 %v4407, %v4495
    %4497 = vmatmul.bf16.gmra.mxu0 %v2666
    %v4498 = vpop.f32.mrf.mxu0
    %v4499 = vadd.f32 %v4410, %v4498
    %v4500 = vpop.f32.mrf.mxu0
    %v4501 = vadd.f32 %v4412, %v4500
    %4502 = vdwg.mxu0
    %4503 = vmatpush.bf16.msra.mxu0 %v3525
    %4504 = vmatpush.bf16.msra.mxu0 %v3524
    %4505 = vmatpush.bf16.msra.mxu0 %v3523
    %4506 = vmatpush.bf16.msra.mxu0 %v3522
    %4507 = vmatpush.bf16.msra.mxu0 %v3521
    %4508 = vmatpush.bf16.msra.mxu0 %v3520
    %4509 = vmatpush.bf16.msra.mxu0 %v3519
    %4510 = vmatpush.bf16.msra.mxu0 %v3518
    %4511 = vmatmul.bf16.gmra.mxu0 %v2427
    %v4512 = vpop.f32.mrf.mxu0
    %v4513 = vadd.f32 %v4424, %v4512
    %v4514 = vpop.f32.mrf.mxu0
    %v4515 = vadd.f32 %v4426, %v4514
    %4516 = vmatmul.bf16.gmra.mxu0 %v2443
    %v4517 = vpop.f32.mrf.mxu0
    %v4518 = vadd.f32 %v4429, %v4517
    %v4519 = vpop.f32.mrf.mxu0
    %v4520 = vadd.f32 %v4431, %v4519
    %4521 = vmatmul.bf16.gmra.mxu0 %v2459
    %v4522 = vpop.f32.mrf.mxu0
    %v4523 = vadd.f32 %v4434, %v4522
    %v4524 = vpop.f32.mrf.mxu0
    %v4525 = vadd.f32 %v4436, %v4524
    %4526 = vmatmul.bf16.gmra.mxu0 %v2475
    %v4527 = vpop.f32.mrf.mxu0
    %v4528 = vadd.f32 %v4439, %v4527
    %v4529 = vpop.f32.mrf.mxu0
    %v4530 = vadd.f32 %v4441, %v4529
    %4531 = vmatmul.bf16.gmra.mxu0 %v2491
    %v4532 = vpop.f32.mrf.mxu0
    %v4533 = vadd.f32 %v4444, %v4532
    %v4534 = vpop.f32.mrf.mxu0
    %v4535 = vadd.f32 %v4446, %v4534
    %4536 = vmatmul.bf16.gmra.mxu0 %v2507
    %v4537 = vpop.f32.mrf.mxu0
    %v4538 = vadd.f32 %v4449, %v4537
    %v4539 = vpop.f32.mrf.mxu0
    %v4540 = vadd.f32 %v4451, %v4539
    %4541 = vmatmul.bf16.gmra.mxu0 %v2523
    %v4542 = vpop.f32.mrf.mxu0
    %v4543 = vadd.f32 %v4454, %v4542
    %v4544 = vpop.f32.mrf.mxu0
    %v4545 = vadd.f32 %v4456, %v4544
    %4546 = vmatmul.bf16.gmra.mxu0 %v2539
    %v4547 = vpop.f32.mrf.mxu0
    %v4548 = vadd.f32 %v4459, %v4547
    %v4549 = vpop.f32.mrf.mxu0
    %v4550 = vadd.f32 %v4461, %v4549
    %4551 = vmatmul.bf16.gmra.mxu0 %v2555
    %v4552 = vpop.f32.mrf.mxu0
    %v4553 = vadd.f32 %v4464, %v4552
    %v4554 = vpop.f32.mrf.mxu0
    %v4555 = vadd.f32 %v4466, %v4554
    %4556 = vmatmul.bf16.gmra.mxu0 %v2571
    %v4557 = vpop.f32.mrf.mxu0
    %v4558 = vadd.f32 %v4469, %v4557
    %v4559 = vpop.f32.mrf.mxu0
    %v4560 = vadd.f32 %v4471, %v4559
    %4561 = vmatmul.bf16.gmra.mxu0 %v2587
    %v4562 = vpop.f32.mrf.mxu0
    %v4563 = vadd.f32 %v4474, %v4562
    %v4564 = vpop.f32.mrf.mxu0
    %v4565 = vadd.f32 %v4476, %v4564
    %4566 = vmatmul.bf16.gmra.mxu0 %v2603
    %v4567 = vpop.f32.mrf.mxu0
    %v4568 = vadd.f32 %v4479, %v4567
    %v4569 = vpop.f32.mrf.mxu0
    %v4570 = vadd.f32 %v4481, %v4569
    %4571 = vmatmul.bf16.gmra.mxu0 %v2619
    %v4572 = vpop.f32.mrf.mxu0
    %v4573 = vadd.f32 %v4484, %v4572
    %v4574 = vpop.f32.mrf.mxu0
    %v4575 = vadd.f32 %v4486, %v4574
    %4576 = vmatmul.bf16.gmra.mxu0 %v2635
    %v4577 = vpop.f32.mrf.mxu0
    %v4578 = vadd.f32 %v4489, %v4577
    %v4579 = vpop.f32.mrf.mxu0
    %v4580 = vadd.f32 %v4491, %v4579
    %4581 = vmatmul.bf16.gmra.mxu0 %v2651
    %v4582 = vpop.f32.mrf.mxu0
    %v4583 = vadd.f32 %v4494, %v4582
    %v4584 = vpop.f32.mrf.mxu0
    %v4585 = vadd.f32 %v4496, %v4584
    %4586 = vmatmul.bf16.gmra.mxu0 %v2667
    %v4587 = vpop.f32.mrf.mxu0
    %v4588 = vadd.f32 %v4499, %v4587
    %v4589 = vpop.f32.mrf.mxu0
    %v4590 = vadd.f32 %v4501, %v4589
    %4591 = vdwg.mxu0
    %4592 = vmatpush.bf16.msra.mxu0 %v3533
    %4593 = vmatpush.bf16.msra.mxu0 %v3532
    %4594 = vmatpush.bf16.msra.mxu0 %v3531
    %4595 = vmatpush.bf16.msra.mxu0 %v3530
    %4596 = vmatpush.bf16.msra.mxu0 %v3529
    %4597 = vmatpush.bf16.msra.mxu0 %v3528
    %4598 = vmatpush.bf16.msra.mxu0 %v3527
    %4599 = vmatpush.bf16.msra.mxu0 %v3526
    %4600 = vmatmul.bf16.gmra.mxu0 %v2428
    %v4601 = vpop.f32.mrf.mxu0
    %v4602 = vadd.f32 %v4513, %v4601
    %v4603 = vpop.f32.mrf.mxu0
    %v4604 = vadd.f32 %v4515, %v4603
    %4605 = vmatmul.bf16.gmra.mxu0 %v2444
    %v4606 = vpop.f32.mrf.mxu0
    %v4607 = vadd.f32 %v4518, %v4606
    %v4608 = vpop.f32.mrf.mxu0
    %v4609 = vadd.f32 %v4520, %v4608
    %4610 = vmatmul.bf16.gmra.mxu0 %v2460
    %v4611 = vpop.f32.mrf.mxu0
    %v4612 = vadd.f32 %v4523, %v4611
    %v4613 = vpop.f32.mrf.mxu0
    %v4614 = vadd.f32 %v4525, %v4613
    %4615 = vmatmul.bf16.gmra.mxu0 %v2476
    %v4616 = vpop.f32.mrf.mxu0
    %v4617 = vadd.f32 %v4528, %v4616
    %v4618 = vpop.f32.mrf.mxu0
    %v4619 = vadd.f32 %v4530, %v4618
    %4620 = vmatmul.bf16.gmra.mxu0 %v2492
    %v4621 = vpop.f32.mrf.mxu0
    %v4622 = vadd.f32 %v4533, %v4621
    %v4623 = vpop.f32.mrf.mxu0
    %v4624 = vadd.f32 %v4535, %v4623
    %4625 = vmatmul.bf16.gmra.mxu0 %v2508
    %v4626 = vpop.f32.mrf.mxu0
    %v4627 = vadd.f32 %v4538, %v4626
    %v4628 = vpop.f32.mrf.mxu0
    %v4629 = vadd.f32 %v4540, %v4628
    %4630 = vmatmul.bf16.gmra.mxu0 %v2524
    %v4631 = vpop.f32.mrf.mxu0
    %v4632 = vadd.f32 %v4543, %v4631
    %v4633 = vpop.f32.mrf.mxu0
    %v4634 = vadd.f32 %v4545, %v4633
    %4635 = vmatmul.bf16.gmra.mxu0 %v2540
    %v4636 = vpop.f32.mrf.mxu0
    %v4637 = vadd.f32 %v4548, %v4636
    %v4638 = vpop.f32.mrf.mxu0
    %v4639 = vadd.f32 %v4550, %v4638
    %4640 = vmatmul.bf16.gmra.mxu0 %v2556
    %v4641 = vpop.f32.mrf.mxu0
    %v4642 = vadd.f32 %v4553, %v4641
    %v4643 = vpop.f32.mrf.mxu0
    %v4644 = vadd.f32 %v4555, %v4643
    %4645 = vmatmul.bf16.gmra.mxu0 %v2572
    %v4646 = vpop.f32.mrf.mxu0
    %v4647 = vadd.f32 %v4558, %v4646
    %v4648 = vpop.f32.mrf.mxu0
    %v4649 = vadd.f32 %v4560, %v4648
    %4650 = vmatmul.bf16.gmra.mxu0 %v2588
    %v4651 = vpop.f32.mrf.mxu0
    %v4652 = vadd.f32 %v4563, %v4651
    %v4653 = vpop.f32.mrf.mxu0
    %v4654 = vadd.f32 %v4565, %v4653
    %4655 = vmatmul.bf16.gmra.mxu0 %v2604
    %v4656 = vpop.f32.mrf.mxu0
    %v4657 = vadd.f32 %v4568, %v4656
    %v4658 = vpop.f32.mrf.mxu0
    %v4659 = vadd.f32 %v4570, %v4658
    %4660 = vmatmul.bf16.gmra.mxu0 %v2620
    %v4661 = vpop.f32.mrf.mxu0
    %v4662 = vadd.f32 %v4573, %v4661
    %v4663 = vpop.f32.mrf.mxu0
    %v4664 = vadd.f32 %v4575, %v4663
    %4665 = vmatmul.bf16.gmra.mxu0 %v2636
    %v4666 = vpop.f32.mrf.mxu0
    %v4667 = vadd.f32 %v4578, %v4666
    %v4668 = vpop.f32.mrf.mxu0
    %v4669 = vadd.f32 %v4580, %v4668
    %4670 = vmatmul.bf16.gmra.mxu0 %v2652
    %v4671 = vpop.f32.mrf.mxu0
    %v4672 = vadd.f32 %v4583, %v4671
    %v4673 = vpop.f32.mrf.mxu0
    %v4674 = vadd.f32 %v4585, %v4673
    %4675 = vmatmul.bf16.gmra.mxu0 %v2668
    %v4676 = vpop.f32.mrf.mxu0
    %v4677 = vadd.f32 %v4588, %v4676
    %v4678 = vpop.f32.mrf.mxu0
    %v4679 = vadd.f32 %v4590, %v4678
    %4680 = vdwg.mxu0
    %4681 = vmatpush.bf16.msra.mxu0 %v3541
    %4682 = vmatpush.bf16.msra.mxu0 %v3540
    %4683 = vmatpush.bf16.msra.mxu0 %v3539
    %4684 = vmatpush.bf16.msra.mxu0 %v3538
    %4685 = vmatpush.bf16.msra.mxu0 %v3537
    %4686 = vmatpush.bf16.msra.mxu0 %v3536
    %4687 = vmatpush.bf16.msra.mxu0 %v3535
    %4688 = vmatpush.bf16.msra.mxu0 %v3534
    %4689 = vmatmul.bf16.gmra.mxu0 %v2429
    %v4690 = vpop.f32.mrf.mxu0
    %v4691 = vadd.f32 %v4602, %v4690
    %v4692 = vpop.f32.mrf.mxu0
    %v4693 = vadd.f32 %v4604, %v4692
    %4694 = vmatmul.bf16.gmra.mxu0 %v2445
    %v4695 = vpop.f32.mrf.mxu0
    %v4696 = vadd.f32 %v4607, %v4695
    %v4697 = vpop.f32.mrf.mxu0
    %v4698 = vadd.f32 %v4609, %v4697
    %4699 = vmatmul.bf16.gmra.mxu0 %v2461
    %v4700 = vpop.f32.mrf.mxu0
    %v4701 = vadd.f32 %v4612, %v4700
    %v4702 = vpop.f32.mrf.mxu0
    %v4703 = vadd.f32 %v4614, %v4702
    %4704 = vmatmul.bf16.gmra.mxu0 %v2477
    %v4705 = vpop.f32.mrf.mxu0
    %v4706 = vadd.f32 %v4617, %v4705
    %v4707 = vpop.f32.mrf.mxu0
    %v4708 = vadd.f32 %v4619, %v4707
    %4709 = vmatmul.bf16.gmra.mxu0 %v2493
    %v4710 = vpop.f32.mrf.mxu0
    %v4711 = vadd.f32 %v4622, %v4710
    %v4712 = vpop.f32.mrf.mxu0
    %v4713 = vadd.f32 %v4624, %v4712
    %4714 = vmatmul.bf16.gmra.mxu0 %v2509
    %v4715 = vpop.f32.mrf.mxu0
    %v4716 = vadd.f32 %v4627, %v4715
    %v4717 = vpop.f32.mrf.mxu0
    %v4718 = vadd.f32 %v4629, %v4717
    %4719 = vmatmul.bf16.gmra.mxu0 %v2525
    %v4720 = vpop.f32.mrf.mxu0
    %v4721 = vadd.f32 %v4632, %v4720
    %v4722 = vpop.f32.mrf.mxu0
    %v4723 = vadd.f32 %v4634, %v4722
    %4724 = vmatmul.bf16.gmra.mxu0 %v2541
    %v4725 = vpop.f32.mrf.mxu0
    %v4726 = vadd.f32 %v4637, %v4725
    %v4727 = vpop.f32.mrf.mxu0
    %v4728 = vadd.f32 %v4639, %v4727
    %4729 = vmatmul.bf16.gmra.mxu0 %v2557
    %v4730 = vpop.f32.mrf.mxu0
    %v4731 = vadd.f32 %v4642, %v4730
    %v4732 = vpop.f32.mrf.mxu0
    %v4733 = vadd.f32 %v4644, %v4732
    %4734 = vmatmul.bf16.gmra.mxu0 %v2573
    %v4735 = vpop.f32.mrf.mxu0
    %v4736 = vadd.f32 %v4647, %v4735
    %v4737 = vpop.f32.mrf.mxu0
    %v4738 = vadd.f32 %v4649, %v4737
    %4739 = vmatmul.bf16.gmra.mxu0 %v2589
    %v4740 = vpop.f32.mrf.mxu0
    %v4741 = vadd.f32 %v4652, %v4740
    %v4742 = vpop.f32.mrf.mxu0
    %v4743 = vadd.f32 %v4654, %v4742
    %4744 = vmatmul.bf16.gmra.mxu0 %v2605
    %v4745 = vpop.f32.mrf.mxu0
    %v4746 = vadd.f32 %v4657, %v4745
    %v4747 = vpop.f32.mrf.mxu0
    %v4748 = vadd.f32 %v4659, %v4747
    %4749 = vmatmul.bf16.gmra.mxu0 %v2621
    %v4750 = vpop.f32.mrf.mxu0
    %v4751 = vadd.f32 %v4662, %v4750
    %v4752 = vpop.f32.mrf.mxu0
    %v4753 = vadd.f32 %v4664, %v4752
    %4754 = vmatmul.bf16.gmra.mxu0 %v2637
    %v4755 = vpop.f32.mrf.mxu0
    %v4756 = vadd.f32 %v4667, %v4755
    %v4757 = vpop.f32.mrf.mxu0
    %v4758 = vadd.f32 %v4669, %v4757
    %4759 = vmatmul.bf16.gmra.mxu0 %v2653
    %v4760 = vpop.f32.mrf.mxu0
    %v4761 = vadd.f32 %v4672, %v4760
    %v4762 = vpop.f32.mrf.mxu0
    %v4763 = vadd.f32 %v4674, %v4762
    %4764 = vmatmul.bf16.gmra.mxu0 %v2669
    %v4765 = vpop.f32.mrf.mxu0
    %v4766 = vadd.f32 %v4677, %v4765
    %v4767 = vpop.f32.mrf.mxu0
    %v4768 = vadd.f32 %v4679, %v4767
    %4769 = vdwg.mxu0
    %4770 = vmatpush.bf16.msra.mxu0 %v3549
    %4771 = vmatpush.bf16.msra.mxu0 %v3548
    %4772 = vmatpush.bf16.msra.mxu0 %v3547
    %4773 = vmatpush.bf16.msra.mxu0 %v3546
    %4774 = vmatpush.bf16.msra.mxu0 %v3545
    %4775 = vmatpush.bf16.msra.mxu0 %v3544
    %4776 = vmatpush.bf16.msra.mxu0 %v3543
    %4777 = vmatpush.bf16.msra.mxu0 %v3542
    %4778 = vmatmul.bf16.gmra.mxu0 %v2430
    %v4779 = vpop.f32.mrf.mxu0
    %v4780 = vadd.f32 %v4691, %v4779
    %v4781 = vpop.f32.mrf.mxu0
    %v4782 = vadd.f32 %v4693, %v4781
    %4783 = vmatmul.bf16.gmra.mxu0 %v2446
    %v4784 = vpop.f32.mrf.mxu0
    %v4785 = vadd.f32 %v4696, %v4784
    %v4786 = vpop.f32.mrf.mxu0
    %v4787 = vadd.f32 %v4698, %v4786
    %4788 = vmatmul.bf16.gmra.mxu0 %v2462
    %v4789 = vpop.f32.mrf.mxu0
    %v4790 = vadd.f32 %v4701, %v4789
    %v4791 = vpop.f32.mrf.mxu0
    %v4792 = vadd.f32 %v4703, %v4791
    %4793 = vmatmul.bf16.gmra.mxu0 %v2478
    %v4794 = vpop.f32.mrf.mxu0
    %v4795 = vadd.f32 %v4706, %v4794
    %v4796 = vpop.f32.mrf.mxu0
    %v4797 = vadd.f32 %v4708, %v4796
    %4798 = vmatmul.bf16.gmra.mxu0 %v2494
    %v4799 = vpop.f32.mrf.mxu0
    %v4800 = vadd.f32 %v4711, %v4799
    %v4801 = vpop.f32.mrf.mxu0
    %v4802 = vadd.f32 %v4713, %v4801
    %4803 = vmatmul.bf16.gmra.mxu0 %v2510
    %v4804 = vpop.f32.mrf.mxu0
    %v4805 = vadd.f32 %v4716, %v4804
    %v4806 = vpop.f32.mrf.mxu0
    %v4807 = vadd.f32 %v4718, %v4806
    %4808 = vmatmul.bf16.gmra.mxu0 %v2526
    %v4809 = vpop.f32.mrf.mxu0
    %v4810 = vadd.f32 %v4721, %v4809
    %v4811 = vpop.f32.mrf.mxu0
    %v4812 = vadd.f32 %v4723, %v4811
    %4813 = vmatmul.bf16.gmra.mxu0 %v2542
    %v4814 = vpop.f32.mrf.mxu0
    %v4815 = vadd.f32 %v4726, %v4814
    %v4816 = vpop.f32.mrf.mxu0
    %v4817 = vadd.f32 %v4728, %v4816
    %4818 = vmatmul.bf16.gmra.mxu0 %v2558
    %v4819 = vpop.f32.mrf.mxu0
    %v4820 = vadd.f32 %v4731, %v4819
    %v4821 = vpop.f32.mrf.mxu0
    %v4822 = vadd.f32 %v4733, %v4821
    %4823 = vmatmul.bf16.gmra.mxu0 %v2574
    %v4824 = vpop.f32.mrf.mxu0
    %v4825 = vadd.f32 %v4736, %v4824
    %v4826 = vpop.f32.mrf.mxu0
    %v4827 = vadd.f32 %v4738, %v4826
    %4828 = vmatmul.bf16.gmra.mxu0 %v2590
    %v4829 = vpop.f32.mrf.mxu0
    %v4830 = vadd.f32 %v4741, %v4829
    %v4831 = vpop.f32.mrf.mxu0
    %v4832 = vadd.f32 %v4743, %v4831
    %4833 = vmatmul.bf16.gmra.mxu0 %v2606
    %v4834 = vpop.f32.mrf.mxu0
    %v4835 = vadd.f32 %v4746, %v4834
    %v4836 = vpop.f32.mrf.mxu0
    %v4837 = vadd.f32 %v4748, %v4836
    %4838 = vmatmul.bf16.gmra.mxu0 %v2622
    %v4839 = vpop.f32.mrf.mxu0
    %v4840 = vadd.f32 %v4751, %v4839
    %v4841 = vpop.f32.mrf.mxu0
    %v4842 = vadd.f32 %v4753, %v4841
    %4843 = vmatmul.bf16.gmra.mxu0 %v2638
    %v4844 = vpop.f32.mrf.mxu0
    %v4845 = vadd.f32 %v4756, %v4844
    %v4846 = vpop.f32.mrf.mxu0
    %v4847 = vadd.f32 %v4758, %v4846
    %4848 = vmatmul.bf16.gmra.mxu0 %v2654
    %v4849 = vpop.f32.mrf.mxu0
    %v4850 = vadd.f32 %v4761, %v4849
    %v4851 = vpop.f32.mrf.mxu0
    %v4852 = vadd.f32 %v4763, %v4851
    %4853 = vmatmul.bf16.gmra.mxu0 %v2670
    %v4854 = vpop.f32.mrf.mxu0
    %v4855 = vadd.f32 %v4766, %v4854
    %v4856 = vpop.f32.mrf.mxu0
    %v4857 = vadd.f32 %v4768, %v4856
    %4858 = vdwg.mxu0
    %4859 = vmatpush.bf16.msra.mxu0 %v3557
    %4860 = vmatpush.bf16.msra.mxu0 %v3556
    %4861 = vmatpush.bf16.msra.mxu0 %v3555
    %4862 = vmatpush.bf16.msra.mxu0 %v3554
    %4863 = vmatpush.bf16.msra.mxu0 %v3553
    %4864 = vmatpush.bf16.msra.mxu0 %v3552
    %4865 = vmatpush.bf16.msra.mxu0 %v3551
    %4866 = vmatpush.bf16.msra.mxu0 %v3550
    %4867 = vmatmul.bf16.gmra.mxu0 %v2431
    %v4868 = vpop.f32.mrf.mxu0
    %v4869 = vadd.f32 %v4780, %v4868
    %v4870 = vpop.f32.mrf.mxu0
    %v4871 = vadd.f32 %v4782, %v4870
    %4872 = vmatmul.bf16.gmra.mxu0 %v2447
    %v4873 = vpop.f32.mrf.mxu0
    %v4874 = vadd.f32 %v4785, %v4873
    %v4875 = vpop.f32.mrf.mxu0
    %v4876 = vadd.f32 %v4787, %v4875
    %4877 = vmatmul.bf16.gmra.mxu0 %v2463
    %v4878 = vpop.f32.mrf.mxu0
    %v4879 = vadd.f32 %v4790, %v4878
    %v4880 = vpop.f32.mrf.mxu0
    %v4881 = vadd.f32 %v4792, %v4880
    %4882 = vmatmul.bf16.gmra.mxu0 %v2479
    %v4883 = vpop.f32.mrf.mxu0
    %v4884 = vadd.f32 %v4795, %v4883
    %v4885 = vpop.f32.mrf.mxu0
    %v4886 = vadd.f32 %v4797, %v4885
    %4887 = vmatmul.bf16.gmra.mxu0 %v2495
    %v4888 = vpop.f32.mrf.mxu0
    %v4889 = vadd.f32 %v4800, %v4888
    %v4890 = vpop.f32.mrf.mxu0
    %v4891 = vadd.f32 %v4802, %v4890
    %4892 = vmatmul.bf16.gmra.mxu0 %v2511
    %v4893 = vpop.f32.mrf.mxu0
    %v4894 = vadd.f32 %v4805, %v4893
    %v4895 = vpop.f32.mrf.mxu0
    %v4896 = vadd.f32 %v4807, %v4895
    %4897 = vmatmul.bf16.gmra.mxu0 %v2527
    %v4898 = vpop.f32.mrf.mxu0
    %v4899 = vadd.f32 %v4810, %v4898
    %v4900 = vpop.f32.mrf.mxu0
    %v4901 = vadd.f32 %v4812, %v4900
    %4902 = vmatmul.bf16.gmra.mxu0 %v2543
    %v4903 = vpop.f32.mrf.mxu0
    %v4904 = vadd.f32 %v4815, %v4903
    %v4905 = vpop.f32.mrf.mxu0
    %v4906 = vadd.f32 %v4817, %v4905
    %4907 = vmatmul.bf16.gmra.mxu0 %v2559
    %v4908 = vpop.f32.mrf.mxu0
    %v4909 = vadd.f32 %v4820, %v4908
    %v4910 = vpop.f32.mrf.mxu0
    %v4911 = vadd.f32 %v4822, %v4910
    %4912 = vmatmul.bf16.gmra.mxu0 %v2575
    %v4913 = vpop.f32.mrf.mxu0
    %v4914 = vadd.f32 %v4825, %v4913
    %v4915 = vpop.f32.mrf.mxu0
    %v4916 = vadd.f32 %v4827, %v4915
    %4917 = vmatmul.bf16.gmra.mxu0 %v2591
    %v4918 = vpop.f32.mrf.mxu0
    %v4919 = vadd.f32 %v4830, %v4918
    %v4920 = vpop.f32.mrf.mxu0
    %v4921 = vadd.f32 %v4832, %v4920
    %4922 = vmatmul.bf16.gmra.mxu0 %v2607
    %v4923 = vpop.f32.mrf.mxu0
    %v4924 = vadd.f32 %v4835, %v4923
    %v4925 = vpop.f32.mrf.mxu0
    %v4926 = vadd.f32 %v4837, %v4925
    %4927 = vmatmul.bf16.gmra.mxu0 %v2623
    %v4928 = vpop.f32.mrf.mxu0
    %v4929 = vadd.f32 %v4840, %v4928
    %v4930 = vpop.f32.mrf.mxu0
    %v4931 = vadd.f32 %v4842, %v4930
    %4932 = vmatmul.bf16.gmra.mxu0 %v2639
    %v4933 = vpop.f32.mrf.mxu0
    %v4934 = vadd.f32 %v4845, %v4933
    %v4935 = vpop.f32.mrf.mxu0
    %v4936 = vadd.f32 %v4847, %v4935
    %4937 = vmatmul.bf16.gmra.mxu0 %v2655
    %v4938 = vpop.f32.mrf.mxu0
    %v4939 = vadd.f32 %v4850, %v4938
    %v4940 = vpop.f32.mrf.mxu0
    %v4941 = vadd.f32 %v4852, %v4940
    %4942 = vmatmul.bf16.gmra.mxu0 %v2671
    %v4943 = vpop.f32.mrf.mxu0
    %v4944 = vadd.f32 %v4855, %v4943
    %v4945 = vpop.f32.mrf.mxu0
    %v4946 = vadd.f32 %v4857, %v4945
    %4947 = vdwg.mxu0
    %4948 = vmatpush.bf16.msra.mxu0 %v3565
    %4949 = vmatpush.bf16.msra.mxu0 %v3564
    %4950 = vmatpush.bf16.msra.mxu0 %v3563
    %4951 = vmatpush.bf16.msra.mxu0 %v3562
    %4952 = vmatpush.bf16.msra.mxu0 %v3561
    %4953 = vmatpush.bf16.msra.mxu0 %v3560
    %4954 = vmatpush.bf16.msra.mxu0 %v3559
    %4955 = vmatpush.bf16.msra.mxu0 %v3558
    %4956 = vmatmul.bf16.gmra.mxu0 %v2432
    %v4957 = vpop.f32.mrf.mxu0
    %v4958 = vadd.f32 %v4869, %v4957
    %v4959 = vpop.f32.mrf.mxu0
    %v4960 = vadd.f32 %v4871, %v4959
    %4961 = vmatmul.bf16.gmra.mxu0 %v2448
    %v4962 = vpop.f32.mrf.mxu0
    %v4963 = vadd.f32 %v4874, %v4962
    %v4964 = vpop.f32.mrf.mxu0
    %v4965 = vadd.f32 %v4876, %v4964
    %4966 = vmatmul.bf16.gmra.mxu0 %v2464
    %v4967 = vpop.f32.mrf.mxu0
    %v4968 = vadd.f32 %v4879, %v4967
    %v4969 = vpop.f32.mrf.mxu0
    %v4970 = vadd.f32 %v4881, %v4969
    %4971 = vmatmul.bf16.gmra.mxu0 %v2480
    %v4972 = vpop.f32.mrf.mxu0
    %v4973 = vadd.f32 %v4884, %v4972
    %v4974 = vpop.f32.mrf.mxu0
    %v4975 = vadd.f32 %v4886, %v4974
    %4976 = vmatmul.bf16.gmra.mxu0 %v2496
    %v4977 = vpop.f32.mrf.mxu0
    %v4978 = vadd.f32 %v4889, %v4977
    %v4979 = vpop.f32.mrf.mxu0
    %v4980 = vadd.f32 %v4891, %v4979
    %4981 = vmatmul.bf16.gmra.mxu0 %v2512
    %v4982 = vpop.f32.mrf.mxu0
    %v4983 = vadd.f32 %v4894, %v4982
    %v4984 = vpop.f32.mrf.mxu0
    %v4985 = vadd.f32 %v4896, %v4984
    %4986 = vmatmul.bf16.gmra.mxu0 %v2528
    %v4987 = vpop.f32.mrf.mxu0
    %v4988 = vadd.f32 %v4899, %v4987
    %v4989 = vpop.f32.mrf.mxu0
    %v4990 = vadd.f32 %v4901, %v4989
    %4991 = vmatmul.bf16.gmra.mxu0 %v2544
    %v4992 = vpop.f32.mrf.mxu0
    %v4993 = vadd.f32 %v4904, %v4992
    %v4994 = vpop.f32.mrf.mxu0
    %v4995 = vadd.f32 %v4906, %v4994
    %4996 = vmatmul.bf16.gmra.mxu0 %v2560
    %v4997 = vpop.f32.mrf.mxu0
    %v4998 = vadd.f32 %v4909, %v4997
    %v4999 = vpop.f32.mrf.mxu0
    %v5000 = vadd.f32 %v4911, %v4999
    %5001 = vmatmul.bf16.gmra.mxu0 %v2576
    %v5002 = vpop.f32.mrf.mxu0
    %v5003 = vadd.f32 %v4914, %v5002
    %v5004 = vpop.f32.mrf.mxu0
    %v5005 = vadd.f32 %v4916, %v5004
    %5006 = vmatmul.bf16.gmra.mxu0 %v2592
    %v5007 = vpop.f32.mrf.mxu0
    %v5008 = vadd.f32 %v4919, %v5007
    %v5009 = vpop.f32.mrf.mxu0
    %v5010 = vadd.f32 %v4921, %v5009
    %5011 = vmatmul.bf16.gmra.mxu0 %v2608
    %v5012 = vpop.f32.mrf.mxu0
    %v5013 = vadd.f32 %v4924, %v5012
    %v5014 = vpop.f32.mrf.mxu0
    %v5015 = vadd.f32 %v4926, %v5014
    %5016 = vmatmul.bf16.gmra.mxu0 %v2624
    %v5017 = vpop.f32.mrf.mxu0
    %v5018 = vadd.f32 %v4929, %v5017
    %v5019 = vpop.f32.mrf.mxu0
    %v5020 = vadd.f32 %v4931, %v5019
    %5021 = vmatmul.bf16.gmra.mxu0 %v2640
    %v5022 = vpop.f32.mrf.mxu0
    %v5023 = vadd.f32 %v4934, %v5022
    %v5024 = vpop.f32.mrf.mxu0
    %v5025 = vadd.f32 %v4936, %v5024
    %5026 = vmatmul.bf16.gmra.mxu0 %v2656
    %v5027 = vpop.f32.mrf.mxu0
    %v5028 = vadd.f32 %v4939, %v5027
    %v5029 = vpop.f32.mrf.mxu0
    %v5030 = vadd.f32 %v4941, %v5029
    %5031 = vmatmul.bf16.gmra.mxu0 %v2672
    %v5032 = vpop.f32.mrf.mxu0
    %v5033 = vadd.f32 %v4944, %v5032
    %v5034 = vpop.f32.mrf.mxu0
    %v5035 = vadd.f32 %v4946, %v5034
    %5036 = vdwg.mxu0
    %5037 = vmatpush.bf16.msra.mxu0 %v3573
    %5038 = vmatpush.bf16.msra.mxu0 %v3572
    %5039 = vmatpush.bf16.msra.mxu0 %v3571
    %5040 = vmatpush.bf16.msra.mxu0 %v3570
    %5041 = vmatpush.bf16.msra.mxu0 %v3569
    %5042 = vmatpush.bf16.msra.mxu0 %v3568
    %5043 = vmatpush.bf16.msra.mxu0 %v3567
    %5044 = vmatpush.bf16.msra.mxu0 %v3566
    %5045 = vmatmul.bf16.gmra.mxu0 %v2433
    %v5046 = vpop.f32.mrf.mxu0
    %v5047 = vadd.f32 %v4958, %v5046
    %v5048 = vpop.f32.mrf.mxu0
    %v5049 = vadd.f32 %v4960, %v5048
    %5050 = vmatmul.bf16.gmra.mxu0 %v2449
    %v5051 = vpop.f32.mrf.mxu0
    %v5052 = vadd.f32 %v4963, %v5051
    %v5053 = vpop.f32.mrf.mxu0
    %v5054 = vadd.f32 %v4965, %v5053
    %5055 = vmatmul.bf16.gmra.mxu0 %v2465
    %v5056 = vpop.f32.mrf.mxu0
    %v5057 = vadd.f32 %v4968, %v5056
    %v5058 = vpop.f32.mrf.mxu0
    %v5059 = vadd.f32 %v4970, %v5058
    %5060 = vmatmul.bf16.gmra.mxu0 %v2481
    %v5061 = vpop.f32.mrf.mxu0
    %v5062 = vadd.f32 %v4973, %v5061
    %v5063 = vpop.f32.mrf.mxu0
    %v5064 = vadd.f32 %v4975, %v5063
    %5065 = vmatmul.bf16.gmra.mxu0 %v2497
    %v5066 = vpop.f32.mrf.mxu0
    %v5067 = vadd.f32 %v4978, %v5066
    %v5068 = vpop.f32.mrf.mxu0
    %v5069 = vadd.f32 %v4980, %v5068
    %5070 = vmatmul.bf16.gmra.mxu0 %v2513
    %v5071 = vpop.f32.mrf.mxu0
    %v5072 = vadd.f32 %v4983, %v5071
    %v5073 = vpop.f32.mrf.mxu0
    %v5074 = vadd.f32 %v4985, %v5073
    %5075 = vmatmul.bf16.gmra.mxu0 %v2529
    %v5076 = vpop.f32.mrf.mxu0
    %v5077 = vadd.f32 %v4988, %v5076
    %v5078 = vpop.f32.mrf.mxu0
    %v5079 = vadd.f32 %v4990, %v5078
    %5080 = vmatmul.bf16.gmra.mxu0 %v2545
    %v5081 = vpop.f32.mrf.mxu0
    %v5082 = vadd.f32 %v4993, %v5081
    %v5083 = vpop.f32.mrf.mxu0
    %v5084 = vadd.f32 %v4995, %v5083
    %5085 = vmatmul.bf16.gmra.mxu0 %v2561
    %v5086 = vpop.f32.mrf.mxu0
    %v5087 = vadd.f32 %v4998, %v5086
    %v5088 = vpop.f32.mrf.mxu0
    %v5089 = vadd.f32 %v5000, %v5088
    %5090 = vmatmul.bf16.gmra.mxu0 %v2577
    %v5091 = vpop.f32.mrf.mxu0
    %v5092 = vadd.f32 %v5003, %v5091
    %v5093 = vpop.f32.mrf.mxu0
    %v5094 = vadd.f32 %v5005, %v5093
    %5095 = vmatmul.bf16.gmra.mxu0 %v2593
    %v5096 = vpop.f32.mrf.mxu0
    %v5097 = vadd.f32 %v5008, %v5096
    %v5098 = vpop.f32.mrf.mxu0
    %v5099 = vadd.f32 %v5010, %v5098
    %5100 = vmatmul.bf16.gmra.mxu0 %v2609
    %v5101 = vpop.f32.mrf.mxu0
    %v5102 = vadd.f32 %v5013, %v5101
    %v5103 = vpop.f32.mrf.mxu0
    %v5104 = vadd.f32 %v5015, %v5103
    %5105 = vmatmul.bf16.gmra.mxu0 %v2625
    %v5106 = vpop.f32.mrf.mxu0
    %v5107 = vadd.f32 %v5018, %v5106
    %v5108 = vpop.f32.mrf.mxu0
    %v5109 = vadd.f32 %v5020, %v5108
    %5110 = vmatmul.bf16.gmra.mxu0 %v2641
    %v5111 = vpop.f32.mrf.mxu0
    %v5112 = vadd.f32 %v5023, %v5111
    %v5113 = vpop.f32.mrf.mxu0
    %v5114 = vadd.f32 %v5025, %v5113
    %5115 = vmatmul.bf16.gmra.mxu0 %v2657
    %v5116 = vpop.f32.mrf.mxu0
    %v5117 = vadd.f32 %v5028, %v5116
    %v5118 = vpop.f32.mrf.mxu0
    %v5119 = vadd.f32 %v5030, %v5118
    %5120 = vmatmul.bf16.gmra.mxu0 %v2673
    %v5121 = vpop.f32.mrf.mxu0
    %v5122 = vadd.f32 %v5033, %v5121
    %v5123 = vpop.f32.mrf.mxu0
    %v5124 = vadd.f32 %v5035, %v5123
    %5125 = vdwg.mxu0
    %v5126 = vmax.f32 %v5047, 0.0
    %v5127 = vmax.f32 %v5049, 0.0
    %v5128 = vmax.f32 %v5052, 0.0
    %v5129 = vmax.f32 %v5054, 0.0
    %v5130 = vmax.f32 %v5057, 0.0
    %v5131 = vmax.f32 %v5059, 0.0
    %v5132 = vmax.f32 %v5062, 0.0
    %v5133 = vmax.f32 %v5064, 0.0
    %v5134 = vmax.f32 %v5067, 0.0
    %v5135 = vmax.f32 %v5069, 0.0
    %v5136 = vmax.f32 %v5072, 0.0
    %v5137 = vmax.f32 %v5074, 0.0
    %v5138 = vmax.f32 %v5077, 0.0
    %v5139 = vmax.f32 %v5079, 0.0
    %v5140 = vmax.f32 %v5082, 0.0
    %v5141 = vmax.f32 %v5084, 0.0
    %v5142 = vmax.f32 %v5087, 0.0
    %v5143 = vmax.f32 %v5089, 0.0
    %v5144 = vmax.f32 %v5092, 0.0
    %v5145 = vmax.f32 %v5094, 0.0
    %v5146 = vmax.f32 %v5097, 0.0
    %v5147 = vmax.f32 %v5099, 0.0
    %v5148 = vmax.f32 %v5102, 0.0
    %v5149 = vmax.f32 %v5104, 0.0
    %v5150 = vmax.f32 %v5107, 0.0
    %v5151 = vmax.f32 %v5109, 0.0
    %v5152 = vmax.f32 %v5112, 0.0
    %v5153 = vmax.f32 %v5114, 0.0
    %v5154 = vmax.f32 %v5117, 0.0
    %v5155 = vmax.f32 %v5119, 0.0
    %v5156 = vmax.f32 %v5122, 0.0
    %v5157 = vmax.f32 %v5124, 0.0
    %v5158 = vld [vmem:[%s5] sm:$0x1]
    %v5160 = vperm.slane %v5158, 0
    %v5162 = vmul.f32 %v5126, %v5160
    %v5163 = vmul.f32 %v5127, %v5160
    %v5164 = vmul.f32 %v5128, %v5160
    %v5165 = vmul.f32 %v5129, %v5160
    %v5166 = vmul.f32 %v5130, %v5160
    %v5167 = vmul.f32 %v5131, %v5160
    %v5168 = vmul.f32 %v5132, %v5160
    %v5169 = vmul.f32 %v5133, %v5160
    %v5170 = vmul.f32 %v5134, %v5160
    %v5171 = vmul.f32 %v5135, %v5160
    %v5172 = vmul.f32 %v5136, %v5160
    %v5173 = vmul.f32 %v5137, %v5160
    %v5174 = vmul.f32 %v5138, %v5160
    %v5175 = vmul.f32 %v5139, %v5160
    %v5176 = vmul.f32 %v5140, %v5160
    %v5177 = vmul.f32 %v5141, %v5160
    %v5178 = vmul.f32 %v5142, %v5160
    %v5179 = vmul.f32 %v5143, %v5160
    %v5180 = vmul.f32 %v5144, %v5160
    %v5181 = vmul.f32 %v5145, %v5160
    %v5182 = vmul.f32 %v5146, %v5160
    %v5183 = vmul.f32 %v5147, %v5160
    %v5184 = vmul.f32 %v5148, %v5160
    %v5185 = vmul.f32 %v5149, %v5160
    %v5186 = vmul.f32 %v5150, %v5160
    %v5187 = vmul.f32 %v5151, %v5160
    %v5188 = vmul.f32 %v5152, %v5160
    %v5189 = vmul.f32 %v5153, %v5160
    %v5190 = vmul.f32 %v5154, %v5160
    %v5191 = vmul.f32 %v5155, %v5160
    %v5192 = vmul.f32 %v5156, %v5160
    %v5193 = vmul.f32 %v5157, %v5160
    %5194 = vadd.xlane.f32.xlu0 %v5162
    %v5195 = vpop.xlane.xlu0 %5194
    %5196 = vadd.xlane.f32.xlu0 %v5163
    %v5197 = vpop.xlane.xlu0 %5196
    %5198 = vadd.xlane.f32.xlu0 %v5164
    %v5199 = vpop.xlane.xlu0 %5198
    %5200 = vadd.xlane.f32.xlu0 %v5165
    %v5201 = vpop.xlane.xlu0 %5200
    %5202 = vadd.xlane.f32.xlu0 %v5166
    %v5203 = vpop.xlane.xlu0 %5202
    %5204 = vadd.xlane.f32.xlu0 %v5167
    %v5205 = vpop.xlane.xlu0 %5204
    %5206 = vadd.xlane.f32.xlu0 %v5168
    %v5207 = vpop.xlane.xlu0 %5206
    %5208 = vadd.xlane.f32.xlu0 %v5169
    %v5209 = vpop.xlane.xlu0 %5208
    %5210 = vadd.xlane.f32.xlu0 %v5170
    %v5211 = vpop.xlane.xlu0 %5210
    %5212 = vadd.xlane.f32.xlu0 %v5171
    %v5213 = vpop.xlane.xlu0 %5212
    %5214 = vadd.xlane.f32.xlu0 %v5172
    %v5215 = vpop.xlane.xlu0 %5214
    %5216 = vadd.xlane.f32.xlu0 %v5173
    %v5217 = vpop.xlane.xlu0 %5216
    %5218 = vadd.xlane.f32.xlu0 %v5174
    %v5219 = vpop.xlane.xlu0 %5218
    %5220 = vadd.xlane.f32.xlu0 %v5175
    %v5221 = vpop.xlane.xlu0 %5220
    %5222 = vadd.xlane.f32.xlu0 %v5176
    %v5223 = vpop.xlane.xlu0 %5222
    %5224 = vadd.xlane.f32.xlu0 %v5177
    %v5225 = vpop.xlane.xlu0 %5224
    %5226 = vadd.xlane.f32.xlu0 %v5178
    %v5227 = vpop.xlane.xlu0 %5226
    %5228 = vadd.xlane.f32.xlu0 %v5179
    %v5229 = vpop.xlane.xlu0 %5228
    %5230 = vadd.xlane.f32.xlu0 %v5180
    %v5231 = vpop.xlane.xlu0 %5230
    %5232 = vadd.xlane.f32.xlu0 %v5181
    %v5233 = vpop.xlane.xlu0 %5232
    %5234 = vadd.xlane.f32.xlu0 %v5182
    %v5235 = vpop.xlane.xlu0 %5234
    %5236 = vadd.xlane.f32.xlu0 %v5183
    %v5237 = vpop.xlane.xlu0 %5236
    %5238 = vadd.xlane.f32.xlu0 %v5184
    %v5239 = vpop.xlane.xlu0 %5238
    %5240 = vadd.xlane.f32.xlu0 %v5185
    %v5241 = vpop.xlane.xlu0 %5240
    %5242 = vadd.xlane.f32.xlu0 %v5186
    %v5243 = vpop.xlane.xlu0 %5242
    %5244 = vadd.xlane.f32.xlu0 %v5187
    %v5245 = vpop.xlane.xlu0 %5244
    %5246 = vadd.xlane.f32.xlu0 %v5188
    %v5247 = vpop.xlane.xlu0 %5246
    %5248 = vadd.xlane.f32.xlu0 %v5189
    %v5249 = vpop.xlane.xlu0 %5248
    %5250 = vadd.xlane.f32.xlu0 %v5190
    %v5251 = vpop.xlane.xlu0 %5250
    %5252 = vadd.xlane.f32.xlu0 %v5191
    %v5253 = vpop.xlane.xlu0 %5252
    %5254 = vadd.xlane.f32.xlu0 %v5192
    %v5255 = vpop.xlane.xlu0 %5254
    %5256 = vadd.xlane.f32.xlu0 %v5193
    %v5257 = vpop.xlane.xlu0 %5256
    %v5258 = vld [vmem:[#allocation2] sm:$0x1]
    %v5260 = vperm.slane %v5258, 0
    %v5262 = vadd.f32 %v5195, %v5260
    %v5263 = vadd.f32 %v5197, %v5260
    %v5264 = vadd.f32 %v5199, %v5260
    %v5265 = vadd.f32 %v5201, %v5260
    %v5266 = vadd.f32 %v5203, %v5260
    %v5267 = vadd.f32 %v5205, %v5260
    %v5268 = vadd.f32 %v5207, %v5260
    %v5269 = vadd.f32 %v5209, %v5260
    %v5270 = vadd.f32 %v5211, %v5260
    %v5271 = vadd.f32 %v5213, %v5260
    %v5272 = vadd.f32 %v5215, %v5260
    %v5273 = vadd.f32 %v5217, %v5260
    %v5274 = vadd.f32 %v5219, %v5260
    %v5275 = vadd.f32 %v5221, %v5260
    %v5276 = vadd.f32 %v5223, %v5260
    %v5277 = vadd.f32 %v5225, %v5260
    %v5278 = vadd.f32 %v5227, %v5260
    %v5279 = vadd.f32 %v5229, %v5260
    %v5280 = vadd.f32 %v5231, %v5260
    %v5281 = vadd.f32 %v5233, %v5260
    %v5282 = vadd.f32 %v5235, %v5260
    %v5283 = vadd.f32 %v5237, %v5260
    %v5284 = vadd.f32 %v5239, %v5260
    %v5285 = vadd.f32 %v5241, %v5260
    %v5286 = vadd.f32 %v5243, %v5260
    %v5287 = vadd.f32 %v5245, %v5260
    %v5288 = vadd.f32 %v5247, %v5260
    %v5289 = vadd.f32 %v5249, %v5260
    %v5290 = vadd.f32 %v5251, %v5260
    %v5291 = vadd.f32 %v5253, %v5260
    %v5292 = vadd.f32 %v5255, %v5260
    %v5293 = vadd.f32 %v5257, %v5260
    %vm5294 = vcmask 7168
    %5295 = vst.msk [vmem:[%s7] sm:$0xff] %vm5294, %v5262
    %5296 = vst.msk [vmem:[%s7 + $0x8] sm:$0xff] %vm5294, %v5263
    %5297 = vst.msk [vmem:[%s7 + $0x10] sm:$0xff] %vm5294, %v5264
    %5298 = vst.msk [vmem:[%s7 + $0x18] sm:$0xff] %vm5294, %v5265
    %5299 = vst.msk [vmem:[%s7 + $0x20] sm:$0xff] %vm5294, %v5266
    %5300 = vst.msk [vmem:[%s7 + $0x28] sm:$0xff] %vm5294, %v5267
    %5301 = vst.msk [vmem:[%s7 + $0x30] sm:$0xff] %vm5294, %v5268
    %5302 = vst.msk [vmem:[%s7 + $0x38] sm:$0xff] %vm5294, %v5269
    %5303 = vst.msk [vmem:[%s7 + $0x40] sm:$0xff] %vm5294, %v5270
    %5304 = vst.msk [vmem:[%s7 + $0x48] sm:$0xff] %vm5294, %v5271
    %5305 = vst.msk [vmem:[%s7 + $0x50] sm:$0xff] %vm5294, %v5272
    %5306 = vst.msk [vmem:[%s7 + $0x58] sm:$0xff] %vm5294, %v5273
    %5307 = vst.msk [vmem:[%s7 + $0x60] sm:$0xff] %vm5294, %v5274
    %5308 = vst.msk [vmem:[%s7 + $0x68] sm:$0xff] %vm5294, %v5275
    %5309 = vst.msk [vmem:[%s7 + $0x70] sm:$0xff] %vm5294, %v5276
    %5310 = vst.msk [vmem:[%s7 + $0x78] sm:$0xff] %vm5294, %v5277
    %5311 = vst.msk [vmem:[%s7 + $0x80] sm:$0xff] %vm5294, %v5278
    %5312 = vst.msk [vmem:[%s7 + $0x88] sm:$0xff] %vm5294, %v5279
    %5313 = vst.msk [vmem:[%s7 + $0x90] sm:$0xff] %vm5294, %v5280
    %5314 = vst.msk [vmem:[%s7 + $0x98] sm:$0xff] %vm5294, %v5281
    %5315 = vst.msk [vmem:[%s7 + $0xa0] sm:$0xff] %vm5294, %v5282
    %5316 = vst.msk [vmem:[%s7 + $0xa8] sm:$0xff] %vm5294, %v5283
    %5317 = vst.msk [vmem:[%s7 + $0xb0] sm:$0xff] %vm5294, %v5284
    %5318 = vst.msk [vmem:[%s7 + $0xb8] sm:$0xff] %vm5294, %v5285
    %5319 = vst.msk [vmem:[%s7 + $0xc0] sm:$0xff] %vm5294, %v5286
    %5320 = vst.msk [vmem:[%s7 + $0xc8] sm:$0xff] %vm5294, %v5287
    %5321 = vst.msk [vmem:[%s7 + $0xd0] sm:$0xff] %vm5294, %v5288
    %5322 = vst.msk [vmem:[%s7 + $0xd8] sm:$0xff] %vm5294, %v5289
    %5323 = vst.msk [vmem:[%s7 + $0xe0] sm:$0xff] %vm5294, %v5290
    %5324 = vst.msk [vmem:[%s7 + $0xe8] sm:$0xff] %vm5294, %v5291
    %5325 = vst.msk [vmem:[%s7 + $0xf0] sm:$0xff] %vm5294, %v5292
    %5326 = vst.msk [vmem:[%s7 + $0xf8] sm:$0xff] %vm5294, %v5293
    // Predicated region
    $region38: #{tpu_custom_call.1} parent=1 // pred_check
      _
    $region39: #{tpu_custom_call.1} parent=1 // pred_check_branch
      %5328 = sbr.rel (0) target = $region41
    $region40: #{tpu_custom_call.1} parent=1 // pred_region
      _
    $region41: #{tpu_custom_call.1} parent=1 // pred_fallthru
      _
    // Predicated region
    $region42: #{tpu_custom_call.1} parent=1 // pred_check
      _
    $region43: #{tpu_custom_call.1} parent=1 // pred_check_branch
      %5330 = sbr.rel (0) target = $region45
    $region44: #{tpu_custom_call.1} parent=1 // pred_region
      _
    $region45: #{tpu_custom_call.1} parent=1 // pred_fallthru
      _
    %5331 = vsyncpa [#allocation4], 1
    %5332 = vsyncpa [#allocation6], 1

</llo_original>
